<compile_context>
chip_gen: v7x
topology: tpu7x:2x2x1
jax: 0.10.0
libtpu: 0.0.40
codegen_flags: <defaults>
</compile_context>

<pallas_src>
import functools
import math

import jax
import jax.numpy as jnp
from jax import lax
from jax.experimental import pallas as pl
from jax.experimental.pallas import tpu as pltpu


def _round_up(x, m):
    return (x + m - 1) // m * m


def _s2t_kernel(x_ref,                                   # (chunk*Bp, I) time-major rows
                wih0_ref, whh0_ref,                      # GRU layer 0 weights
                b0_ref, bhh0n_ref,                       # layer-0 folded biases
                wl1_ref,                                 # fused layer-1 weight (2H, 4H)
                b1rz_ref, bih1n_ref, bhh1n_ref,          # layer-1 bias pieces
                w1_ref, fb1_ref, w2_ref, fb2_ref,        # fc head (w2/b2 lane-padded)
                out_ref,                                 # (chunk*Bp, Op)
                h1_scr, h2_scr,                          # (Bp, H) carries, persist across chunks
                gi0_scr,                                 # (chunk*Bp, 3H) scratch
                h2all_scr,                               # (chunk*Bp, H)  scratch
                *, chunk, batch_pad, unroll):
    Bp = batch_pad
    H = whh0_ref.shape[0]

    # Initialize the hidden-state carries on the first chunk only.
    @pl.when(pl.program_id(0) == 0)
    def _():
        h1_scr[...] = jnp.zeros_like(h1_scr)
        h2_scr[...] = jnp.zeros_like(h2_scr)

    # ---- hoisted layer-0 input projection for the whole chunk (off the serial path)
    # b0 already contains bih0 + (bhh0 for r/z); bhh0_n stays inside r*(.) below.
    gi0_scr[...] = (jnp.dot(x_ref[...], wih0_ref[...],
                            preferred_element_type=jnp.float32) + b0_ref[...])

    # Loop-invariant bias slices, pre-broadcast ONCE (JAX doesn't CSE broadcast_in_dim).
    bhh0_n = jnp.broadcast_to(bhh0n_ref[...], (Bp, H))
    b1_rz = jnp.broadcast_to(b1rz_ref[...], (Bp, 2 * H))
    bih1_n = jnp.broadcast_to(bih1n_ref[...], (Bp, H))
    bhh1_n = jnp.broadcast_to(bhh1n_ref[...], (Bp, H))
    whh0 = whh0_ref[...]
    wl1 = wl1_ref[...]

    def step(t, carry):
        h1, h2 = carry
        row = pl.multiple_of(t * Bp, 8)                    # sublane-aligned slab start
        gi0_t = gi0_scr[pl.ds(row, Bp), :]                 # (Bp, 3H), full tiles

        # ---- GRU layer 0: only the recurrent matmul sits on the serial path ----
        gh0 = jnp.dot(h1, whh0, preferred_element_type=jnp.float32)
        rz0 = jax.nn.sigmoid(gi0_t[:, :2 * H] + gh0[:, :2 * H])
        n0 = jnp.tanh(gi0_t[:, 2 * H:] + rz0[:, :H] * (gh0[:, 2 * H:] + bhh0_n))
        h1 = (1.0 - rz0[:, H:]) * n0 + rz0[:, H:] * h1

        # ---- GRU layer 1: single fused matmul. Output layout:
        #   [:, :2H]   = gi1_rz + gh1_rz
        #   [:, 2H:3H] = gi1_n   (needed separately for the n gate)
        #   [:, 3H:4H] = gh1_n
        g1 = jnp.dot(jnp.concatenate([h1, h2], axis=-1), wl1,
                     preferred_element_type=jnp.float32)
        rz1 = jax.nn.sigmoid(g1[:, :2 * H] + b1_rz)
        n1 = jnp.tanh(g1[:, 2 * H:3 * H] + bih1_n
                      + rz1[:, :H] * (g1[:, 3 * H:] + bhh1_n))
        h2 = (1.0 - rz1[:, H:]) * n1 + rz1[:, H:] * h2

        h2all_scr[pl.ds(row, Bp), :] = h2
        return (h1, h2)

    h1, h2 = lax.fori_loop(0, chunk, step, (h1_scr[...], h2_scr[...]),
                           unroll=unroll)
    h1_scr[...] = h1                                       # carry to the next chunk
    h2_scr[...] = h2

    # ---- hoisted fc1 -> ReLU -> fc2 head, batched over the whole chunk,
    #      written with ONE lane-dense (chunk*Bp, Op) store.
    hid = jnp.maximum(
        jnp.dot(h2all_scr[...], w1_ref[...],
                preferred_element_type=jnp.float32) + fb1_ref[...], 0.0)
    out_ref[...] = (jnp.dot(hid, w2_ref[...],
                            preferred_element_type=jnp.float32)
                    + fb2_ref[...]).astype(out_ref.dtype)


@functools.partial(jax.jit, static_argnames=("time_chunk",))
def speech_to_text_forward(x, params, *, time_chunk=256):
    """x: (B, T, input_size) f32 -> (B, T, output_size) f32 (eval semantics)."""
    B, T, I = x.shape
    H = params["whh0"].shape[0]
    M = params["w1"].shape[1]
    O = params["w2"].shape[1]

    Bp = _round_up(B, 8)                   # sublane-aligned batch
    Op = _round_up(O, 128)                 # lane-dense output width
    chunk = min(time_chunk, T)
    Tp = _round_up(T, chunk)
    n_chunks = Tp // chunk
    rows = chunk * Bp

    # Time-major, padded, flattened: each timestep is one aligned (Bp, .) slab.
    # Padded batch rows / padded trailing timesteps are zeros; they evolve
    # independent garbage hidden states and are sliced off below.
    x_tm = jnp.transpose(x, (1, 0, 2))
    x_tm = jnp.pad(x_tm, ((0, Tp - T), (0, Bp - B), (0, 0)))
    x2d = x_tm.reshape(Tp * Bp, I)

    # --- fold biases once, outside the kernel -------------------------------
    bih0, bhh0 = params["bih0"], params["bhh0"]
    bih1, bhh1 = params["bih1"], params["bhh1"]
    b0 = jnp.concatenate([bih0[:, :2 * H] + bhh0[:, :2 * H], bih0[:, 2 * H:]], axis=1)
    bhh0_n = bhh0[:, 2 * H:]
    b1_rz = bih1[:, :2 * H] + bhh1[:, :2 * H]
    bih1_n = bih1[:, 2 * H:]
    bhh1_n = bhh1[:, 2 * H:]

    # --- fused layer-1 weight: [h1, h2] @ wl1 -> [rz_combined | gi1_n | gh1_n]
    wih1, whh1 = params["wih1"], params["whh1"]
    zblk = jnp.zeros((H, H), wih1.dtype)
    wl1 = jnp.concatenate([
        jnp.concatenate([wih1[:, :2 * H], wih1[:, 2 * H:], zblk], axis=1),
        jnp.concatenate([whh1[:, :2 * H], zblk, whh1[:, 2 * H:]], axis=1),
    ], axis=0)                                              # (2H, 4H)

    # --- lane-pad fc2 so the output store is unmasked ------------------------
    w2p = jnp.pad(params["w2"], ((0, 0), (0, Op - O)))
    b2p = jnp.pad(params["b2"], ((0, 0), (0, Op - O)))

    kernel = functools.partial(_s2t_kernel, chunk=chunk, batch_pad=Bp,
                               unroll=min(chunk, 4))

    const = lambda c: (0, 0)                # weights resident: DMA'd once
    grid_spec = pltpu.PrefetchScalarGridSpec(
        num_scalar_prefetch=0,
        grid=(n_chunks,),
        in_specs=[
            pl.BlockSpec((rows, I), lambda c: (c, 0)),      # x chunk
            pl.BlockSpec((I, 3 * H), const),                # wih0
            pl.BlockSpec((H, 3 * H), const),                # whh0
            pl.BlockSpec((1, 3 * H), const),                # b0
            pl.BlockSpec((1, H), const),                    # bhh0_n
            pl.BlockSpec((2 * H, 4 * H), const),            # wl1 (fused layer 1)
            pl.BlockSpec((1, 2 * H), const),                # b1_rz
            pl.BlockSpec((1, H), const),                    # bih1_n
            pl.BlockSpec((1, H), const),                    # bhh1_n
            pl.BlockSpec((H, M), const),                    # w1
            pl.BlockSpec((1, M), const),                    # fc1 bias
            pl.BlockSpec((M, Op), const),                   # w2 (lane-padded)
            pl.BlockSpec((1, Op), const),                   # fc2 bias (lane-padded)
        ],
        out_specs=pl.BlockSpec((rows, Op), lambda c: (c, 0)),
        scratch_shapes=[
            pltpu.VMEM((Bp, H), jnp.float32),               # h1 carry (persists)
            pltpu.VMEM((Bp, H), jnp.float32),               # h2 carry (persists)
            pltpu.VMEM((rows, 3 * H), jnp.float32),         # gi0 for this chunk
            pltpu.VMEM((rows, H), jnp.float32),             # per-step h2 for fc head
        ],
    )

    # Explicit VMEM budget: double-buffered x/out chunks + chunk scratches +
    # resident weights, with 2x margin; clamped so it stays within v5e/v6e/v7x.
    f32 = 4
    vmem_need = f32 * (2 * rows * I + 2 * rows * Op + rows * 4 * H + 2 * Bp * H
                       + 2 * (I * 3 * H + H * 3 * H + 2 * H * 4 * H + H * M + M * Op)
                       + 2 * (4 * H + 3 * H + 2 * H + M + Op))
    vmem_limit = int(min(max(2 * vmem_need, 16 << 20), 48 << 20))

    out2d = pl.pallas_call(
        kernel,
        out_shape=jax.ShapeDtypeStruct((Tp * Bp, Op), jnp.float32),
        grid_spec=grid_spec,
        compiler_params=pltpu.CompilerParams(
            dimension_semantics=("arbitrary",),     # serial recurrence across chunks
            vmem_limit_bytes=vmem_limit),
    )(x2d, params["wih0"], params["whh0"], b0, bhh0_n, wl1,
      b1_rz, bih1_n, bhh1_n, params["w1"], params["b1"], w2p, b2p)

    out = out2d.reshape(Tp, Bp, Op)[:T, :B, :O]             # strip time/batch/lane pad
    return jnp.transpose(out, (1, 0, 2))                    # back to (B, T, O)


def init_params(key, input_size, hidden_size, intermediate_size, output_size):
    """Deterministic synthetic params, PyTorch-style uniform(-1/sqrt(fan), +).

    Weights stored pre-transposed so the kernel does x @ W directly:
      wih: (in, 3H), whh: (H, 3H), biases (1, 3H); fc weights (in, out).
    """
    H, M = hidden_size, intermediate_size
    ks = jax.random.split(key, 12)
    s = 1.0 / math.sqrt(H)
    u = lambda k, shape, scale: jax.random.uniform(k, shape, jnp.float32, -scale, scale)
    return {
        # GRU layer 0 (input_size -> H)
        "wih0": u(ks[0], (input_size, 3 * H), s),
        "whh0": u(ks[1], (H, 3 * H), s),
        "bih0": u(ks[2], (1, 3 * H), s),
        "bhh0": u(ks[3], (1, 3 * H), s),
        # GRU layer 1 (H -> H)
        "wih1": u(ks[4], (H, 3 * H), s),
        "whh1": u(ks[5], (H, 3 * H), s),
        "bih1": u(ks[6], (1, 3 * H), s),
        "bhh1": u(ks[7], (1, 3 * H), s),
        # fc1 (H -> M), fc2 (M -> O)
        "w1": u(ks[8], (H, M), 1.0 / math.sqrt(H)),
        "b1": u(ks[9], (1, M), 1.0 / math.sqrt(H)),
        "w2": u(ks[10], (M, output_size), 1.0 / math.sqrt(M)),
        "b2": u(ks[11], (1, output_size), 1.0 / math.sqrt(M)),
    }


def reference_forward(x, p):
    """Pure-JAX reference mirroring torch.nn.GRU(eval) + Linear semantics."""
    B, T, _ = x.shape
    H = p["whh0"].shape[0]
    dot = lambda a, b: jnp.dot(a, b, precision=jax.lax.Precision.HIGHEST)

    def cell(x_t, h_prev, wih, whh, bih, bhh):
        gi = dot(x_t, wih) + bih
        gh = dot(h_prev, whh) + bhh
        r = jax.nn.sigmoid(gi[:, :H] + gh[:, :H])
        z = jax.nn.sigmoid(gi[:, H:2 * H] + gh[:, H:2 * H])
        n = jnp.tanh(gi[:, 2 * H:] + r * gh[:, 2 * H:])
        return (1.0 - z) * n + z * h_prev

    h1 = jnp.zeros((B, H), jnp.float32)
    h2 = jnp.zeros((B, H), jnp.float32)
    outs = []
    for t in range(T):
        h1 = cell(x[:, t, :], h1, p["wih0"], p["whh0"], p["bih0"], p["bhh0"])
        h2 = cell(h1, h2, p["wih1"], p["whh1"], p["bih1"], p["bhh1"])
        hid = jnp.maximum(dot(h2, p["w1"]) + p["b1"], 0.0)
        outs.append(dot(hid, p["w2"]) + p["b2"])
    return jnp.stack(outs, axis=1)                           # (B, T, O)


if __name__ == "__main__":
    # Small shapes consistent with the module defaults (batch_first input).
    B, T = 2, 8
    input_size, hidden_size = 26, 128
    intermediate_size, output_size = 128, 136

    key = jax.random.PRNGKey(0)
    kx, kp = jax.random.split(key)
    x = jax.random.normal(kx, (B, T, input_size), jnp.float32)
    params = init_params(kp, input_size, hidden_size, intermediate_size, output_size)

    # time_chunk=4 -> 2 grid steps: exercises the chunked grid, the persistent
    # hidden-state carry across chunks, and the batch/lane padding paths.
    out = jax.block_until_ready(speech_to_text_forward(x, params, time_chunk=4))
    ref = reference_forward(x, params)

    assert out.shape == (B, T, output_size), out.shape
    max_err = float(jnp.max(jnp.abs(out - ref)))
    assert jnp.allclose(out, ref, atol=5e-4, rtol=5e-4), max_err

    print("KERNEL_OK")
</pallas_src>

<mosaic_0001>
module attributes {stable_mosaic.version = 11 : i64} {
  func.func @_s2t_kernel(%arg0: i32, %arg1: memref<32x26xf32, #tpu.memory_space<vmem>>, %arg2: memref<26x384xf32, #tpu.memory_space<vmem>>, %arg3: memref<128x384xf32, #tpu.memory_space<vmem>>, %arg4: memref<1x384xf32, #tpu.memory_space<vmem>>, %arg5: memref<1x128xf32, #tpu.memory_space<vmem>>, %arg6: memref<256x512xf32, #tpu.memory_space<vmem>>, %arg7: memref<1x256xf32, #tpu.memory_space<vmem>>, %arg8: memref<1x128xf32, #tpu.memory_space<vmem>>, %arg9: memref<1x128xf32, #tpu.memory_space<vmem>>, %arg10: memref<128x128xf32, #tpu.memory_space<vmem>>, %arg11: memref<1x128xf32, #tpu.memory_space<vmem>>, %arg12: memref<128x256xf32, #tpu.memory_space<vmem>>, %arg13: memref<1x256xf32, #tpu.memory_space<vmem>>, %arg14: memref<32x256xf32, #tpu.memory_space<vmem>>, %arg15: memref<8x128xf32, #tpu.memory_space<vmem>>, %arg16: memref<8x128xf32, #tpu.memory_space<vmem>>, %arg17: memref<32x384xf32, #tpu.memory_space<vmem>>, %arg18: memref<32x128xf32, #tpu.memory_space<vmem>>) attributes {dimension_semantics = [#tpu.dimension_semantics<arbitrary>], iteration_bounds = array<i64: 2>, scalar_prefetch = 0 : i64, scratch_operands = 4 : i64, tpu.core_type = #tpu.core_type<tc>, window_params = [{transform_indices = @transform_0, window_bounds = array<i64: 32, 26>}, {pipeline_mode = #tpu.pipeline_mode<synchronous>, transform_indices = @transform_1, window_bounds = array<i64: 26, 384>}, {pipeline_mode = #tpu.pipeline_mode<synchronous>, transform_indices = @transform_2, window_bounds = array<i64: 128, 384>}, {pipeline_mode = #tpu.pipeline_mode<synchronous>, transform_indices = @transform_3, window_bounds = array<i64: 1, 384>}, {pipeline_mode = #tpu.pipeline_mode<synchronous>, transform_indices = @transform_4, window_bounds = array<i64: 1, 128>}, {pipeline_mode = #tpu.pipeline_mode<synchronous>, transform_indices = @transform_5, window_bounds = array<i64: 256, 512>}, {pipeline_mode = #tpu.pipeline_mode<synchronous>, transform_indices = @transform_6, window_bounds = array<i64: 1, 256>}, {pipeline_mode = #tpu.pipeline_mode<synchronous>, transform_indices = @transform_7, window_bounds = array<i64: 1, 128>}, {pipeline_mode = #tpu.pipeline_mode<synchronous>, transform_indices = @transform_8, window_bounds = array<i64: 1, 128>}, {pipeline_mode = #tpu.pipeline_mode<synchronous>, transform_indices = @transform_9, window_bounds = array<i64: 128, 128>}, {pipeline_mode = #tpu.pipeline_mode<synchronous>, transform_indices = @transform_10, window_bounds = array<i64: 1, 128>}, {pipeline_mode = #tpu.pipeline_mode<synchronous>, transform_indices = @transform_11, window_bounds = array<i64: 128, 256>}, {pipeline_mode = #tpu.pipeline_mode<synchronous>, transform_indices = @transform_12, window_bounds = array<i64: 1, 256>}, {transform_indices = @transform_13, window_bounds = array<i64: 32, 256>}]} {
    %c0_i32 = arith.constant 0 : i32
    %0 = arith.cmpi eq, %arg0, %c0_i32 : i32
    %1 = arith.extui %0 : i1 to i32
    %c0_i32_0 = arith.constant 0 : i32
    %2 = arith.cmpi ne, %1, %c0_i32_0 : i32
    scf.if %2 {
      %cst_79 = arith.constant 0.000000e+00 : f32
      %254 = vector.broadcast %cst_79 : f32 to vector<8x128xf32>
      %c0_80 = arith.constant 0 : index
      %c0_81 = arith.constant 0 : index
      %255 = vector.load %arg15[%c0_80, %c0_81] : memref<8x128xf32, #tpu.memory_space<vmem>>, vector<8x128xf32>
      tpu.vector_store %arg15[%c0_80, %c0_81], %254 {strides = array<i32>} : memref<8x128xf32, #tpu.memory_space<vmem>>, vector<8x128xf32>,
      %cst_82 = arith.constant 0.000000e+00 : f32
      %256 = vector.broadcast %cst_82 : f32 to vector<8x128xf32>
      %c0_83 = arith.constant 0 : index
      %c0_84 = arith.constant 0 : index
      %257 = vector.load %arg16[%c0_83, %c0_84] : memref<8x128xf32, #tpu.memory_space<vmem>>, vector<8x128xf32>
      tpu.vector_store %arg16[%c0_83, %c0_84], %256 {strides = array<i32>} : memref<8x128xf32, #tpu.memory_space<vmem>>, vector<8x128xf32>,
    } else {
    }
    %c0 = arith.constant 0 : index
    %c0_1 = arith.constant 0 : index
    %3 = vector.load %arg1[%c0, %c0_1] : memref<32x26xf32, #tpu.memory_space<vmem>>, vector<32x26xf32>
    %c0_2 = arith.constant 0 : index
    %c0_3 = arith.constant 0 : index
    %4 = vector.load %arg2[%c0_2, %c0_3] : memref<26x384xf32, #tpu.memory_space<vmem>>, vector<26x384xf32>
    %cst = arith.constant dense<0.000000e+00> : vector<32x384xf32>
    %5 = tpu.matmul %3, %4, %cst {dimension_numbers = #tpu.dot_dimension_numbers<[1], [0], [0], [1], [0, 0, 1, 1], [], []>} : vector<32x26xf32>, vector<26x384xf32>, vector<32x384xf32> -> vector<32x384xf32>
    %c0_4 = arith.constant 0 : index
    %c0_5 = arith.constant 0 : index
    %6 = vector.load %arg4[%c0_4, %c0_5] : memref<1x384xf32, #tpu.memory_space<vmem>>, vector<1x384xf32>
    %7 = vector.broadcast %6 : vector<1x384xf32> to vector<32x384xf32>
    %8 = arith.addf %5, %7 : vector<32x384xf32>
    %c0_6 = arith.constant 0 : index
    %c0_7 = arith.constant 0 : index
    %9 = vector.load %arg17[%c0_6, %c0_7] : memref<32x384xf32, #tpu.memory_space<vmem>>, vector<32x384xf32>
    tpu.vector_store %arg17[%c0_6, %c0_7], %8 {strides = array<i32>} : memref<32x384xf32, #tpu.memory_space<vmem>>, vector<32x384xf32>,
    %c0_8 = arith.constant 0 : index
    %c0_9 = arith.constant 0 : index
    %10 = vector.load %arg5[%c0_8, %c0_9] : memref<1x128xf32, #tpu.memory_space<vmem>>, vector<1x128xf32>
    %11 = vector.shape_cast %10 : vector<1x128xf32> to vector<1x128xf32>
    %12 = vector.broadcast %11 : vector<1x128xf32> to vector<8x128xf32>
    %c0_10 = arith.constant 0 : index
    %c0_11 = arith.constant 0 : index
    %13 = vector.load %arg7[%c0_10, %c0_11] : memref<1x256xf32, #tpu.memory_space<vmem>>, vector<1x256xf32>
    %14 = vector.shape_cast %13 : vector<1x256xf32> to vector<1x256xf32>
    %15 = vector.broadcast %14 : vector<1x256xf32> to vector<8x256xf32>
    %c0_12 = arith.constant 0 : index
    %c0_13 = arith.constant 0 : index
    %16 = vector.load %arg8[%c0_12, %c0_13] : memref<1x128xf32, #tpu.memory_space<vmem>>, vector<1x128xf32>
    %17 = vector.shape_cast %16 : vector<1x128xf32> to vector<1x128xf32>
    %18 = vector.broadcast %17 : vector<1x128xf32> to vector<8x128xf32>
    %c0_14 = arith.constant 0 : index
    %c0_15 = arith.constant 0 : index
    %19 = vector.load %arg9[%c0_14, %c0_15] : memref<1x128xf32, #tpu.memory_space<vmem>>, vector<1x128xf32>
    %20 = vector.shape_cast %19 : vector<1x128xf32> to vector<1x128xf32>
    %21 = vector.broadcast %20 : vector<1x128xf32> to vector<8x128xf32>
    %c0_16 = arith.constant 0 : index
    %c0_17 = arith.constant 0 : index
    %22 = vector.load %arg3[%c0_16, %c0_17] : memref<128x384xf32, #tpu.memory_space<vmem>>, vector<128x384xf32>
    %c0_18 = arith.constant 0 : index
    %c0_19 = arith.constant 0 : index
    %23 = vector.load %arg6[%c0_18, %c0_19] : memref<256x512xf32, #tpu.memory_space<vmem>>, vector<256x512xf32>
    %c0_20 = arith.constant 0 : index
    %c0_21 = arith.constant 0 : index
    %24 = vector.load %arg15[%c0_20, %c0_21] : memref<8x128xf32, #tpu.memory_space<vmem>>, vector<8x128xf32>
    %c0_22 = arith.constant 0 : index
    %c0_23 = arith.constant 0 : index
    %25 = vector.load %arg16[%c0_22, %c0_23] : memref<8x128xf32, #tpu.memory_space<vmem>>, vector<8x128xf32>
    %c0_i32_24 = arith.constant 0 : i32
    %c8_i32 = arith.constant 8 : i32
    %26 = arith.muli %c0_i32_24, %c8_i32 : i32
    %27 = tpu.assume_multiple %26, 8 : i32
    %28 = arith.index_cast %27 : i32 to index
    %c0_25 = arith.constant 0 : index
    %29 = vector.load %arg17[%28, %c0_25] : memref<32x384xf32, #tpu.memory_space<vmem>>, vector<8x384xf32>
    %cst_26 = arith.constant dense<0.000000e+00> : vector<8x384xf32>
    %30 = tpu.matmul %24, %22, %cst_26 {dimension_numbers = #tpu.dot_dimension_numbers<[1], [0], [0], [1], [0, 0, 1, 1], [], []>} : vector<8x128xf32>, vector<128x384xf32>, vector<8x384xf32> -> vector<8x384xf32>
    %31 = vector.extract_strided_slice %29 {offsets = [0, 0], sizes = [8, 256], strides = [1, 1]} : vector<8x384xf32> to vector<8x256xf32>
    %32 = vector.extract_strided_slice %30 {offsets = [0, 0], sizes = [8, 256], strides = [1, 1]} : vector<8x384xf32> to vector<8x256xf32>
    %33 = arith.addf %31, %32 : vector<8x256xf32>
    %34 = arith.negf %33 : vector<8x256xf32>
    %35 = math.exp %34 : vector<8x256xf32>
    %cst_27 = arith.constant 1.000000e+00 : f32
    %36 = vector.broadcast %cst_27 : f32 to vector<8x256xf32>
    %37 = arith.addf %36, %35 : vector<8x256xf32>
    %38 = arith.divf %36, %37 : vector<8x256xf32>
    %39 = vector.extract_strided_slice %29 {offsets = [0, 256], sizes = [8, 128], strides = [1, 1]} : vector<8x384xf32> to vector<8x128xf32>
    %40 = vector.extract_strided_slice %38 {offsets = [0, 0], sizes = [8, 128], strides = [1, 1]} : vector<8x256xf32> to vector<8x128xf32>
    %41 = vector.extract_strided_slice %30 {offsets = [0, 256], sizes = [8, 128], strides = [1, 1]} : vector<8x384xf32> to vector<8x128xf32>
    %42 = arith.addf %41, %12 : vector<8x128xf32>
    %43 = arith.mulf %40, %42 : vector<8x128xf32>
    %44 = arith.addf %39, %43 : vector<8x128xf32>
    %45 = math.tanh %44 : vector<8x128xf32>
    %46 = vector.extract_strided_slice %38 {offsets = [0, 128], sizes = [8, 128], strides = [1, 1]} : vector<8x256xf32> to vector<8x128xf32>
    %cst_28 = arith.constant 1.000000e+00 : f32
    %47 = vector.broadcast %cst_28 : f32 to vector<8x128xf32>
    %48 = arith.subf %47, %46 : vector<8x128xf32>
    %49 = arith.mulf %48, %45 : vector<8x128xf32>
    %50 = vector.extract_strided_slice %38 {offsets = [0, 128], sizes = [8, 128], strides = [1, 1]} : vector<8x256xf32> to vector<8x128xf32>
    %51 = arith.mulf %50, %24 : vector<8x128xf32>
    %52 = arith.addf %49, %51 : vector<8x128xf32>
    %53 = tpu.concatenate %52, %25 in 1 : vector<8x128xf32>, vector<8x128xf32> -> vector<8x256xf32>
    %cst_29 = arith.constant dense<0.000000e+00> : vector<8x512xf32>
    %54 = tpu.matmul %53, %23, %cst_29 {dimension_numbers = #tpu.dot_dimension_numbers<[1], [0], [0], [1], [0, 0, 1, 1], [], []>} : vector<8x256xf32>, vector<256x512xf32>, vector<8x512xf32> -> vector<8x512xf32>
    %55 = vector.extract_strided_slice %54 {offsets = [0, 0], sizes = [8, 256], strides = [1, 1]} : vector<8x512xf32> to vector<8x256xf32>
    %56 = arith.addf %55, %15 : vector<8x256xf32>
    %57 = arith.negf %56 : vector<8x256xf32>
    %58 = math.exp %57 : vector<8x256xf32>
    %cst_30 = arith.constant 1.000000e+00 : f32
    %59 = vector.broadcast %cst_30 : f32 to vector<8x256xf32>
    %60 = arith.addf %59, %58 : vector<8x256xf32>
    %61 = arith.divf %59, %60 : vector<8x256xf32>
    %62 = vector.extract_strided_slice %54 {offsets = [0, 256], sizes = [8, 128], strides = [1, 1]} : vector<8x512xf32> to vector<8x128xf32>
    %63 = arith.addf %62, %18 : vector<8x128xf32>
    %64 = vector.extract_strided_slice %61 {offsets = [0, 0], sizes = [8, 128], strides = [1, 1]} : vector<8x256xf32> to vector<8x128xf32>
    %65 = vector.extract_strided_slice %54 {offsets = [0, 384], sizes = [8, 128], strides = [1, 1]} : vector<8x512xf32> to vector<8x128xf32>
    %66 = arith.addf %65, %21 : vector<8x128xf32>
    %67 = arith.mulf %64, %66 : vector<8x128xf32>
    %68 = arith.addf %63, %67 : vector<8x128xf32>
    %69 = math.tanh %68 : vector<8x128xf32>
    %70 = vector.extract_strided_slice %61 {offsets = [0, 128], sizes = [8, 128], strides = [1, 1]} : vector<8x256xf32> to vector<8x128xf32>
    %cst_31 = arith.constant 1.000000e+00 : f32
    %71 = vector.broadcast %cst_31 : f32 to vector<8x128xf32>
    %72 = arith.subf %71, %70 : vector<8x128xf32>
    %73 = arith.mulf %72, %69 : vector<8x128xf32>
    %74 = vector.extract_strided_slice %61 {offsets = [0, 128], sizes = [8, 128], strides = [1, 1]} : vector<8x256xf32> to vector<8x128xf32>
    %75 = arith.mulf %74, %25 : vector<8x128xf32>
    %76 = arith.addf %73, %75 : vector<8x128xf32>
    %77 = arith.index_cast %27 : i32 to index
    %c0_32 = arith.constant 0 : index
    %78 = vector.load %arg18[%77, %c0_32] : memref<32x128xf32, #tpu.memory_space<vmem>>, vector<8x128xf32>
    tpu.vector_store %arg18[%77, %c0_32], %76 {strides = array<i32>} : memref<32x128xf32, #tpu.memory_space<vmem>>, vector<8x128xf32>,
    %c1_i32 = arith.constant 1 : i32
    %c8_i32_33 = arith.constant 8 : i32
    %79 = arith.muli %c1_i32, %c8_i32_33 : i32
    %80 = tpu.assume_multiple %79, 8 : i32
    %81 = arith.index_cast %80 : i32 to index
    %c0_34 = arith.constant 0 : index
    %82 = vector.load %arg17[%81, %c0_34] : memref<32x384xf32, #tpu.memory_space<vmem>>, vector<8x384xf32>
    %cst_35 = arith.constant dense<0.000000e+00> : vector<8x384xf32>
    %83 = tpu.matmul %52, %22, %cst_35 {dimension_numbers = #tpu.dot_dimension_numbers<[1], [0], [0], [1], [0, 0, 1, 1], [], []>} : vector<8x128xf32>, vector<128x384xf32>, vector<8x384xf32> -> vector<8x384xf32>
    %84 = vector.extract_strided_slice %82 {offsets = [0, 0], sizes = [8, 256], strides = [1, 1]} : vector<8x384xf32> to vector<8x256xf32>
    %85 = vector.extract_strided_slice %83 {offsets = [0, 0], sizes = [8, 256], strides = [1, 1]} : vector<8x384xf32> to vector<8x256xf32>
    %86 = arith.addf %84, %85 : vector<8x256xf32>
    %87 = arith.negf %86 : vector<8x256xf32>
    %88 = math.exp %87 : vector<8x256xf32>
    %cst_36 = arith.constant 1.000000e+00 : f32
    %89 = vector.broadcast %cst_36 : f32 to vector<8x256xf32>
    %90 = arith.addf %89, %88 : vector<8x256xf32>
    %91 = arith.divf %89, %90 : vector<8x256xf32>
    %92 = vector.extract_strided_slice %82 {offsets = [0, 256], sizes = [8, 128], strides = [1, 1]} : vector<8x384xf32> to vector<8x128xf32>
    %93 = vector.extract_strided_slice %91 {offsets = [0, 0], sizes = [8, 128], strides = [1, 1]} : vector<8x256xf32> to vector<8x128xf32>
    %94 = vector.extract_strided_slice %83 {offsets = [0, 256], sizes = [8, 128], strides = [1, 1]} : vector<8x384xf32> to vector<8x128xf32>
    %95 = arith.addf %94, %12 : vector<8x128xf32>
    %96 = arith.mulf %93, %95 : vector<8x128xf32>
    %97 = arith.addf %92, %96 : vector<8x128xf32>
    %98 = math.tanh %97 : vector<8x128xf32>
    %99 = vector.extract_strided_slice %91 {offsets = [0, 128], sizes = [8, 128], strides = [1, 1]} : vector<8x256xf32> to vector<8x128xf32>
    %cst_37 = arith.constant 1.000000e+00 : f32
    %100 = vector.broadcast %cst_37 : f32 to vector<8x128xf32>
    %101 = arith.subf %100, %99 : vector<8x128xf32>
    %102 = arith.mulf %101, %98 : vector<8x128xf32>
    %103 = vector.extract_strided_slice %91 {offsets = [0, 128], sizes = [8, 128], strides = [1, 1]} : vector<8x256xf32> to vector<8x128xf32>
    %104 = arith.mulf %103, %52 : vector<8x128xf32>
    %105 = arith.addf %102, %104 : vector<8x128xf32>
    %106 = tpu.concatenate %105, %76 in 1 : vector<8x128xf32>, vector<8x128xf32> -> vector<8x256xf32>
    %cst_38 = arith.constant dense<0.000000e+00> : vector<8x512xf32>
    %107 = tpu.matmul %106, %23, %cst_38 {dimension_numbers = #tpu.dot_dimension_numbers<[1], [0], [0], [1], [0, 0, 1, 1], [], []>} : vector<8x256xf32>, vector<256x512xf32>, vector<8x512xf32> -> vector<8x512xf32>
    %108 = vector.extract_strided_slice %107 {offsets = [0, 0], sizes = [8, 256], strides = [1, 1]} : vector<8x512xf32> to vector<8x256xf32>
    %109 = arith.addf %108, %15 : vector<8x256xf32>
    %110 = arith.negf %109 : vector<8x256xf32>
    %111 = math.exp %110 : vector<8x256xf32>
    %cst_39 = arith.constant 1.000000e+00 : f32
    %112 = vector.broadcast %cst_39 : f32 to vector<8x256xf32>
    %113 = arith.addf %112, %111 : vector<8x256xf32>
    %114 = arith.divf %112, %113 : vector<8x256xf32>
    %115 = vector.extract_strided_slice %107 {offsets = [0, 256], sizes = [8, 128], strides = [1, 1]} : vector<8x512xf32> to vector<8x128xf32>
    %116 = arith.addf %115, %18 : vector<8x128xf32>
    %117 = vector.extract_strided_slice %114 {offsets = [0, 0], sizes = [8, 128], strides = [1, 1]} : vector<8x256xf32> to vector<8x128xf32>
    %118 = vector.extract_strided_slice %107 {offsets = [0, 384], sizes = [8, 128], strides = [1, 1]} : vector<8x512xf32> to vector<8x128xf32>
    %119 = arith.addf %118, %21 : vector<8x128xf32>
    %120 = arith.mulf %117, %119 : vector<8x128xf32>
    %121 = arith.addf %116, %120 : vector<8x128xf32>
    %122 = math.tanh %121 : vector<8x128xf32>
    %123 = vector.extract_strided_slice %114 {offsets = [0, 128], sizes = [8, 128], strides = [1, 1]} : vector<8x256xf32> to vector<8x128xf32>
    %cst_40 = arith.constant 1.000000e+00 : f32
    %124 = vector.broadcast %cst_40 : f32 to vector<8x128xf32>
    %125 = arith.subf %124, %123 : vector<8x128xf32>
    %126 = arith.mulf %125, %122 : vector<8x128xf32>
    %127 = vector.extract_strided_slice %114 {offsets = [0, 128], sizes = [8, 128], strides = [1, 1]} : vector<8x256xf32> to vector<8x128xf32>
    %128 = arith.mulf %127, %76 : vector<8x128xf32>
    %129 = arith.addf %126, %128 : vector<8x128xf32>
    %130 = arith.index_cast %80 : i32 to index
    %c0_41 = arith.constant 0 : index
    %131 = vector.load %arg18[%130, %c0_41] : memref<32x128xf32, #tpu.memory_space<vmem>>, vector<8x128xf32>
    tpu.vector_store %arg18[%130, %c0_41], %129 {strides = array<i32>} : memref<32x128xf32, #tpu.memory_space<vmem>>, vector<8x128xf32>,
    %c2_i32 = arith.constant 2 : i32
    %c8_i32_42 = arith.constant 8 : i32
    %132 = arith.muli %c2_i32, %c8_i32_42 : i32
    %133 = tpu.assume_multiple %132, 8 : i32
    %134 = arith.index_cast %133 : i32 to index
    %c0_43 = arith.constant 0 : index
    %135 = vector.load %arg17[%134, %c0_43] : memref<32x384xf32, #tpu.memory_space<vmem>>, vector<8x384xf32>
    %cst_44 = arith.constant dense<0.000000e+00> : vector<8x384xf32>
    %136 = tpu.matmul %105, %22, %cst_44 {dimension_numbers = #tpu.dot_dimension_numbers<[1], [0], [0], [1], [0, 0, 1, 1], [], []>} : vector<8x128xf32>, vector<128x384xf32>, vector<8x384xf32> -> vector<8x384xf32>
    %137 = vector.extract_strided_slice %135 {offsets = [0, 0], sizes = [8, 256], strides = [1, 1]} : vector<8x384xf32> to vector<8x256xf32>
    %138 = vector.extract_strided_slice %136 {offsets = [0, 0], sizes = [8, 256], strides = [1, 1]} : vector<8x384xf32> to vector<8x256xf32>
    %139 = arith.addf %137, %138 : vector<8x256xf32>
    %140 = arith.negf %139 : vector<8x256xf32>
    %141 = math.exp %140 : vector<8x256xf32>
    %cst_45 = arith.constant 1.000000e+00 : f32
    %142 = vector.broadcast %cst_45 : f32 to vector<8x256xf32>
    %143 = arith.addf %142, %141 : vector<8x256xf32>
    %144 = arith.divf %142, %143 : vector<8x256xf32>
    %145 = vector.extract_strided_slice %135 {offsets = [0, 256], sizes = [8, 128], strides = [1, 1]} : vector<8x384xf32> to vector<8x128xf32>
    %146 = vector.extract_strided_slice %144 {offsets = [0, 0], sizes = [8, 128], strides = [1, 1]} : vector<8x256xf32> to vector<8x128xf32>
    %147 = vector.extract_strided_slice %136 {offsets = [0, 256], sizes = [8, 128], strides = [1, 1]} : vector<8x384xf32> to vector<8x128xf32>
    %148 = arith.addf %147, %12 : vector<8x128xf32>
    %149 = arith.mulf %146, %148 : vector<8x128xf32>
    %150 = arith.addf %145, %149 : vector<8x128xf32>
    %151 = math.tanh %150 : vector<8x128xf32>
    %152 = vector.extract_strided_slice %144 {offsets = [0, 128], sizes = [8, 128], strides = [1, 1]} : vector<8x256xf32> to vector<8x128xf32>
    %cst_46 = arith.constant 1.000000e+00 : f32
    %153 = vector.broadcast %cst_46 : f32 to vector<8x128xf32>
    %154 = arith.subf %153, %152 : vector<8x128xf32>
    %155 = arith.mulf %154, %151 : vector<8x128xf32>
    %156 = vector.extract_strided_slice %144 {offsets = [0, 128], sizes = [8, 128], strides = [1, 1]} : vector<8x256xf32> to vector<8x128xf32>
    %157 = arith.mulf %156, %105 : vector<8x128xf32>
    %158 = arith.addf %155, %157 : vector<8x128xf32>
    %159 = tpu.concatenate %158, %129 in 1 : vector<8x128xf32>, vector<8x128xf32> -> vector<8x256xf32>
    %cst_47 = arith.constant dense<0.000000e+00> : vector<8x512xf32>
    %160 = tpu.matmul %159, %23, %cst_47 {dimension_numbers = #tpu.dot_dimension_numbers<[1], [0], [0], [1], [0, 0, 1, 1], [], []>} : vector<8x256xf32>, vector<256x512xf32>, vector<8x512xf32> -> vector<8x512xf32>
    %161 = vector.extract_strided_slice %160 {offsets = [0, 0], sizes = [8, 256], strides = [1, 1]} : vector<8x512xf32> to vector<8x256xf32>
    %162 = arith.addf %161, %15 : vector<8x256xf32>
    %163 = arith.negf %162 : vector<8x256xf32>
    %164 = math.exp %163 : vector<8x256xf32>
    %cst_48 = arith.constant 1.000000e+00 : f32
    %165 = vector.broadcast %cst_48 : f32 to vector<8x256xf32>
    %166 = arith.addf %165, %164 : vector<8x256xf32>
    %167 = arith.divf %165, %166 : vector<8x256xf32>
    %168 = vector.extract_strided_slice %160 {offsets = [0, 256], sizes = [8, 128], strides = [1, 1]} : vector<8x512xf32> to vector<8x128xf32>
    %169 = arith.addf %168, %18 : vector<8x128xf32>
    %170 = vector.extract_strided_slice %167 {offsets = [0, 0], sizes = [8, 128], strides = [1, 1]} : vector<8x256xf32> to vector<8x128xf32>
    %171 = vector.extract_strided_slice %160 {offsets = [0, 384], sizes = [8, 128], strides = [1, 1]} : vector<8x512xf32> to vector<8x128xf32>
    %172 = arith.addf %171, %21 : vector<8x128xf32>
    %173 = arith.mulf %170, %172 : vector<8x128xf32>
    %174 = arith.addf %169, %173 : vector<8x128xf32>
    %175 = math.tanh %174 : vector<8x128xf32>
    %176 = vector.extract_strided_slice %167 {offsets = [0, 128], sizes = [8, 128], strides = [1, 1]} : vector<8x256xf32> to vector<8x128xf32>
    %cst_49 = arith.constant 1.000000e+00 : f32
    %177 = vector.broadcast %cst_49 : f32 to vector<8x128xf32>
    %178 = arith.subf %177, %176 : vector<8x128xf32>
    %179 = arith.mulf %178, %175 : vector<8x128xf32>
    %180 = vector.extract_strided_slice %167 {offsets = [0, 128], sizes = [8, 128], strides = [1, 1]} : vector<8x256xf32> to vector<8x128xf32>
    %181 = arith.mulf %180, %129 : vector<8x128xf32>
    %182 = arith.addf %179, %181 : vector<8x128xf32>
    %183 = arith.index_cast %133 : i32 to index
    %c0_50 = arith.constant 0 : index
    %184 = vector.load %arg18[%183, %c0_50] : memref<32x128xf32, #tpu.memory_space<vmem>>, vector<8x128xf32>
    tpu.vector_store %arg18[%183, %c0_50], %182 {strides = array<i32>} : memref<32x128xf32, #tpu.memory_space<vmem>>, vector<8x128xf32>,
    %c3_i32 = arith.constant 3 : i32
    %c8_i32_51 = arith.constant 8 : i32
    %185 = arith.muli %c3_i32, %c8_i32_51 : i32
    %186 = tpu.assume_multiple %185, 8 : i32
    %187 = arith.index_cast %186 : i32 to index
    %c0_52 = arith.constant 0 : index
    %188 = vector.load %arg17[%187, %c0_52] : memref<32x384xf32, #tpu.memory_space<vmem>>, vector<8x384xf32>
    %cst_53 = arith.constant dense<0.000000e+00> : vector<8x384xf32>
    %189 = tpu.matmul %158, %22, %cst_53 {dimension_numbers = #tpu.dot_dimension_numbers<[1], [0], [0], [1], [0, 0, 1, 1], [], []>} : vector<8x128xf32>, vector<128x384xf32>, vector<8x384xf32> -> vector<8x384xf32>
    %190 = vector.extract_strided_slice %188 {offsets = [0, 0], sizes = [8, 256], strides = [1, 1]} : vector<8x384xf32> to vector<8x256xf32>
    %191 = vector.extract_strided_slice %189 {offsets = [0, 0], sizes = [8, 256], strides = [1, 1]} : vector<8x384xf32> to vector<8x256xf32>
    %192 = arith.addf %190, %191 : vector<8x256xf32>
    %193 = arith.negf %192 : vector<8x256xf32>
    %194 = math.exp %193 : vector<8x256xf32>
    %cst_54 = arith.constant 1.000000e+00 : f32
    %195 = vector.broadcast %cst_54 : f32 to vector<8x256xf32>
    %196 = arith.addf %195, %194 : vector<8x256xf32>
    %197 = arith.divf %195, %196 : vector<8x256xf32>
    %198 = vector.extract_strided_slice %188 {offsets = [0, 256], sizes = [8, 128], strides = [1, 1]} : vector<8x384xf32> to vector<8x128xf32>
    %199 = vector.extract_strided_slice %197 {offsets = [0, 0], sizes = [8, 128], strides = [1, 1]} : vector<8x256xf32> to vector<8x128xf32>
    %200 = vector.extract_strided_slice %189 {offsets = [0, 256], sizes = [8, 128], strides = [1, 1]} : vector<8x384xf32> to vector<8x128xf32>
    %201 = arith.addf %200, %12 : vector<8x128xf32>
    %202 = arith.mulf %199, %201 : vector<8x128xf32>
    %203 = arith.addf %198, %202 : vector<8x128xf32>
    %204 = math.tanh %203 : vector<8x128xf32>
    %205 = vector.extract_strided_slice %197 {offsets = [0, 128], sizes = [8, 128], strides = [1, 1]} : vector<8x256xf32> to vector<8x128xf32>
    %cst_55 = arith.constant 1.000000e+00 : f32
    %206 = vector.broadcast %cst_55 : f32 to vector<8x128xf32>
    %207 = arith.subf %206, %205 : vector<8x128xf32>
    %208 = arith.mulf %207, %204 : vector<8x128xf32>
    %209 = vector.extract_strided_slice %197 {offsets = [0, 128], sizes = [8, 128], strides = [1, 1]} : vector<8x256xf32> to vector<8x128xf32>
    %210 = arith.mulf %209, %158 : vector<8x128xf32>
    %211 = arith.addf %208, %210 : vector<8x128xf32>
    %212 = tpu.concatenate %211, %182 in 1 : vector<8x128xf32>, vector<8x128xf32> -> vector<8x256xf32>
    %cst_56 = arith.constant dense<0.000000e+00> : vector<8x512xf32>
    %213 = tpu.matmul %212, %23, %cst_56 {dimension_numbers = #tpu.dot_dimension_numbers<[1], [0], [0], [1], [0, 0, 1, 1], [], []>} : vector<8x256xf32>, vector<256x512xf32>, vector<8x512xf32> -> vector<8x512xf32>
    %214 = vector.extract_strided_slice %213 {offsets = [0, 0], sizes = [8, 256], strides = [1, 1]} : vector<8x512xf32> to vector<8x256xf32>
    %215 = arith.addf %214, %15 : vector<8x256xf32>
    %216 = arith.negf %215 : vector<8x256xf32>
    %217 = math.exp %216 : vector<8x256xf32>
    %cst_57 = arith.constant 1.000000e+00 : f32
    %218 = vector.broadcast %cst_57 : f32 to vector<8x256xf32>
    %219 = arith.addf %218, %217 : vector<8x256xf32>
    %220 = arith.divf %218, %219 : vector<8x256xf32>
    %221 = vector.extract_strided_slice %213 {offsets = [0, 256], sizes = [8, 128], strides = [1, 1]} : vector<8x512xf32> to vector<8x128xf32>
    %222 = arith.addf %221, %18 : vector<8x128xf32>
    %223 = vector.extract_strided_slice %220 {offsets = [0, 0], sizes = [8, 128], strides = [1, 1]} : vector<8x256xf32> to vector<8x128xf32>
    %224 = vector.extract_strided_slice %213 {offsets = [0, 384], sizes = [8, 128], strides = [1, 1]} : vector<8x512xf32> to vector<8x128xf32>
    %225 = arith.addf %224, %21 : vector<8x128xf32>
    %226 = arith.mulf %223, %225 : vector<8x128xf32>
    %227 = arith.addf %222, %226 : vector<8x128xf32>
    %228 = math.tanh %227 : vector<8x128xf32>
    %229 = vector.extract_strided_slice %220 {offsets = [0, 128], sizes = [8, 128], strides = [1, 1]} : vector<8x256xf32> to vector<8x128xf32>
    %cst_58 = arith.constant 1.000000e+00 : f32
    %230 = vector.broadcast %cst_58 : f32 to vector<8x128xf32>
    %231 = arith.subf %230, %229 : vector<8x128xf32>
    %232 = arith.mulf %231, %228 : vector<8x128xf32>
    %233 = vector.extract_strided_slice %220 {offsets = [0, 128], sizes = [8, 128], strides = [1, 1]} : vector<8x256xf32> to vector<8x128xf32>
    %234 = arith.mulf %233, %182 : vector<8x128xf32>
    %235 = arith.addf %232, %234 : vector<8x128xf32>
    %236 = arith.index_cast %186 : i32 to index
    %c0_59 = arith.constant 0 : index
    %237 = vector.load %arg18[%236, %c0_59] : memref<32x128xf32, #tpu.memory_space<vmem>>, vector<8x128xf32>
    tpu.vector_store %arg18[%236, %c0_59], %235 {strides = array<i32>} : memref<32x128xf32, #tpu.memory_space<vmem>>, vector<8x128xf32>,
    %c4_i32 = arith.constant 4 : i32
    %c0_60 = arith.constant 0 : index
    %c0_61 = arith.constant 0 : index
    %238 = vector.load %arg15[%c0_60, %c0_61] : memref<8x128xf32, #tpu.memory_space<vmem>>, vector<8x128xf32>
    tpu.vector_store %arg15[%c0_60, %c0_61], %211 {strides = array<i32>} : memref<8x128xf32, #tpu.memory_space<vmem>>, vector<8x128xf32>,
    %c0_62 = arith.constant 0 : index
    %c0_63 = arith.constant 0 : index
    %239 = vector.load %arg16[%c0_62, %c0_63] : memref<8x128xf32, #tpu.memory_space<vmem>>, vector<8x128xf32>
    tpu.vector_store %arg16[%c0_62, %c0_63], %235 {strides = array<i32>} : memref<8x128xf32, #tpu.memory_space<vmem>>, vector<8x128xf32>,
    %c0_64 = arith.constant 0 : index
    %c0_65 = arith.constant 0 : index
    %240 = vector.load %arg18[%c0_64, %c0_65] : memref<32x128xf32, #tpu.memory_space<vmem>>, vector<32x128xf32>
    %c0_66 = arith.constant 0 : index
    %c0_67 = arith.constant 0 : index
    %241 = vector.load %arg10[%c0_66, %c0_67] : memref<128x128xf32, #tpu.memory_space<vmem>>, vector<128x128xf32>
    %cst_68 = arith.constant dense<0.000000e+00> : vector<32x128xf32>
    %242 = tpu.matmul %240, %241, %cst_68 {dimension_numbers = #tpu.dot_dimension_numbers<[1], [0], [0], [1], [0, 0, 1, 1], [], []>} : vector<32x128xf32>, vector<128x128xf32>, vector<32x128xf32> -> vector<32x128xf32>
    %c0_69 = arith.constant 0 : index
    %c0_70 = arith.constant 0 : index
    %243 = vector.load %arg11[%c0_69, %c0_70] : memref<1x128xf32, #tpu.memory_space<vmem>>, vector<1x128xf32>
    %244 = vector.broadcast %243 : vector<1x128xf32> to vector<32x128xf32>
    %245 = arith.addf %242, %244 : vector<32x128xf32>
    %cst_71 = arith.constant 0.000000e+00 : f32
    %246 = vector.broadcast %cst_71 : f32 to vector<32x128xf32>
    %247 = arith.maximumf %245, %246 : vector<32x128xf32>
    %c0_72 = arith.constant 0 : index
    %c0_73 = arith.constant 0 : index
    %248 = vector.load %arg12[%c0_72, %c0_73] : memref<128x256xf32, #tpu.memory_space<vmem>>, vector<128x256xf32>
    %cst_74 = arith.constant dense<0.000000e+00> : vector<32x256xf32>
    %249 = tpu.matmul %247, %248, %cst_74 {dimension_numbers = #tpu.dot_dimension_numbers<[1], [0], [0], [1], [0, 0, 1, 1], [], []>} : vector<32x128xf32>, vector<128x256xf32>, vector<32x256xf32> -> vector<32x256xf32>
    %c0_75 = arith.constant 0 : index
    %c0_76 = arith.constant 0 : index
    %250 = vector.load %arg13[%c0_75, %c0_76] : memref<1x256xf32, #tpu.memory_space<vmem>>, vector<1x256xf32>
    %251 = vector.broadcast %250 : vector<1x256xf32> to vector<32x256xf32>
    %252 = arith.addf %249, %251 : vector<32x256xf32>
    %c0_77 = arith.constant 0 : index
    %c0_78 = arith.constant 0 : index
    %253 = vector.load %arg14[%c0_77, %c0_78] : memref<32x256xf32, #tpu.memory_space<vmem>>, vector<32x256xf32>
    tpu.vector_store %arg14[%c0_77, %c0_78], %252 {strides = array<i32>} : memref<32x256xf32, #tpu.memory_space<vmem>>, vector<32x256xf32>,
    return
  }
  func.func @transform_0(%arg0: i32) -> (i32, i32) {
    %c0_i32 = arith.constant 0 : i32
    %c0_i32_0 = arith.constant 0 : i32
    return %arg0, %c0_i32 : i32, i32
  }
  func.func @transform_1(%arg0: i32) -> (i32, i32) {
    %c0_i32 = arith.constant 0 : i32
    %c0_i32_0 = arith.constant 0 : i32
    %c0_i32_1 = arith.constant 0 : i32
    return %c0_i32, %c0_i32_0 : i32, i32
  }
  func.func @transform_2(%arg0: i32) -> (i32, i32) {
    %c0_i32 = arith.constant 0 : i32
    %c0_i32_0 = arith.constant 0 : i32
    %c0_i32_1 = arith.constant 0 : i32
    return %c0_i32, %c0_i32_0 : i32, i32
  }
  func.func @transform_3(%arg0: i32) -> (i32, i32) {
    %c0_i32 = arith.constant 0 : i32
    %c0_i32_0 = arith.constant 0 : i32
    %c0_i32_1 = arith.constant 0 : i32
    return %c0_i32, %c0_i32_0 : i32, i32
  }
  func.func @transform_4(%arg0: i32) -> (i32, i32) {
    %c0_i32 = arith.constant 0 : i32
    %c0_i32_0 = arith.constant 0 : i32
    %c0_i32_1 = arith.constant 0 : i32
    return %c0_i32, %c0_i32_0 : i32, i32
  }
  func.func @transform_5(%arg0: i32) -> (i32, i32) {
    %c0_i32 = arith.constant 0 : i32
    %c0_i32_0 = arith.constant 0 : i32
    %c0_i32_1 = arith.constant 0 : i32
    return %c0_i32, %c0_i32_0 : i32, i32
  }
  func.func @transform_6(%arg0: i32) -> (i32, i32) {
    %c0_i32 = arith.constant 0 : i32
    %c0_i32_0 = arith.constant 0 : i32
    %c0_i32_1 = arith.constant 0 : i32
    return %c0_i32, %c0_i32_0 : i32, i32
  }
  func.func @transform_7(%arg0: i32) -> (i32, i32) {
    %c0_i32 = arith.constant 0 : i32
    %c0_i32_0 = arith.constant 0 : i32
    %c0_i32_1 = arith.constant 0 : i32
    return %c0_i32, %c0_i32_0 : i32, i32
  }
  func.func @transform_8(%arg0: i32) -> (i32, i32) {
    %c0_i32 = arith.constant 0 : i32
    %c0_i32_0 = arith.constant 0 : i32
    %c0_i32_1 = arith.constant 0 : i32
    return %c0_i32, %c0_i32_0 : i32, i32
  }
  func.func @transform_9(%arg0: i32) -> (i32, i32) {
    %c0_i32 = arith.constant 0 : i32
    %c0_i32_0 = arith.constant 0 : i32
    %c0_i32_1 = arith.constant 0 : i32
    return %c0_i32, %c0_i32_0 : i32, i32
  }
  func.func @transform_10(%arg0: i32) -> (i32, i32) {
    %c0_i32 = arith.constant 0 : i32
    %c0_i32_0 = arith.constant 0 : i32
    %c0_i32_1 = arith.constant 0 : i32
    return %c0_i32, %c0_i32_0 : i32, i32
  }
  func.func @transform_11(%arg0: i32) -> (i32, i32) {
    %c0_i32 = arith.constant 0 : i32
    %c0_i32_0 = arith.constant 0 : i32
    %c0_i32_1 = arith.constant 0 : i32
    return %c0_i32, %c0_i32_0 : i32, i32
  }
  func.func @transform_12(%arg0: i32) -> (i32, i32) {
    %c0_i32 = arith.constant 0 : i32
    %c0_i32_0 = arith.constant 0 : i32
    %c0_i32_1 = arith.constant 0 : i32
    return %c0_i32, %c0_i32_0 : i32, i32
  }
  func.func @transform_13(%arg0: i32) -> (i32, i32) {
    %c0_i32 = arith.constant 0 : i32
    %c0_i32_0 = arith.constant 0 : i32
    return %arg0, %c0_i32 : i32, i32
  }
}

</mosaic_0001>

<llo_original>
// kernel: speech_to_text_forward.1
$region0: #{speech_to_text_forward.1}
  #allocation0 [shape = 'u32[]', space=smem, size = 0x4, offset = 0x4, fixed_abs, tag = 'smem constant byte address 0x4 - core index']
  #allocation1 [shape = 'u32[144,128]{1,0:T(1,128)}', space=vmem, size = 0x12000, scoped, tag = 'internal scratch']
  #allocation2 [shape = 'f32[8,128]{1,0:T(8,128)}', space=vmem, size = 0x1000, scoped, tag = 'scratch operand']
  #allocation3 [shape = 'f32[8,128]{1,0:T(8,128)}', space=vmem, size = 0x1000, scoped, tag = 'scratch operand']
  #allocation4 [shape = 'f32[32,384]{1,0:T(8,128)}', space=vmem, size = 0xc000, scoped, tag = 'scratch operand']
  #allocation5 [shape = 'f32[32,128]{1,0:T(8,128)}', space=vmem, size = 0x4000, scoped, tag = 'scratch operand']
  %s0 = inlined_call_operand.vmem [shape: f32[64,26], index: 0, kind: input, shape index: {}]
  %s1 = inlined_call_operand.vmem [shape: f32[26,384], index: 1, kind: input, shape index: {}]
  %s2 = inlined_call_operand.vmem [shape: f32[128,384], index: 2, kind: input, shape index: {}]
  %s3 = inlined_call_operand.vmem [shape: f32[1,384], index: 3, kind: input, shape index: {}]
  %s4 = inlined_call_operand.vmem [shape: f32[1,128], index: 4, kind: input, shape index: {}]
  %s5 = inlined_call_operand.vmem [shape: f32[256,512], index: 5, kind: input, shape index: {}]
  %s6 = inlined_call_operand.vmem [shape: f32[1,256], index: 6, kind: input, shape index: {}]
  %s7 = inlined_call_operand.vmem [shape: f32[1,128], index: 7, kind: input, shape index: {}]
  %s8 = inlined_call_operand.vmem [shape: f32[1,128], index: 8, kind: input, shape index: {}]
  %s9 = inlined_call_operand.vmem [shape: f32[128,128], index: 9, kind: input, shape index: {}]
  %s10 = inlined_call_operand.vmem [shape: f32[1,128], index: 10, kind: input, shape index: {}]
  %s11 = inlined_call_operand.vmem [shape: f32[128,256], index: 11, kind: input, shape index: {}]
  %s12 = inlined_call_operand.vmem [shape: f32[1,256], index: 12, kind: input, shape index: {}]
  %s13 = inlined_call_operand.vmem [shape: f32[64,256], index: 13, kind: output, shape index: {}]
  %s14 = sld [smem:[#allocation0]]
  $region89: #{speech_to_text_forward.1} parent=0
    _
  %s16 = ssub.s32 1, %s14
  %s17 = scalar_select 0, %s16, %s14
  loop: start=0, step=1, limit=4
  $region2: #{speech_to_text_forward.1} parent=0 // loop_pre_header
    _
  $region3: #{speech_to_text_forward.1} parent=0 // loop_header
    %s19 = sphi 0, %s23
    %p20 = scmp.ge.s32.totalorder %s19, 4
    %s29 = sphi 0, %s31
    %s32 = sphi 0, %s29
    %s33 = sphi 0, %s32
    %s49 = sphi 0, %s33
    %s53 = sphi 0, %s53
    %s55 = sphi 0, %s53
    %s56 = sphi 0, %s55
    %s70 = sphi 0, %s56
    %s74 = sphi 0, %s74
    %s76 = sphi 0, %s74
    %s77 = sphi 0, %s76
    %s91 = sphi 0, %s77
    %s95 = sphi 0, %s95
    %s97 = sphi 0, %s95
    %s98 = sphi 0, %s97
    %s112 = sphi 0, %s98
    %s116 = sphi 0, %s116
    %s118 = sphi 0, %s116
    %s119 = sphi 0, %s118
    %s133 = sphi 0, %s119
    %s137 = sphi 0, %s137
    %s139 = sphi 0, %s137
    %s140 = sphi 0, %s139
    %s154 = sphi 0, %s140
    %s158 = sphi 0, %s158
    %s160 = sphi 0, %s158
    %s161 = sphi 0, %s160
    %s175 = sphi 0, %s161
    %s179 = sphi 0, %s179
    %s181 = sphi 0, %s179
    %s182 = sphi 0, %s181
    %s196 = sphi 0, %s182
    %s200 = sphi 0, %s200
    %s202 = sphi 0, %s200
    %s203 = sphi 0, %s202
    %s217 = sphi 0, %s203
    %s221 = sphi 0, %s221
    %s223 = sphi 0, %s221
    %s224 = sphi 0, %s223
    %s238 = sphi 0, %s224
    %s242 = sphi 0, %s242
    %s244 = sphi 0, %s242
    %s245 = sphi 0, %s244
    %s259 = sphi 0, %s245
    %s263 = sphi 0, %s263
    %s265 = sphi 0, %s263
    %s266 = sphi 0, %s265
    %s280 = sphi 0, %s266
    %s284 = sphi 0, %s284
    %s286 = sphi 0, %s284
    %s287 = sphi 0, %s286
    %s301 = sphi 0, %s287
    %s307 = sphi 0, %s309
    %s310 = sphi 0, %s307
    %s311 = sphi 0, %s310
    %s327 = sphi 0, %s311
  $region4: #{speech_to_text_forward.1} parent=0 // loop_header_branch
    %22 = sbr.rel (%p20) target = $region8
  $region5: #{speech_to_text_forward.1} parent=0 // loop_body
    %s24 = ssub.s32 %s19, 1
    %s25 = ssub.s32 %s19, 2
    %s26 = sadd.s32 %s19, 1
    %s27 = ssub.s32 %s19, %s26
    %p28 = scmp.eq.s32.totalorder %s27, 0
    %s30 = sadd.s32 %s29, 1
    %s31 = scalar_select %p28, %s29, %s30
    %p34 = pneg %p28
    %p35 = scmp.eq.s32.totalorder %s19, 1
    %p36 = por %p34, %p35
    %p37 = scmp.ne.s32.totalorder %s29, %s32
    %p38 = scmp.eq.s32.totalorder %s19, 0
    %p39 = por %p37, %p38
    %p40 = scmp.ne.s32.totalorder %s29, %s32
    %p41 = scmp.eq.s32.totalorder %s24, 1
    %p42 = por %p40, %p41
    %p43 = scmp.ne.s32.totalorder %s32, %s33
    %p44 = scmp.eq.s32.totalorder %s24, 0
    %p45 = por %p43, %p44
    %p46 = scmp.ne.s32.totalorder %s32, %s33
    %p47 = scmp.eq.s32.totalorder %s25, 1
    %p48 = por %p46, %p47
    %p50 = scmp.ne.s32.totalorder %s33, %s49
    %p51 = scmp.eq.s32.totalorder %s25, 0
    %p52 = por %p50, %p51
    %s54 = sadd.s32 %s53, 1
    %p57 = scmp.eq.s32.totalorder %s19, 1
    %p58 = scmp.ne.s32.totalorder %s53, %s55
    %p59 = scmp.eq.s32.totalorder %s19, 0
    %p60 = por %p58, %p59
    %p61 = scmp.ne.s32.totalorder %s53, %s55
    %p62 = scmp.eq.s32.totalorder %s24, 1
    %p63 = por %p61, %p62
    %p64 = scmp.ne.s32.totalorder %s55, %s56
    %p65 = scmp.eq.s32.totalorder %s24, 0
    %p66 = por %p64, %p65
    %p67 = scmp.ne.s32.totalorder %s55, %s56
    %p68 = scmp.eq.s32.totalorder %s25, 1
    %p69 = por %p67, %p68
    %p71 = scmp.ne.s32.totalorder %s56, %s70
    %p72 = scmp.eq.s32.totalorder %s25, 0
    %p73 = por %p71, %p72
    %s75 = sadd.s32 %s74, 1
    %p78 = scmp.eq.s32.totalorder %s19, 1
    %p79 = scmp.ne.s32.totalorder %s74, %s76
    %p80 = scmp.eq.s32.totalorder %s19, 0
    %p81 = por %p79, %p80
    %p82 = scmp.ne.s32.totalorder %s74, %s76
    %p83 = scmp.eq.s32.totalorder %s24, 1
    %p84 = por %p82, %p83
    %p85 = scmp.ne.s32.totalorder %s76, %s77
    %p86 = scmp.eq.s32.totalorder %s24, 0
    %p87 = por %p85, %p86
    %p88 = scmp.ne.s32.totalorder %s76, %s77
    %p89 = scmp.eq.s32.totalorder %s25, 1
    %p90 = por %p88, %p89
    %p92 = scmp.ne.s32.totalorder %s77, %s91
    %p93 = scmp.eq.s32.totalorder %s25, 0
    %p94 = por %p92, %p93
    %s96 = sadd.s32 %s95, 1
    %p99 = scmp.eq.s32.totalorder %s19, 1
    %p100 = scmp.ne.s32.totalorder %s95, %s97
    %p101 = scmp.eq.s32.totalorder %s19, 0
    %p102 = por %p100, %p101
    %p103 = scmp.ne.s32.totalorder %s95, %s97
    %p104 = scmp.eq.s32.totalorder %s24, 1
    %p105 = por %p103, %p104
    %p106 = scmp.ne.s32.totalorder %s97, %s98
    %p107 = scmp.eq.s32.totalorder %s24, 0
    %p108 = por %p106, %p107
    %p109 = scmp.ne.s32.totalorder %s97, %s98
    %p110 = scmp.eq.s32.totalorder %s25, 1
    %p111 = por %p109, %p110
    %p113 = scmp.ne.s32.totalorder %s98, %s112
    %p114 = scmp.eq.s32.totalorder %s25, 0
    %p115 = por %p113, %p114
    %s117 = sadd.s32 %s116, 1
    %p120 = scmp.eq.s32.totalorder %s19, 1
    %p121 = scmp.ne.s32.totalorder %s116, %s118
    %p122 = scmp.eq.s32.totalorder %s19, 0
    %p123 = por %p121, %p122
    %p124 = scmp.ne.s32.totalorder %s116, %s118
    %p125 = scmp.eq.s32.totalorder %s24, 1
    %p126 = por %p124, %p125
    %p127 = scmp.ne.s32.totalorder %s118, %s119
    %p128 = scmp.eq.s32.totalorder %s24, 0
    %p129 = por %p127, %p128
    %p130 = scmp.ne.s32.totalorder %s118, %s119
    %p131 = scmp.eq.s32.totalorder %s25, 1
    %p132 = por %p130, %p131
    %p134 = scmp.ne.s32.totalorder %s119, %s133
    %p135 = scmp.eq.s32.totalorder %s25, 0
    %p136 = por %p134, %p135
    %s138 = sadd.s32 %s137, 1
    %p141 = scmp.eq.s32.totalorder %s19, 1
    %p142 = scmp.ne.s32.totalorder %s137, %s139
    %p143 = scmp.eq.s32.totalorder %s19, 0
    %p144 = por %p142, %p143
    %p145 = scmp.ne.s32.totalorder %s137, %s139
    %p146 = scmp.eq.s32.totalorder %s24, 1
    %p147 = por %p145, %p146
    %p148 = scmp.ne.s32.totalorder %s139, %s140
    %p149 = scmp.eq.s32.totalorder %s24, 0
    %p150 = por %p148, %p149
    %p151 = scmp.ne.s32.totalorder %s139, %s140
    %p152 = scmp.eq.s32.totalorder %s25, 1
    %p153 = por %p151, %p152
    %p155 = scmp.ne.s32.totalorder %s140, %s154
    %p156 = scmp.eq.s32.totalorder %s25, 0
    %p157 = por %p155, %p156
    %s159 = sadd.s32 %s158, 1
    %p162 = scmp.eq.s32.totalorder %s19, 1
    %p163 = scmp.ne.s32.totalorder %s158, %s160
    %p164 = scmp.eq.s32.totalorder %s19, 0
    %p165 = por %p163, %p164
    %p166 = scmp.ne.s32.totalorder %s158, %s160
    %p167 = scmp.eq.s32.totalorder %s24, 1
    %p168 = por %p166, %p167
    %p169 = scmp.ne.s32.totalorder %s160, %s161
    %p170 = scmp.eq.s32.totalorder %s24, 0
    %p171 = por %p169, %p170
    %p172 = scmp.ne.s32.totalorder %s160, %s161
    %p173 = scmp.eq.s32.totalorder %s25, 1
    %p174 = por %p172, %p173
    %p176 = scmp.ne.s32.totalorder %s161, %s175
    %p177 = scmp.eq.s32.totalorder %s25, 0
    %p178 = por %p176, %p177
    %s180 = sadd.s32 %s179, 1
    %p183 = scmp.eq.s32.totalorder %s19, 1
    %p184 = scmp.ne.s32.totalorder %s179, %s181
    %p185 = scmp.eq.s32.totalorder %s19, 0
    %p186 = por %p184, %p185
    %p187 = scmp.ne.s32.totalorder %s179, %s181
    %p188 = scmp.eq.s32.totalorder %s24, 1
    %p189 = por %p187, %p188
    %p190 = scmp.ne.s32.totalorder %s181, %s182
    %p191 = scmp.eq.s32.totalorder %s24, 0
    %p192 = por %p190, %p191
    %p193 = scmp.ne.s32.totalorder %s181, %s182
    %p194 = scmp.eq.s32.totalorder %s25, 1
    %p195 = por %p193, %p194
    %p197 = scmp.ne.s32.totalorder %s182, %s196
    %p198 = scmp.eq.s32.totalorder %s25, 0
    %p199 = por %p197, %p198
    %s201 = sadd.s32 %s200, 1
    %p204 = scmp.eq.s32.totalorder %s19, 1
    %p205 = scmp.ne.s32.totalorder %s200, %s202
    %p206 = scmp.eq.s32.totalorder %s19, 0
    %p207 = por %p205, %p206
    %p208 = scmp.ne.s32.totalorder %s200, %s202
    %p209 = scmp.eq.s32.totalorder %s24, 1
    %p210 = por %p208, %p209
    %p211 = scmp.ne.s32.totalorder %s202, %s203
    %p212 = scmp.eq.s32.totalorder %s24, 0
    %p213 = por %p211, %p212
    %p214 = scmp.ne.s32.totalorder %s202, %s203
    %p215 = scmp.eq.s32.totalorder %s25, 1
    %p216 = por %p214, %p215
    %p218 = scmp.ne.s32.totalorder %s203, %s217
    %p219 = scmp.eq.s32.totalorder %s25, 0
    %p220 = por %p218, %p219
    %s222 = sadd.s32 %s221, 1
    %p225 = scmp.eq.s32.totalorder %s19, 1
    %p226 = scmp.ne.s32.totalorder %s221, %s223
    %p227 = scmp.eq.s32.totalorder %s19, 0
    %p228 = por %p226, %p227
    %p229 = scmp.ne.s32.totalorder %s221, %s223
    %p230 = scmp.eq.s32.totalorder %s24, 1
    %p231 = por %p229, %p230
    %p232 = scmp.ne.s32.totalorder %s223, %s224
    %p233 = scmp.eq.s32.totalorder %s24, 0
    %p234 = por %p232, %p233
    %p235 = scmp.ne.s32.totalorder %s223, %s224
    %p236 = scmp.eq.s32.totalorder %s25, 1
    %p237 = por %p235, %p236
    %p239 = scmp.ne.s32.totalorder %s224, %s238
    %p240 = scmp.eq.s32.totalorder %s25, 0
    %p241 = por %p239, %p240
    %s243 = sadd.s32 %s242, 1
    %p246 = scmp.eq.s32.totalorder %s19, 1
    %p247 = scmp.ne.s32.totalorder %s242, %s244
    %p248 = scmp.eq.s32.totalorder %s19, 0
    %p249 = por %p247, %p248
    %p250 = scmp.ne.s32.totalorder %s242, %s244
    %p251 = scmp.eq.s32.totalorder %s24, 1
    %p252 = por %p250, %p251
    %p253 = scmp.ne.s32.totalorder %s244, %s245
    %p254 = scmp.eq.s32.totalorder %s24, 0
    %p255 = por %p253, %p254
    %p256 = scmp.ne.s32.totalorder %s244, %s245
    %p257 = scmp.eq.s32.totalorder %s25, 1
    %p258 = por %p256, %p257
    %p260 = scmp.ne.s32.totalorder %s245, %s259
    %p261 = scmp.eq.s32.totalorder %s25, 0
    %p262 = por %p260, %p261
    %s264 = sadd.s32 %s263, 1
    %p267 = scmp.eq.s32.totalorder %s19, 1
    %p268 = scmp.ne.s32.totalorder %s263, %s265
    %p269 = scmp.eq.s32.totalorder %s19, 0
    %p270 = por %p268, %p269
    %p271 = scmp.ne.s32.totalorder %s263, %s265
    %p272 = scmp.eq.s32.totalorder %s24, 1
    %p273 = por %p271, %p272
    %p274 = scmp.ne.s32.totalorder %s265, %s266
    %p275 = scmp.eq.s32.totalorder %s24, 0
    %p276 = por %p274, %p275
    %p277 = scmp.ne.s32.totalorder %s265, %s266
    %p278 = scmp.eq.s32.totalorder %s25, 1
    %p279 = por %p277, %p278
    %p281 = scmp.ne.s32.totalorder %s266, %s280
    %p282 = scmp.eq.s32.totalorder %s25, 0
    %p283 = por %p281, %p282
    %s285 = sadd.s32 %s284, 1
    %p288 = scmp.eq.s32.totalorder %s19, 1
    %p289 = scmp.ne.s32.totalorder %s284, %s286
    %p290 = scmp.eq.s32.totalorder %s19, 0
    %p291 = por %p289, %p290
    %p292 = scmp.ne.s32.totalorder %s284, %s286
    %p293 = scmp.eq.s32.totalorder %s24, 1
    %p294 = por %p292, %p293
    %p295 = scmp.ne.s32.totalorder %s286, %s287
    %p296 = scmp.eq.s32.totalorder %s24, 0
    %p297 = por %p295, %p296
    %p298 = scmp.ne.s32.totalorder %s286, %s287
    %p299 = scmp.eq.s32.totalorder %s25, 1
    %p300 = por %p298, %p299
    %p302 = scmp.ne.s32.totalorder %s287, %s301
    %p303 = scmp.eq.s32.totalorder %s25, 0
    %p304 = por %p302, %p303
    %s305 = ssub.s32 %s19, %s26
    %p306 = scmp.eq.s32.totalorder %s305, 0
    %s308 = sadd.s32 %s307, 1
    %s309 = scalar_select %p306, %s307, %s308
    %p312 = pneg %p306
    %p313 = scmp.eq.s32.totalorder %s19, 1
    %p314 = por %p312, %p313
    %p315 = scmp.ne.s32.totalorder %s307, %s310
    %p316 = scmp.eq.s32.totalorder %s19, 0
    %p317 = por %p315, %p316
    %p318 = scmp.ne.s32.totalorder %s307, %s310
    %p319 = scmp.eq.s32.totalorder %s24, 1
    %p320 = por %p318, %p319
    %p321 = scmp.ne.s32.totalorder %s310, %s311
    %p322 = scmp.eq.s32.totalorder %s24, 0
    %p323 = por %p321, %p322
    %p324 = scmp.ne.s32.totalorder %s310, %s311
    %p325 = scmp.eq.s32.totalorder %s25, 1
    %p326 = por %p324, %p325
    %p328 = scmp.ne.s32.totalorder %s311, %s327
    %p329 = scmp.eq.s32.totalorder %s25, 0
    %p330 = por %p328, %p329
    %p331 = scmp.le.s32.totalorder 1, %s19
    %p332 = scmp.lt.s32.totalorder %s19, 3
    %p333 = pnand %p331, %p332
    %p334 = pneg %p333
    // Predicated region
    $region9: #{speech_to_text_forward.1} parent=5 // pred_check
      _
    $region10: #{speech_to_text_forward.1} parent=5 // pred_check_branch
      %336 = sbr.rel (%p333) target = $region12
    $region11: #{speech_to_text_forward.1} parent=5 // pred_region
      %s337 = ssub.s32 %s19, 1
      // Predicated region
      $region13: #{speech_to_text_forward.1} parent=11 // pred_check
        %p338 = pneg %p66
      $region14: #{speech_to_text_forward.1} parent=11 // pred_check_branch
        %340 = sbr.rel (%p338) target = $region16
      $region15: #{speech_to_text_forward.1} parent=11 // pred_region
        _
      $region16: #{speech_to_text_forward.1} parent=11 // pred_fallthru
        _
      // Predicated region
      $region17: #{speech_to_text_forward.1} parent=11 // pred_check
        %p341 = pneg %p87
      $region18: #{speech_to_text_forward.1} parent=11 // pred_check_branch
        %343 = sbr.rel (%p341) target = $region20
      $region19: #{speech_to_text_forward.1} parent=11 // pred_region
        _
      $region20: #{speech_to_text_forward.1} parent=11 // pred_fallthru
        _
      // Predicated region
      $region21: #{speech_to_text_forward.1} parent=11 // pred_check
        %p344 = pneg %p108
      $region22: #{speech_to_text_forward.1} parent=11 // pred_check_branch
        %346 = sbr.rel (%p344) target = $region24
      $region23: #{speech_to_text_forward.1} parent=11 // pred_region
        _
      $region24: #{speech_to_text_forward.1} parent=11 // pred_fallthru
        _
      // Predicated region
      $region25: #{speech_to_text_forward.1} parent=11 // pred_check
        %p347 = pneg %p129
      $region26: #{speech_to_text_forward.1} parent=11 // pred_check_branch
        %349 = sbr.rel (%p347) target = $region28
      $region27: #{speech_to_text_forward.1} parent=11 // pred_region
        _
      $region28: #{speech_to_text_forward.1} parent=11 // pred_fallthru
        _
      // Predicated region
      $region29: #{speech_to_text_forward.1} parent=11 // pred_check
        %p350 = pneg %p150
      $region30: #{speech_to_text_forward.1} parent=11 // pred_check_branch
        %352 = sbr.rel (%p350) target = $region32
      $region31: #{speech_to_text_forward.1} parent=11 // pred_region
        _
      $region32: #{speech_to_text_forward.1} parent=11 // pred_fallthru
        _
      // Predicated region
      $region33: #{speech_to_text_forward.1} parent=11 // pred_check
        %p353 = pneg %p171
      $region34: #{speech_to_text_forward.1} parent=11 // pred_check_branch
        %355 = sbr.rel (%p353) target = $region36
      $region35: #{speech_to_text_forward.1} parent=11 // pred_region
        _
      $region36: #{speech_to_text_forward.1} parent=11 // pred_fallthru
        _
      // Predicated region
      $region37: #{speech_to_text_forward.1} parent=11 // pred_check
        %p356 = pneg %p192
      $region38: #{speech_to_text_forward.1} parent=11 // pred_check_branch
        %358 = sbr.rel (%p356) target = $region40
      $region39: #{speech_to_text_forward.1} parent=11 // pred_region
        _
      $region40: #{speech_to_text_forward.1} parent=11 // pred_fallthru
        _
      // Predicated region
      $region41: #{speech_to_text_forward.1} parent=11 // pred_check
        %p359 = pneg %p213
      $region42: #{speech_to_text_forward.1} parent=11 // pred_check_branch
        %361 = sbr.rel (%p359) target = $region44
      $region43: #{speech_to_text_forward.1} parent=11 // pred_region
        _
      $region44: #{speech_to_text_forward.1} parent=11 // pred_fallthru
        _
      // Predicated region
      $region45: #{speech_to_text_forward.1} parent=11 // pred_check
        %p362 = pneg %p234
      $region46: #{speech_to_text_forward.1} parent=11 // pred_check_branch
        %364 = sbr.rel (%p362) target = $region48
      $region47: #{speech_to_text_forward.1} parent=11 // pred_region
        _
      $region48: #{speech_to_text_forward.1} parent=11 // pred_fallthru
        _
      // Predicated region
      $region49: #{speech_to_text_forward.1} parent=11 // pred_check
        %p365 = pneg %p255
      $region50: #{speech_to_text_forward.1} parent=11 // pred_check_branch
        %367 = sbr.rel (%p365) target = $region52
      $region51: #{speech_to_text_forward.1} parent=11 // pred_region
        _
      $region52: #{speech_to_text_forward.1} parent=11 // pred_fallthru
        _
      // Predicated region
      $region53: #{speech_to_text_forward.1} parent=11 // pred_check
        %p368 = pneg %p276
      $region54: #{speech_to_text_forward.1} parent=11 // pred_check_branch
        %370 = sbr.rel (%p368) target = $region56
      $region55: #{speech_to_text_forward.1} parent=11 // pred_region
        _
      $region56: #{speech_to_text_forward.1} parent=11 // pred_fallthru
        _
      // Predicated region
      $region57: #{speech_to_text_forward.1} parent=11 // pred_check
        %p371 = pneg %p297
      $region58: #{speech_to_text_forward.1} parent=11 // pred_check_branch
        %373 = sbr.rel (%p371) target = $region60
      $region59: #{speech_to_text_forward.1} parent=11 // pred_region
        _
      $region60: #{speech_to_text_forward.1} parent=11 // pred_fallthru
        _
    $region12: #{speech_to_text_forward.1} parent=5 // pred_fallthru
      _
    %p374 = scmp.lt.s32.totalorder %s19, 2
    // Predicated region
    $region61: #{speech_to_text_forward.1} parent=5 // pred_check
      %p375 = pneg %p374
    $region62: #{speech_to_text_forward.1} parent=5 // pred_check_branch
      %377 = sbr.rel (%p375) target = $region64
    $region63: #{speech_to_text_forward.1} parent=5 // pred_region
      // Predicated region
      $region65: #{speech_to_text_forward.1} parent=63 // pred_check
        %p378 = pneg %p39
      $region66: #{speech_to_text_forward.1} parent=63 // pred_check_branch
        %380 = sbr.rel (%p378) target = $region68
      $region67: #{speech_to_text_forward.1} parent=63 // pred_region
        %s381 = smul.u32 4, %s19
        %p382 = scmp.lt.s32.totalorder %s381, 7
        %s383 = scalar_select %p382, %s381, 7
        %s384 = smul.addr %s383, 8
        %s385 = scalar_lea.vmem %s0, %s384
        %s386 = smul.u32 4, %s19
      $region68: #{speech_to_text_forward.1} parent=63 // pred_fallthru
        _
    $region64: #{speech_to_text_forward.1} parent=5 // pred_fallthru
      _
    %p387 = scmp.le.s32.totalorder 1, %s19
    %p388 = scmp.lt.s32.totalorder %s19, 3
    %p389 = pnand %p387, %p388
    %p390 = pneg %p389
    // Predicated region
    $region69: #{speech_to_text_forward.1} parent=5 // pred_check
      _
    $region70: #{speech_to_text_forward.1} parent=5 // pred_check_branch
      %392 = sbr.rel (%p389) target = $region72
    $region71: #{speech_to_text_forward.1} parent=5 // pred_region
      %s393 = ssub.s32 %s19, 1
      %s394 = smul.u32 4, %s24
      %p395 = scmp.lt.s32.totalorder %s394, 7
      %s396 = scalar_select %p395, %s394, 7
      %s397 = smul.addr %s396, 8
      %s398 = scalar_lea.vmem %s0, %s397
      %p399 = pneg %p45
      %p400 = pneg %p42
      %p401 = pneg %p66
      %p402 = pneg %p63
      %p403 = pneg %p87
      %p404 = pneg %p84
      %p405 = pneg %p108
      %p406 = pneg %p105
      %p407 = pneg %p129
      %p408 = pneg %p126
      %p409 = pneg %p150
      %p410 = pneg %p147
      %p411 = pneg %p171
      %p412 = pneg %p168
      %p413 = pneg %p192
      %p414 = pneg %p189
      %p415 = pneg %p213
      %p416 = pneg %p210
      %p417 = pneg %p234
      %p418 = pneg %p231
      %p419 = pneg %p255
      %p420 = pneg %p252
      %p421 = pneg %p276
      %p422 = pneg %p273
      %p423 = pneg %p297
      %p424 = pneg %p294
      %p425 = pneg %p323
      %p426 = pneg %p320
      %s427 = smul.u32 4, %s24
      %p428 = scmp.lt.s32.totalorder %s427, 7
      %s429 = scalar_select %p428, %s427, 7
      %s430 = smul.addr %s429, 2
      %s431 = smul.addr %s430, 8
      %s432 = scalar_lea.vmem %s13, %s431
      %s433 = smul.u32 4, %s24
      %p434 = scmp.lt.s32.totalorder %s433, 7
      %s435 = scalar_select %p434, %s433, 7
      %s436 = smul.addr %s435, 8
      %s437 = scalar_lea.vmem %s0, %s436
      %s438 = smul.u32 4, %s24
      %s439 = smul.u32 4, %s24
      %p440 = scmp.lt.s32.totalorder %s439, 7
      %s441 = scalar_select %p440, %s439, 7
      %s442 = smul.addr %s441, 2
      %s443 = smul.addr %s442, 8
      %s444 = scalar_lea.vmem %s13, %s443
      %s445 = smul.u32 4, %s24
      %p446 = scmp.eq.s32.totalorder %s24, 0
      // Predicated region
      $region73: #{speech_to_text_forward.1} parent=71 // pred_check
        %p447 = pneg %p446
      $region74: #{speech_to_text_forward.1} parent=71 // pred_check_branch
        %449 = sbr.rel (%p447) target = $region76
      $region75: #{speech_to_text_forward.1} parent=71 // pred_region
        %450 = vst [vmem:[#allocation2] sm:$0xff] 0.0
        %451 = vst [vmem:[#allocation3] sm:$0xff] 0.0
      $region76: #{speech_to_text_forward.1} parent=71 // pred_fallthru
        _
      %v452 = vld [vmem:[%s437] sm:$0xff]
      %v453 = vld [vmem:[%s437 + $0x8] sm:$0xff]
      %v454 = vld [vmem:[%s437 + $0x10] sm:$0xff]
      %v455 = vld [vmem:[%s437 + $0x18] sm:$0xff]
      %v456 = vld [vmem:[%s1] sm:$0xff]
      %v457 = vld [vmem:[%s1 + $0x8] sm:$0xff]
      %v458 = vld [vmem:[%s1 + $0x10] sm:$0xff]
      %v459 = vld [vmem:[%s1 + $0x18] sm:$0xff]
      %v460 = vld [vmem:[%s1 + $0x20] sm:$0xff]
      %v461 = vld [vmem:[%s1 + $0x28] sm:$0xff]
      %v462 = vld [vmem:[%s1 + $0x30] sm:$0xff]
      %v463 = vld [vmem:[%s1 + $0x38] sm:$0xff]
      %v464 = vld [vmem:[%s1 + $0x40] sm:$0xff]
      %v465 = vld [vmem:[%s1 + $0x48] sm:$0x3]
      %v466 = vld [vmem:[%s1 + $0x50] sm:$0x3]
      %v467 = vld [vmem:[%s1 + $0x58] sm:$0x3]
      %v468 = vld [vmem:[%s3] sm:$0x7]
      %v470 = vlaneseq
      %v471 = vshrl.u32 %v470, 7
      %v472 = vsub.s32 0, %v471
      %v473 = vrot.slane %v468, %v472
      %v474 = vlaneseq
      %v475 = vshrl.u32 %v474, 7
      %v476 = vsub.s32 1, %v475
      %v477 = vrot.slane %v468, %v476
      %v478 = vlaneseq
      %v479 = vshrl.u32 %v478, 7
      %v480 = vsub.s32 2, %v479
      %v481 = vrot.slane %v468, %v480
      %vm485 = vcmask 211968
      %v487 = vsel %vm485, %v452, 0
      %v490 = vsel %vm485, %v453, 0
      %v493 = vsel %vm485, %v454, 0
      %v496 = vsel %vm485, %v455, 0
      %vm498 = vcmask 1041408
      %v500 = vsel %vm498, %v465, 0
      %v503 = vsel %vm498, %v466, 0
      %v506 = vsel %vm498, %v467, 0
      %508 = vmatprep.subr.mxu0 %v457
      %509 = vmatpush1.msra.mxu0 %v456
      %510 = vmatprep.subr.mxu0 %v460
      %511 = vmatpush1.msra.mxu0 %v459
      %512 = vmatprep.subr.mxu0 %v463
      %513 = vmatpush1.msra.mxu0 %v462
      %514 = vmatprep.subr.mxu0 %v503
      %515 = vmatpush1.msra.mxu0 %v500
      %516 = vmatprep.subr.mxu0 0.0
      %517 = vmatpush1.msra.mxu0 0.0
      %518 = vmatprep.subr.mxu0 0.0
      %519 = vmatpush1.msra.mxu0 0.0
      %520 = vmatprep.subr.mxu0 0.0
      %521 = vmatpush1.msra.mxu0 0.0
      %522 = vmatprep.subr.mxu0 0.0
      %523 = vmatpush1.msra.mxu0 0.0
      %524 = vmatprep.subr.mxu0 0.0
      %525 = vmatpush1.msra.mxu0 0.0
      %526 = vmatprep.subr.mxu0 0.0
      %527 = vmatpush1.msra.mxu0 0.0
      %528 = vmatprep.subr.mxu0 0.0
      %529 = vmatpush1.msra.mxu0 0.0
      %530 = vmatprep.subr.mxu0 0.0
      %531 = vmatpush1.msra.mxu0 0.0
      %532 = vmatprep.subr.mxu0 0.0
      %533 = vmatpush1.msra.mxu0 0.0
      %534 = vmatprep.subr.mxu0 0.0
      %535 = vmatpush1.msra.mxu0 0.0
      %536 = vmatprep.subr.mxu0 0.0
      %537 = vmatpush1.msra.mxu0 0.0
      %538 = vmatprep.subr.mxu0 0.0
      %539 = vmatpush1.msra.mxu0 0.0
      %540 = vmatprep.subr.mxu0 0.0
      %541 = vmatpush1.msra.mxu0 0.0
      %542 = vmatprep.subr.mxu0 0.0
      %543 = vmatpush1.msra.mxu0 0.0
      %544 = vmatprep.subr.mxu0 0.0
      %545 = vmatpush1.msra.mxu0 0.0
      %546 = vmatprep.subr.mxu0 0.0
      %547 = vmatpush1.msra.mxu0 0.0
      %548 = vmatprep.subr.mxu0 0.0
      %549 = vmatpush1.msra.mxu0 0.0
      %550 = vmatprep.subr.mxu0 0.0
      %551 = vmatpush1.msra.mxu0 0.0
      %552 = vmatprep.subr.mxu0 0.0
      %553 = vmatpush1.msra.mxu0 0.0
      %554 = vmatprep.subr.mxu0 0.0
      %555 = vmatpush1.msra.mxu0 0.0
      %556 = vmatprep.subr.mxu0 0.0
      %557 = vmatpush1.msra.mxu0 0.0
      %558 = vmatprep.subr.mxu0 0.0
      %559 = vmatpush1.msra.mxu0 0.0
      %560 = vmatprep.subr.mxu0 0.0
      %561 = vmatpush1.msra.mxu0 0.0
      %562 = vmatprep.subr.mxu0 0.0
      %563 = vmatpush1.msra.mxu0 0.0
      %564 = vmatprep.subr.mxu0 0.0
      %565 = vmatpush1.msra.mxu0 0.0
      %566 = vmatprep.subr.mxu0 0.0
      %567 = vmatpush1.msra.mxu0 0.0
      %568 = vmatprep.subr.mxu0 0.0
      %569 = vmatpush1.msra.mxu0 0.0
      %570 = vmatprep.subr.mxu0 0.0
      %571 = vmatpush1.msra.mxu0 0.0
      %572 = vmatprep.mubr.f32.mxu0 0.0
      %573 = vmatmul.mubr.f32.gmra.mrb[0].mxu0 %v487
      %v574 = vpop.f32.mrb[0].mxu0
      %v575 = vadd.f32 %v473, %v574
      %v576 = vpop.f32.mrb[0].mxu0
      %v577 = vadd.f32 %v477, %v576
      %578 = vmatprep.mubr.f32.mxu0 0.0
      %579 = vmatmul.mubr.f32.gmra.mrb[0].mxu0 %v490
      %v580 = vpop.f32.mrb[0].mxu0
      %v581 = vadd.f32 %v473, %v580
      %v582 = vpop.f32.mrb[0].mxu0
      %v583 = vadd.f32 %v477, %v582
      %584 = vmatprep.mubr.f32.mxu0 0.0
      %585 = vmatmul.mubr.f32.gmra.mrb[0].mxu0 %v493
      %v586 = vpop.f32.mrb[0].mxu0
      %v587 = vadd.f32 %v473, %v586
      %v588 = vpop.f32.mrb[0].mxu0
      %v589 = vadd.f32 %v477, %v588
      %590 = vmatprep.mubr.f32.mxu0 0.0
      %591 = vmatmul.mubr.f32.gmra.mrb[0].mxu0 %v496
      %v592 = vpop.f32.mrb[0].mxu0
      %v593 = vadd.f32 %v473, %v592
      %v594 = vpop.f32.mrb[0].mxu0
      %v595 = vadd.f32 %v477, %v594
      %596 = vdwg.mxu0
      %597 = vmatprep.subr.mxu0 0.0
      %598 = vmatpush1.msra.mxu0 %v458
      %599 = vmatprep.subr.mxu0 0.0
      %600 = vmatpush1.msra.mxu0 %v461
      %601 = vmatprep.subr.mxu0 0.0
      %602 = vmatpush1.msra.mxu0 %v464
      %603 = vmatprep.subr.mxu0 0.0
      %604 = vmatpush1.msra.mxu0 %v506
      %605 = vmatprep.subr.mxu0 0.0
      %606 = vmatpush1.msra.mxu0 0.0
      %607 = vmatprep.subr.mxu0 0.0
      %608 = vmatpush1.msra.mxu0 0.0
      %609 = vmatprep.subr.mxu0 0.0
      %610 = vmatpush1.msra.mxu0 0.0
      %611 = vmatprep.subr.mxu0 0.0
      %612 = vmatpush1.msra.mxu0 0.0
      %613 = vmatprep.subr.mxu0 0.0
      %614 = vmatpush1.msra.mxu0 0.0
      %615 = vmatprep.subr.mxu0 0.0
      %616 = vmatpush1.msra.mxu0 0.0
      %617 = vmatprep.subr.mxu0 0.0
      %618 = vmatpush1.msra.mxu0 0.0
      %619 = vmatprep.subr.mxu0 0.0
      %620 = vmatpush1.msra.mxu0 0.0
      %621 = vmatprep.subr.mxu0 0.0
      %622 = vmatpush1.msra.mxu0 0.0
      %623 = vmatprep.subr.mxu0 0.0
      %624 = vmatpush1.msra.mxu0 0.0
      %625 = vmatprep.subr.mxu0 0.0
      %626 = vmatpush1.msra.mxu0 0.0
      %627 = vmatprep.subr.mxu0 0.0
      %628 = vmatpush1.msra.mxu0 0.0
      %629 = vmatprep.subr.mxu0 0.0
      %630 = vmatpush1.msra.mxu0 0.0
      %631 = vmatprep.subr.mxu0 0.0
      %632 = vmatpush1.msra.mxu0 0.0
      %633 = vmatprep.subr.mxu0 0.0
      %634 = vmatpush1.msra.mxu0 0.0
      %635 = vmatprep.subr.mxu0 0.0
      %636 = vmatpush1.msra.mxu0 0.0
      %637 = vmatprep.subr.mxu0 0.0
      %638 = vmatpush1.msra.mxu0 0.0
      %639 = vmatprep.subr.mxu0 0.0
      %640 = vmatpush1.msra.mxu0 0.0
      %641 = vmatprep.subr.mxu0 0.0
      %642 = vmatpush1.msra.mxu0 0.0
      %643 = vmatprep.subr.mxu0 0.0
      %644 = vmatpush1.msra.mxu0 0.0
      %645 = vmatprep.subr.mxu0 0.0
      %646 = vmatpush1.msra.mxu0 0.0
      %647 = vmatprep.subr.mxu0 0.0
      %648 = vmatpush1.msra.mxu0 0.0
      %649 = vmatprep.subr.mxu0 0.0
      %650 = vmatpush1.msra.mxu0 0.0
      %651 = vmatprep.subr.mxu0 0.0
      %652 = vmatpush1.msra.mxu0 0.0
      %653 = vmatprep.subr.mxu0 0.0
      %654 = vmatpush1.msra.mxu0 0.0
      %655 = vmatprep.subr.mxu0 0.0
      %656 = vmatpush1.msra.mxu0 0.0
      %657 = vmatprep.subr.mxu0 0.0
      %658 = vmatpush1.msra.mxu0 0.0
      %659 = vmatprep.subr.mxu0 0.0
      %660 = vmatpush1.msra.mxu0 0.0
      %661 = vmatprep.mubr.f32.mxu0 0.0
      %662 = vmatmul.mubr.f32.gmra.mrb[0].mxu0 %v487
      %v663 = vpop.f32.mrb[0].mxu0
      %v664 = vadd.f32 %v481, %v663
      %v665 = vpop.f32.mrb[0].mxu0
      %666 = vmatprep.mubr.f32.mxu0 0.0
      %667 = vmatmul.mubr.f32.gmra.mrb[0].mxu0 %v490
      %v668 = vpop.f32.mrb[0].mxu0
      %v669 = vadd.f32 %v481, %v668
      %v670 = vpop.f32.mrb[0].mxu0
      %671 = vmatprep.mubr.f32.mxu0 0.0
      %672 = vmatmul.mubr.f32.gmra.mrb[0].mxu0 %v493
      %v673 = vpop.f32.mrb[0].mxu0
      %v674 = vadd.f32 %v481, %v673
      %v675 = vpop.f32.mrb[0].mxu0
      %676 = vmatprep.mubr.f32.mxu0 0.0
      %677 = vmatmul.mubr.f32.gmra.mrb[0].mxu0 %v496
      %v678 = vpop.f32.mrb[0].mxu0
      %v679 = vadd.f32 %v481, %v678
      %v680 = vpop.f32.mrb[0].mxu0
      %681 = vdwg.mxu0
      %682 = vst [vmem:[#allocation4] sm:$0xff] %v575
      %683 = vst [vmem:[#allocation4 + $0x8] sm:$0xff] %v577
      %684 = vst [vmem:[#allocation4 + $0x10] sm:$0xff] %v664
      %685 = vst [vmem:[#allocation4 + $0x18] sm:$0xff] %v581
      %686 = vst [vmem:[#allocation4 + $0x20] sm:$0xff] %v583
      %687 = vst [vmem:[#allocation4 + $0x28] sm:$0xff] %v669
      %688 = vst [vmem:[#allocation4 + $0x30] sm:$0xff] %v587
      %689 = vst [vmem:[#allocation4 + $0x38] sm:$0xff] %v589
      %690 = vst [vmem:[#allocation4 + $0x40] sm:$0xff] %v674
      %691 = vst [vmem:[#allocation4 + $0x48] sm:$0xff] %v593
      %692 = vst [vmem:[#allocation4 + $0x50] sm:$0xff] %v595
      %693 = vst [vmem:[#allocation4 + $0x58] sm:$0xff] %v679
      %v694 = vld [vmem:[%s4] sm:$0x1]
      %v696 = vlaneseq
      %v697 = vshrl.u32 %v696, 7
      %v698 = vsub.s32 0, %v697
      %v699 = vrot.slane %v694, %v698
      %v701 = vld [vmem:[%s6] sm:$0x3]
      %v703 = vlaneseq
      %v704 = vshrl.u32 %v703, 7
      %v705 = vsub.s32 0, %v704
      %v706 = vrot.slane %v701, %v705
      %v707 = vlaneseq
      %v708 = vshrl.u32 %v707, 7
      %v709 = vsub.s32 1, %v708
      %v710 = vrot.slane %v701, %v709
      %v713 = vld [vmem:[%s7] sm:$0x1]
      %v715 = vlaneseq
      %v716 = vshrl.u32 %v715, 7
      %v717 = vsub.s32 0, %v716
      %v718 = vrot.slane %v713, %v717
      %v720 = vld [vmem:[%s8] sm:$0x1]
      %v722 = vlaneseq
      %v723 = vshrl.u32 %v722, 7
      %v724 = vsub.s32 0, %v723
      %v725 = vrot.slane %v720, %v724
      %v727 = vld [vmem:[%s2] sm:$0xff]
      %v728 = vld [vmem:[%s2 + $0x8] sm:$0xff]
      %v729 = vld [vmem:[%s2 + $0x10] sm:$0xff]
      %v730 = vld [vmem:[%s2 + $0x18] sm:$0xff]
      %v731 = vld [vmem:[%s2 + $0x20] sm:$0xff]
      %v732 = vld [vmem:[%s2 + $0x28] sm:$0xff]
      %v733 = vld [vmem:[%s2 + $0x30] sm:$0xff]
      %v734 = vld [vmem:[%s2 + $0x38] sm:$0xff]
      %v735 = vld [vmem:[%s2 + $0x40] sm:$0xff]
      %v736 = vld [vmem:[%s2 + $0x48] sm:$0xff]
      %v737 = vld [vmem:[%s2 + $0x50] sm:$0xff]
      %v738 = vld [vmem:[%s2 + $0x58] sm:$0xff]
      %v739 = vld [vmem:[%s2 + $0x60] sm:$0xff]
      %v740 = vld [vmem:[%s2 + $0x68] sm:$0xff]
      %v741 = vld [vmem:[%s2 + $0x70] sm:$0xff]
      %v742 = vld [vmem:[%s2 + $0x78] sm:$0xff]
      %v743 = vld [vmem:[%s2 + $0x80] sm:$0xff]
      %v744 = vld [vmem:[%s2 + $0x88] sm:$0xff]
      %v745 = vld [vmem:[%s2 + $0x90] sm:$0xff]
      %v746 = vld [vmem:[%s2 + $0x98] sm:$0xff]
      %v747 = vld [vmem:[%s2 + $0xa0] sm:$0xff]
      %v748 = vld [vmem:[%s2 + $0xa8] sm:$0xff]
      %v749 = vld [vmem:[%s2 + $0xb0] sm:$0xff]
      %v750 = vld [vmem:[%s2 + $0xb8] sm:$0xff]
      %v751 = vld [vmem:[%s2 + $0xc0] sm:$0xff]
      %v752 = vld [vmem:[%s2 + $0xc8] sm:$0xff]
      %v753 = vld [vmem:[%s2 + $0xd0] sm:$0xff]
      %v754 = vld [vmem:[%s2 + $0xd8] sm:$0xff]
      %v755 = vld [vmem:[%s2 + $0xe0] sm:$0xff]
      %v756 = vld [vmem:[%s2 + $0xe8] sm:$0xff]
      %v757 = vld [vmem:[%s2 + $0xf0] sm:$0xff]
      %v758 = vld [vmem:[%s2 + $0xf8] sm:$0xff]
      %v759 = vld [vmem:[%s2 + $0x100] sm:$0xff]
      %v760 = vld [vmem:[%s2 + $0x108] sm:$0xff]
      %v761 = vld [vmem:[%s2 + $0x110] sm:$0xff]
      %v762 = vld [vmem:[%s2 + $0x118] sm:$0xff]
      %v763 = vld [vmem:[%s2 + $0x120] sm:$0xff]
      %v764 = vld [vmem:[%s2 + $0x128] sm:$0xff]
      %v765 = vld [vmem:[%s2 + $0x130] sm:$0xff]
      %v766 = vld [vmem:[%s2 + $0x138] sm:$0xff]
      %v767 = vld [vmem:[%s2 + $0x140] sm:$0xff]
      %v768 = vld [vmem:[%s2 + $0x148] sm:$0xff]
      %v769 = vld [vmem:[%s2 + $0x150] sm:$0xff]
      %v770 = vld [vmem:[%s2 + $0x158] sm:$0xff]
      %v771 = vld [vmem:[%s2 + $0x160] sm:$0xff]
      %v772 = vld [vmem:[%s2 + $0x168] sm:$0xff]
      %v773 = vld [vmem:[%s2 + $0x170] sm:$0xff]
      %v774 = vld [vmem:[%s2 + $0x178] sm:$0xff]
      %v775 = vld [vmem:[%s5] sm:$0xff]
      %v776 = vld [vmem:[%s5 + $0x8] sm:$0xff]
      %v777 = vld [vmem:[%s5 + $0x10] sm:$0xff]
      %v778 = vld [vmem:[%s5 + $0x18] sm:$0xff]
      %v779 = vld [vmem:[%s5 + $0x20] sm:$0xff]
      %v780 = vld [vmem:[%s5 + $0x28] sm:$0xff]
      %v781 = vld [vmem:[%s5 + $0x30] sm:$0xff]
      %v782 = vld [vmem:[%s5 + $0x38] sm:$0xff]
      %v783 = vld [vmem:[%s5 + $0x40] sm:$0xff]
      %v784 = vld [vmem:[%s5 + $0x48] sm:$0xff]
      %v785 = vld [vmem:[%s5 + $0x50] sm:$0xff]
      %v786 = vld [vmem:[%s5 + $0x58] sm:$0xff]
      %v787 = vld [vmem:[%s5 + $0x60] sm:$0xff]
      %v788 = vld [vmem:[%s5 + $0x68] sm:$0xff]
      %v789 = vld [vmem:[%s5 + $0x70] sm:$0xff]
      %v790 = vld [vmem:[%s5 + $0x78] sm:$0xff]
      %v791 = vld [vmem:[%s5 + $0x80] sm:$0xff]
      %v792 = vld [vmem:[%s5 + $0x88] sm:$0xff]
      %v793 = vld [vmem:[%s5 + $0x90] sm:$0xff]
      %v794 = vld [vmem:[%s5 + $0x98] sm:$0xff]
      %v795 = vld [vmem:[%s5 + $0xa0] sm:$0xff]
      %v796 = vld [vmem:[%s5 + $0xa8] sm:$0xff]
      %v797 = vld [vmem:[%s5 + $0xb0] sm:$0xff]
      %v798 = vld [vmem:[%s5 + $0xb8] sm:$0xff]
      %v799 = vld [vmem:[%s5 + $0xc0] sm:$0xff]
      %v800 = vld [vmem:[%s5 + $0xc8] sm:$0xff]
      %v801 = vld [vmem:[%s5 + $0xd0] sm:$0xff]
      %v802 = vld [vmem:[%s5 + $0xd8] sm:$0xff]
      %v803 = vld [vmem:[%s5 + $0xe0] sm:$0xff]
      %v804 = vld [vmem:[%s5 + $0xe8] sm:$0xff]
      %v805 = vld [vmem:[%s5 + $0xf0] sm:$0xff]
      %v806 = vld [vmem:[%s5 + $0xf8] sm:$0xff]
      %v807 = vld [vmem:[%s5 + $0x100] sm:$0xff]
      %v808 = vld [vmem:[%s5 + $0x108] sm:$0xff]
      %v809 = vld [vmem:[%s5 + $0x110] sm:$0xff]
      %v810 = vld [vmem:[%s5 + $0x118] sm:$0xff]
      %v811 = vld [vmem:[%s5 + $0x120] sm:$0xff]
      %v812 = vld [vmem:[%s5 + $0x128] sm:$0xff]
      %v813 = vld [vmem:[%s5 + $0x130] sm:$0xff]
      %v814 = vld [vmem:[%s5 + $0x138] sm:$0xff]
      %v815 = vld [vmem:[%s5 + $0x140] sm:$0xff]
      %v816 = vld [vmem:[%s5 + $0x148] sm:$0xff]
      %v817 = vld [vmem:[%s5 + $0x150] sm:$0xff]
      %v818 = vld [vmem:[%s5 + $0x158] sm:$0xff]
      %v819 = vld [vmem:[%s5 + $0x160] sm:$0xff]
      %v820 = vld [vmem:[%s5 + $0x168] sm:$0xff]
      %v821 = vld [vmem:[%s5 + $0x170] sm:$0xff]
      %v822 = vld [vmem:[%s5 + $0x178] sm:$0xff]
      %v823 = vld [vmem:[%s5 + $0x180] sm:$0xff]
      %v824 = vld [vmem:[%s5 + $0x188] sm:$0xff]
      %v825 = vld [vmem:[%s5 + $0x190] sm:$0xff]
      %v826 = vld [vmem:[%s5 + $0x198] sm:$0xff]
      %v827 = vld [vmem:[%s5 + $0x1a0] sm:$0xff]
      %v828 = vld [vmem:[%s5 + $0x1a8] sm:$0xff]
      %v829 = vld [vmem:[%s5 + $0x1b0] sm:$0xff]
      %v830 = vld [vmem:[%s5 + $0x1b8] sm:$0xff]
      %v831 = vld [vmem:[%s5 + $0x1c0] sm:$0xff]
      %v832 = vld [vmem:[%s5 + $0x1c8] sm:$0xff]
      %v833 = vld [vmem:[%s5 + $0x1d0] sm:$0xff]
      %v834 = vld [vmem:[%s5 + $0x1d8] sm:$0xff]
      %v835 = vld [vmem:[%s5 + $0x1e0] sm:$0xff]
      %v836 = vld [vmem:[%s5 + $0x1e8] sm:$0xff]
      %v837 = vld [vmem:[%s5 + $0x1f0] sm:$0xff]
      %v838 = vld [vmem:[%s5 + $0x1f8] sm:$0xff]
      %v839 = vld [vmem:[%s5 + $0x200] sm:$0xff]
      %v840 = vld [vmem:[%s5 + $0x208] sm:$0xff]
      %v841 = vld [vmem:[%s5 + $0x210] sm:$0xff]
      %v842 = vld [vmem:[%s5 + $0x218] sm:$0xff]
      %v843 = vld [vmem:[%s5 + $0x220] sm:$0xff]
      %v844 = vld [vmem:[%s5 + $0x228] sm:$0xff]
      %v845 = vld [vmem:[%s5 + $0x230] sm:$0xff]
      %v846 = vld [vmem:[%s5 + $0x238] sm:$0xff]
      %v847 = vld [vmem:[%s5 + $0x240] sm:$0xff]
      %v848 = vld [vmem:[%s5 + $0x248] sm:$0xff]
      %v849 = vld [vmem:[%s5 + $0x250] sm:$0xff]
      %v850 = vld [vmem:[%s5 + $0x258] sm:$0xff]
      %v851 = vld [vmem:[%s5 + $0x260] sm:$0xff]
      %v852 = vld [vmem:[%s5 + $0x268] sm:$0xff]
      %v853 = vld [vmem:[%s5 + $0x270] sm:$0xff]
      %v854 = vld [vmem:[%s5 + $0x278] sm:$0xff]
      %v855 = vld [vmem:[%s5 + $0x280] sm:$0xff]
      %v856 = vld [vmem:[%s5 + $0x288] sm:$0xff]
      %v857 = vld [vmem:[%s5 + $0x290] sm:$0xff]
      %v858 = vld [vmem:[%s5 + $0x298] sm:$0xff]
      %v859 = vld [vmem:[%s5 + $0x2a0] sm:$0xff]
      %v860 = vld [vmem:[%s5 + $0x2a8] sm:$0xff]
      %v861 = vld [vmem:[%s5 + $0x2b0] sm:$0xff]
      %v862 = vld [vmem:[%s5 + $0x2b8] sm:$0xff]
      %v863 = vld [vmem:[%s5 + $0x2c0] sm:$0xff]
      %v864 = vld [vmem:[%s5 + $0x2c8] sm:$0xff]
      %v865 = vld [vmem:[%s5 + $0x2d0] sm:$0xff]
      %v866 = vld [vmem:[%s5 + $0x2d8] sm:$0xff]
      %v867 = vld [vmem:[%s5 + $0x2e0] sm:$0xff]
      %v868 = vld [vmem:[%s5 + $0x2e8] sm:$0xff]
      %v869 = vld [vmem:[%s5 + $0x2f0] sm:$0xff]
      %v870 = vld [vmem:[%s5 + $0x2f8] sm:$0xff]
      %v871 = vld [vmem:[%s5 + $0x300] sm:$0xff]
      %v872 = vld [vmem:[%s5 + $0x308] sm:$0xff]
      %v873 = vld [vmem:[%s5 + $0x310] sm:$0xff]
      %v874 = vld [vmem:[%s5 + $0x318] sm:$0xff]
      %v875 = vld [vmem:[%s5 + $0x320] sm:$0xff]
      %v876 = vld [vmem:[%s5 + $0x328] sm:$0xff]
      %v877 = vld [vmem:[%s5 + $0x330] sm:$0xff]
      %v878 = vld [vmem:[%s5 + $0x338] sm:$0xff]
      %v879 = vld [vmem:[%s5 + $0x340] sm:$0xff]
      %v880 = vld [vmem:[%s5 + $0x348] sm:$0xff]
      %v881 = vld [vmem:[%s5 + $0x350] sm:$0xff]
      %v882 = vld [vmem:[%s5 + $0x358] sm:$0xff]
      %v883 = vld [vmem:[%s5 + $0x360] sm:$0xff]
      %v884 = vld [vmem:[%s5 + $0x368] sm:$0xff]
      %v885 = vld [vmem:[%s5 + $0x370] sm:$0xff]
      %v886 = vld [vmem:[%s5 + $0x378] sm:$0xff]
      %v887 = vld [vmem:[%s5 + $0x380] sm:$0xff]
      %v888 = vld [vmem:[%s5 + $0x388] sm:$0xff]
      %v889 = vld [vmem:[%s5 + $0x390] sm:$0xff]
      %v890 = vld [vmem:[%s5 + $0x398] sm:$0xff]
      %v891 = vld [vmem:[%s5 + $0x3a0] sm:$0xff]
      %v892 = vld [vmem:[%s5 + $0x3a8] sm:$0xff]
      %v893 = vld [vmem:[%s5 + $0x3b0] sm:$0xff]
      %v894 = vld [vmem:[%s5 + $0x3b8] sm:$0xff]
      %v895 = vld [vmem:[%s5 + $0x3c0] sm:$0xff]
      %v896 = vld [vmem:[%s5 + $0x3c8] sm:$0xff]
      %v897 = vld [vmem:[%s5 + $0x3d0] sm:$0xff]
      %v898 = vld [vmem:[%s5 + $0x3d8] sm:$0xff]
      %v899 = vld [vmem:[%s5 + $0x3e0] sm:$0xff]
      %v900 = vld [vmem:[%s5 + $0x3e8] sm:$0xff]
      %v901 = vld [vmem:[%s5 + $0x3f0] sm:$0xff]
      %v902 = vld [vmem:[%s5 + $0x3f8] sm:$0xff]
      %v903 = vld [vmem:[#allocation2] sm:$0xff]
      %v904 = vld [vmem:[#allocation3] sm:$0xff]
      %s905 = smul.u32 0, 3
      %s906 = smul.addr %s905, 8
      %s907 = scalar_lea.vmem [#allocation4], %s906
      %v908 = vld [vmem:[%s907] sm:$0xff]
      %v909 = vld [vmem:[%s907 + $0x8] sm:$0xff]
      %v910 = vld [vmem:[%s907 + $0x10] sm:$0xff]
      %911 = vmatprep.subr.mxu0 %v728
      %912 = vmatpush1.msra.mxu0 %v727
      %913 = vmatprep.subr.mxu0 %v731
      %914 = vmatpush1.msra.mxu0 %v730
      %915 = vmatprep.subr.mxu0 %v734
      %916 = vmatpush1.msra.mxu0 %v733
      %917 = vmatprep.subr.mxu0 %v737
      %918 = vmatpush1.msra.mxu0 %v736
      %919 = vmatprep.subr.mxu0 %v740
      %920 = vmatpush1.msra.mxu0 %v739
      %921 = vmatprep.subr.mxu0 %v743
      %922 = vmatpush1.msra.mxu0 %v742
      %923 = vmatprep.subr.mxu0 %v746
      %924 = vmatpush1.msra.mxu0 %v745
      %925 = vmatprep.subr.mxu0 %v749
      %926 = vmatpush1.msra.mxu0 %v748
      %927 = vmatprep.subr.mxu0 %v752
      %928 = vmatpush1.msra.mxu0 %v751
      %929 = vmatprep.subr.mxu0 %v755
      %930 = vmatpush1.msra.mxu0 %v754
      %931 = vmatprep.subr.mxu0 %v758
      %932 = vmatpush1.msra.mxu0 %v757
      %933 = vmatprep.subr.mxu0 %v761
      %934 = vmatpush1.msra.mxu0 %v760
      %935 = vmatprep.subr.mxu0 %v764
      %936 = vmatpush1.msra.mxu0 %v763
      %937 = vmatprep.subr.mxu0 %v767
      %938 = vmatpush1.msra.mxu0 %v766
      %939 = vmatprep.subr.mxu0 %v770
      %940 = vmatpush1.msra.mxu0 %v769
      %941 = vmatprep.subr.mxu0 %v773
      %942 = vmatpush1.msra.mxu0 %v772
      %943 = vmatprep.subr.mxu0 0.0
      %944 = vmatpush1.msra.mxu0 0.0
      %945 = vmatprep.subr.mxu0 0.0
      %946 = vmatpush1.msra.mxu0 0.0
      %947 = vmatprep.subr.mxu0 0.0
      %948 = vmatpush1.msra.mxu0 0.0
      %949 = vmatprep.subr.mxu0 0.0
      %950 = vmatpush1.msra.mxu0 0.0
      %951 = vmatprep.subr.mxu0 0.0
      %952 = vmatpush1.msra.mxu0 0.0
      %953 = vmatprep.subr.mxu0 0.0
      %954 = vmatpush1.msra.mxu0 0.0
      %955 = vmatprep.subr.mxu0 0.0
      %956 = vmatpush1.msra.mxu0 0.0
      %957 = vmatprep.subr.mxu0 0.0
      %958 = vmatpush1.msra.mxu0 0.0
      %959 = vmatprep.subr.mxu0 0.0
      %960 = vmatpush1.msra.mxu0 0.0
      %961 = vmatprep.subr.mxu0 0.0
      %962 = vmatpush1.msra.mxu0 0.0
      %963 = vmatprep.subr.mxu0 0.0
      %964 = vmatpush1.msra.mxu0 0.0
      %965 = vmatprep.subr.mxu0 0.0
      %966 = vmatpush1.msra.mxu0 0.0
      %967 = vmatprep.subr.mxu0 0.0
      %968 = vmatpush1.msra.mxu0 0.0
      %969 = vmatprep.subr.mxu0 0.0
      %970 = vmatpush1.msra.mxu0 0.0
      %971 = vmatprep.subr.mxu0 0.0
      %972 = vmatpush1.msra.mxu0 0.0
      %973 = vmatprep.subr.mxu0 0.0
      %974 = vmatpush1.msra.mxu0 0.0
      %975 = vmatprep.mubr.f32.mxu0 0.0
      %976 = vmatmul.mubr.f32.gmra.mrb[0].mxu0 %v903
      %v977 = vpop.f32.mrb[0].mxu0
      %v978 = vadd.f32 0.0, %v977
      %v979 = vpop.f32.mrb[0].mxu0
      %v980 = vadd.f32 0.0, %v979
      %981 = vdwg.mxu0
      %982 = vmatprep.subr.mxu0 0.0
      %983 = vmatpush1.msra.mxu0 %v729
      %984 = vmatprep.subr.mxu0 0.0
      %985 = vmatpush1.msra.mxu0 %v732
      %986 = vmatprep.subr.mxu0 0.0
      %987 = vmatpush1.msra.mxu0 %v735
      %988 = vmatprep.subr.mxu0 0.0
      %989 = vmatpush1.msra.mxu0 %v738
      %990 = vmatprep.subr.mxu0 0.0
      %991 = vmatpush1.msra.mxu0 %v741
      %992 = vmatprep.subr.mxu0 0.0
      %993 = vmatpush1.msra.mxu0 %v744
      %994 = vmatprep.subr.mxu0 0.0
      %995 = vmatpush1.msra.mxu0 %v747
      %996 = vmatprep.subr.mxu0 0.0
      %997 = vmatpush1.msra.mxu0 %v750
      %998 = vmatprep.subr.mxu0 0.0
      %999 = vmatpush1.msra.mxu0 %v753
      %1000 = vmatprep.subr.mxu0 0.0
      %1001 = vmatpush1.msra.mxu0 %v756
      %1002 = vmatprep.subr.mxu0 0.0
      %1003 = vmatpush1.msra.mxu0 %v759
      %1004 = vmatprep.subr.mxu0 0.0
      %1005 = vmatpush1.msra.mxu0 %v762
      %1006 = vmatprep.subr.mxu0 0.0
      %1007 = vmatpush1.msra.mxu0 %v765
      %1008 = vmatprep.subr.mxu0 0.0
      %1009 = vmatpush1.msra.mxu0 %v768
      %1010 = vmatprep.subr.mxu0 0.0
      %1011 = vmatpush1.msra.mxu0 %v771
      %1012 = vmatprep.subr.mxu0 0.0
      %1013 = vmatpush1.msra.mxu0 %v774
      %1014 = vmatprep.subr.mxu0 0.0
      %1015 = vmatpush1.msra.mxu0 0.0
      %1016 = vmatprep.subr.mxu0 0.0
      %1017 = vmatpush1.msra.mxu0 0.0
      %1018 = vmatprep.subr.mxu0 0.0
      %1019 = vmatpush1.msra.mxu0 0.0
      %1020 = vmatprep.subr.mxu0 0.0
      %1021 = vmatpush1.msra.mxu0 0.0
      %1022 = vmatprep.subr.mxu0 0.0
      %1023 = vmatpush1.msra.mxu0 0.0
      %1024 = vmatprep.subr.mxu0 0.0
      %1025 = vmatpush1.msra.mxu0 0.0
      %1026 = vmatprep.subr.mxu0 0.0
      %1027 = vmatpush1.msra.mxu0 0.0
      %1028 = vmatprep.subr.mxu0 0.0
      %1029 = vmatpush1.msra.mxu0 0.0
      %1030 = vmatprep.subr.mxu0 0.0
      %1031 = vmatpush1.msra.mxu0 0.0
      %1032 = vmatprep.subr.mxu0 0.0
      %1033 = vmatpush1.msra.mxu0 0.0
      %1034 = vmatprep.subr.mxu0 0.0
      %1035 = vmatpush1.msra.mxu0 0.0
      %1036 = vmatprep.subr.mxu0 0.0
      %1037 = vmatpush1.msra.mxu0 0.0
      %1038 = vmatprep.subr.mxu0 0.0
      %1039 = vmatpush1.msra.mxu0 0.0
      %1040 = vmatprep.subr.mxu0 0.0
      %1041 = vmatpush1.msra.mxu0 0.0
      %1042 = vmatprep.subr.mxu0 0.0
      %1043 = vmatpush1.msra.mxu0 0.0
      %1044 = vmatprep.subr.mxu0 0.0
      %1045 = vmatpush1.msra.mxu0 0.0
      %1046 = vmatprep.mubr.f32.mxu0 0.0
      %1047 = vmatmul.mubr.f32.gmra.mrb[0].mxu0 %v903
      %v1048 = vpop.f32.mrb[0].mxu0
      %v1049 = vadd.f32 0.0, %v1048
      %v1050 = vpop.f32.mrb[0].mxu0
      %1051 = vdwg.mxu0
      %v1052 = vadd.f32 %v908, %v978
      %v1053 = vadd.f32 %v909, %v980
      %v1054 = vxor.u32 %v1052, 2147483648
      %v1055 = vxor.u32 %v1053, 2147483648
      %v1056 = vmul.f32 %v1054, 1.442695
      %v1057 = vpow.pop %v1056
      %v1058 = vmul.f32 %v1055, 1.442695
      %v1059 = vpow.pop %v1058
      %v1060 = vadd.f32 %v1057, 1.0
      %v1061 = vadd.f32 %v1059, 1.0
      %v1062 = vrcp.pop %v1060
      %v1063 = vmul.f32 1.0, %v1062
      %v1064 = vrcp.pop %v1061
      %v1065 = vmul.f32 1.0, %v1064
      %v1066 = vadd.f32 %v1049, %v699
      %v1067 = vmul.f32 %v1063, %v1066
      %v1068 = vadd.f32 %v910, %v1067
      %v1069 = vtanh.pop %v1068
      %v1070 = vsub.f32 1.0, %v1065
      %v1071 = vmul.f32 %v1070, %v1069
      %v1072 = vmul.f32 %v1065, %v903
      %v1073 = vadd.f32 %v1071, %v1072
      %1074 = vmatprep.subr.mxu0 %v776
      %1075 = vmatpush1.msra.mxu0 %v775
      %1076 = vmatprep.subr.mxu0 %v780
      %1077 = vmatpush1.msra.mxu0 %v779
      %1078 = vmatprep.subr.mxu0 %v784
      %1079 = vmatpush1.msra.mxu0 %v783
      %1080 = vmatprep.subr.mxu0 %v788
      %1081 = vmatpush1.msra.mxu0 %v787
      %1082 = vmatprep.subr.mxu0 %v792
      %1083 = vmatpush1.msra.mxu0 %v791
      %1084 = vmatprep.subr.mxu0 %v796
      %1085 = vmatpush1.msra.mxu0 %v795
      %1086 = vmatprep.subr.mxu0 %v800
      %1087 = vmatpush1.msra.mxu0 %v799
      %1088 = vmatprep.subr.mxu0 %v804
      %1089 = vmatpush1.msra.mxu0 %v803
      %1090 = vmatprep.subr.mxu0 %v808
      %1091 = vmatpush1.msra.mxu0 %v807
      %1092 = vmatprep.subr.mxu0 %v812
      %1093 = vmatpush1.msra.mxu0 %v811
      %1094 = vmatprep.subr.mxu0 %v816
      %1095 = vmatpush1.msra.mxu0 %v815
      %1096 = vmatprep.subr.mxu0 %v820
      %1097 = vmatpush1.msra.mxu0 %v819
      %1098 = vmatprep.subr.mxu0 %v824
      %1099 = vmatpush1.msra.mxu0 %v823
      %1100 = vmatprep.subr.mxu0 %v828
      %1101 = vmatpush1.msra.mxu0 %v827
      %1102 = vmatprep.subr.mxu0 %v832
      %1103 = vmatpush1.msra.mxu0 %v831
      %1104 = vmatprep.subr.mxu0 %v836
      %1105 = vmatpush1.msra.mxu0 %v835
      %1106 = vmatprep.subr.mxu0 %v840
      %1107 = vmatpush1.msra.mxu0 %v839
      %1108 = vmatprep.subr.mxu0 %v844
      %1109 = vmatpush1.msra.mxu0 %v843
      %1110 = vmatprep.subr.mxu0 %v848
      %1111 = vmatpush1.msra.mxu0 %v847
      %1112 = vmatprep.subr.mxu0 %v852
      %1113 = vmatpush1.msra.mxu0 %v851
      %1114 = vmatprep.subr.mxu0 %v856
      %1115 = vmatpush1.msra.mxu0 %v855
      %1116 = vmatprep.subr.mxu0 %v860
      %1117 = vmatpush1.msra.mxu0 %v859
      %1118 = vmatprep.subr.mxu0 %v864
      %1119 = vmatpush1.msra.mxu0 %v863
      %1120 = vmatprep.subr.mxu0 %v868
      %1121 = vmatpush1.msra.mxu0 %v867
      %1122 = vmatprep.subr.mxu0 %v872
      %1123 = vmatpush1.msra.mxu0 %v871
      %1124 = vmatprep.subr.mxu0 %v876
      %1125 = vmatpush1.msra.mxu0 %v875
      %1126 = vmatprep.subr.mxu0 %v880
      %1127 = vmatpush1.msra.mxu0 %v879
      %1128 = vmatprep.subr.mxu0 %v884
      %1129 = vmatpush1.msra.mxu0 %v883
      %1130 = vmatprep.subr.mxu0 %v888
      %1131 = vmatpush1.msra.mxu0 %v887
      %1132 = vmatprep.subr.mxu0 %v892
      %1133 = vmatpush1.msra.mxu0 %v891
      %1134 = vmatprep.subr.mxu0 %v896
      %1135 = vmatpush1.msra.mxu0 %v895
      %1136 = vmatprep.subr.mxu0 %v900
      %1137 = vmatpush1.msra.mxu0 %v899
      %1138 = vmatprep.mubr.f32.mxu0 %v904
      %1139 = vmatmul.mubr.f32.gmra.mrb[0].mxu0 %v1073
      %v1140 = vpop.f32.mrb[0].mxu0
      %v1141 = vadd.f32 0.0, %v1140
      %v1142 = vpop.f32.mrb[0].mxu0
      %v1143 = vadd.f32 0.0, %v1142
      %1144 = vdwg.mxu0
      %1145 = vmatprep.subr.mxu0 %v778
      %1146 = vmatpush1.msra.mxu0 %v777
      %1147 = vmatprep.subr.mxu0 %v782
      %1148 = vmatpush1.msra.mxu0 %v781
      %1149 = vmatprep.subr.mxu0 %v786
      %1150 = vmatpush1.msra.mxu0 %v785
      %1151 = vmatprep.subr.mxu0 %v790
      %1152 = vmatpush1.msra.mxu0 %v789
      %1153 = vmatprep.subr.mxu0 %v794
      %1154 = vmatpush1.msra.mxu0 %v793
      %1155 = vmatprep.subr.mxu0 %v798
      %1156 = vmatpush1.msra.mxu0 %v797
      %1157 = vmatprep.subr.mxu0 %v802
      %1158 = vmatpush1.msra.mxu0 %v801
      %1159 = vmatprep.subr.mxu0 %v806
      %1160 = vmatpush1.msra.mxu0 %v805
      %1161 = vmatprep.subr.mxu0 %v810
      %1162 = vmatpush1.msra.mxu0 %v809
      %1163 = vmatprep.subr.mxu0 %v814
      %1164 = vmatpush1.msra.mxu0 %v813
      %1165 = vmatprep.subr.mxu0 %v818
      %1166 = vmatpush1.msra.mxu0 %v817
      %1167 = vmatprep.subr.mxu0 %v822
      %1168 = vmatpush1.msra.mxu0 %v821
      %1169 = vmatprep.subr.mxu0 %v826
      %1170 = vmatpush1.msra.mxu0 %v825
      %1171 = vmatprep.subr.mxu0 %v830
      %1172 = vmatpush1.msra.mxu0 %v829
      %1173 = vmatprep.subr.mxu0 %v834
      %1174 = vmatpush1.msra.mxu0 %v833
      %1175 = vmatprep.subr.mxu0 %v838
      %1176 = vmatpush1.msra.mxu0 %v837
      %1177 = vmatprep.subr.mxu0 %v842
      %1178 = vmatpush1.msra.mxu0 %v841
      %1179 = vmatprep.subr.mxu0 %v846
      %1180 = vmatpush1.msra.mxu0 %v845
      %1181 = vmatprep.subr.mxu0 %v850
      %1182 = vmatpush1.msra.mxu0 %v849
      %1183 = vmatprep.subr.mxu0 %v854
      %1184 = vmatpush1.msra.mxu0 %v853
      %1185 = vmatprep.subr.mxu0 %v858
      %1186 = vmatpush1.msra.mxu0 %v857
      %1187 = vmatprep.subr.mxu0 %v862
      %1188 = vmatpush1.msra.mxu0 %v861
      %1189 = vmatprep.subr.mxu0 %v866
      %1190 = vmatpush1.msra.mxu0 %v865
      %1191 = vmatprep.subr.mxu0 %v870
      %1192 = vmatpush1.msra.mxu0 %v869
      %1193 = vmatprep.subr.mxu0 %v874
      %1194 = vmatpush1.msra.mxu0 %v873
      %1195 = vmatprep.subr.mxu0 %v878
      %1196 = vmatpush1.msra.mxu0 %v877
      %1197 = vmatprep.subr.mxu0 %v882
      %1198 = vmatpush1.msra.mxu0 %v881
      %1199 = vmatprep.subr.mxu0 %v886
      %1200 = vmatpush1.msra.mxu0 %v885
      %1201 = vmatprep.subr.mxu0 %v890
      %1202 = vmatpush1.msra.mxu0 %v889
      %1203 = vmatprep.subr.mxu0 %v894
      %1204 = vmatpush1.msra.mxu0 %v893
      %1205 = vmatprep.subr.mxu0 %v898
      %1206 = vmatpush1.msra.mxu0 %v897
      %1207 = vmatprep.subr.mxu0 %v902
      %1208 = vmatpush1.msra.mxu0 %v901
      %1209 = vmatprep.mubr.f32.mxu0 %v904
      %1210 = vmatmul.mubr.f32.gmra.mrb[0].mxu0 %v1073
      %v1211 = vpop.f32.mrb[0].mxu0
      %v1212 = vadd.f32 0.0, %v1211
      %v1213 = vpop.f32.mrb[0].mxu0
      %v1214 = vadd.f32 0.0, %v1213
      %1215 = vdwg.mxu0
      %v1216 = vadd.f32 %v1141, %v706
      %v1217 = vadd.f32 %v1143, %v710
      %v1218 = vxor.u32 %v1216, 2147483648
      %v1219 = vxor.u32 %v1217, 2147483648
      %v1220 = vmul.f32 %v1218, 1.442695
      %v1221 = vpow.pop %v1220
      %v1222 = vmul.f32 %v1219, 1.442695
      %v1223 = vpow.pop %v1222
      %v1224 = vadd.f32 %v1221, 1.0
      %v1225 = vadd.f32 %v1223, 1.0
      %v1226 = vrcp.pop %v1224
      %v1227 = vmul.f32 1.0, %v1226
      %v1228 = vrcp.pop %v1225
      %v1229 = vmul.f32 1.0, %v1228
      %v1230 = vadd.f32 %v1212, %v718
      %v1231 = vadd.f32 %v1214, %v725
      %v1232 = vmul.f32 %v1227, %v1231
      %v1233 = vadd.f32 %v1230, %v1232
      %v1234 = vtanh.pop %v1233
      %v1235 = vsub.f32 1.0, %v1229
      %v1236 = vmul.f32 %v1235, %v1234
      %v1237 = vmul.f32 %v1229, %v904
      %v1238 = vadd.f32 %v1236, %v1237
      %1239 = vst [vmem:[#allocation5] sm:$0xff] %v1238
      %s1240 = smul.u32 1, 3
      %s1241 = smul.addr %s1240, 8
      %s1242 = scalar_lea.vmem [#allocation4], %s1241
      %v1243 = vld [vmem:[%s1242] sm:$0xff]
      %v1244 = vld [vmem:[%s1242 + $0x8] sm:$0xff]
      %v1245 = vld [vmem:[%s1242 + $0x10] sm:$0xff]
      %1246 = vmatprep.subr.mxu0 %v728
      %1247 = vmatpush1.msra.mxu0 %v727
      %1248 = vmatprep.subr.mxu0 %v731
      %1249 = vmatpush1.msra.mxu0 %v730
      %1250 = vmatprep.subr.mxu0 %v734
      %1251 = vmatpush1.msra.mxu0 %v733
      %1252 = vmatprep.subr.mxu0 %v737
      %1253 = vmatpush1.msra.mxu0 %v736
      %1254 = vmatprep.subr.mxu0 %v740
      %1255 = vmatpush1.msra.mxu0 %v739
      %1256 = vmatprep.subr.mxu0 %v743
      %1257 = vmatpush1.msra.mxu0 %v742
      %1258 = vmatprep.subr.mxu0 %v746
      %1259 = vmatpush1.msra.mxu0 %v745
      %1260 = vmatprep.subr.mxu0 %v749
      %1261 = vmatpush1.msra.mxu0 %v748
      %1262 = vmatprep.subr.mxu0 %v752
      %1263 = vmatpush1.msra.mxu0 %v751
      %1264 = vmatprep.subr.mxu0 %v755
      %1265 = vmatpush1.msra.mxu0 %v754
      %1266 = vmatprep.subr.mxu0 %v758
      %1267 = vmatpush1.msra.mxu0 %v757
      %1268 = vmatprep.subr.mxu0 %v761
      %1269 = vmatpush1.msra.mxu0 %v760
      %1270 = vmatprep.subr.mxu0 %v764
      %1271 = vmatpush1.msra.mxu0 %v763
      %1272 = vmatprep.subr.mxu0 %v767
      %1273 = vmatpush1.msra.mxu0 %v766
      %1274 = vmatprep.subr.mxu0 %v770
      %1275 = vmatpush1.msra.mxu0 %v769
      %1276 = vmatprep.subr.mxu0 %v773
      %1277 = vmatpush1.msra.mxu0 %v772
      %1278 = vmatprep.subr.mxu0 0.0
      %1279 = vmatpush1.msra.mxu0 0.0
      %1280 = vmatprep.subr.mxu0 0.0
      %1281 = vmatpush1.msra.mxu0 0.0
      %1282 = vmatprep.subr.mxu0 0.0
      %1283 = vmatpush1.msra.mxu0 0.0
      %1284 = vmatprep.subr.mxu0 0.0
      %1285 = vmatpush1.msra.mxu0 0.0
      %1286 = vmatprep.subr.mxu0 0.0
      %1287 = vmatpush1.msra.mxu0 0.0
      %1288 = vmatprep.subr.mxu0 0.0
      %1289 = vmatpush1.msra.mxu0 0.0
      %1290 = vmatprep.subr.mxu0 0.0
      %1291 = vmatpush1.msra.mxu0 0.0
      %1292 = vmatprep.subr.mxu0 0.0
      %1293 = vmatpush1.msra.mxu0 0.0
      %1294 = vmatprep.subr.mxu0 0.0
      %1295 = vmatpush1.msra.mxu0 0.0
      %1296 = vmatprep.subr.mxu0 0.0
      %1297 = vmatpush1.msra.mxu0 0.0
      %1298 = vmatprep.subr.mxu0 0.0
      %1299 = vmatpush1.msra.mxu0 0.0
      %1300 = vmatprep.subr.mxu0 0.0
      %1301 = vmatpush1.msra.mxu0 0.0
      %1302 = vmatprep.subr.mxu0 0.0
      %1303 = vmatpush1.msra.mxu0 0.0
      %1304 = vmatprep.subr.mxu0 0.0
      %1305 = vmatpush1.msra.mxu0 0.0
      %1306 = vmatprep.subr.mxu0 0.0
      %1307 = vmatpush1.msra.mxu0 0.0
      %1308 = vmatprep.subr.mxu0 0.0
      %1309 = vmatpush1.msra.mxu0 0.0
      %1310 = vmatprep.mubr.f32.mxu0 0.0
      %1311 = vmatmul.mubr.f32.gmra.mrb[0].mxu0 %v1073
      %v1312 = vpop.f32.mrb[0].mxu0
      %v1313 = vadd.f32 0.0, %v1312
      %v1314 = vpop.f32.mrb[0].mxu0
      %v1315 = vadd.f32 0.0, %v1314
      %1316 = vdwg.mxu0
      %1317 = vmatprep.subr.mxu0 0.0
      %1318 = vmatpush1.msra.mxu0 %v729
      %1319 = vmatprep.subr.mxu0 0.0
      %1320 = vmatpush1.msra.mxu0 %v732
      %1321 = vmatprep.subr.mxu0 0.0
      %1322 = vmatpush1.msra.mxu0 %v735
      %1323 = vmatprep.subr.mxu0 0.0
      %1324 = vmatpush1.msra.mxu0 %v738
      %1325 = vmatprep.subr.mxu0 0.0
      %1326 = vmatpush1.msra.mxu0 %v741
      %1327 = vmatprep.subr.mxu0 0.0
      %1328 = vmatpush1.msra.mxu0 %v744
      %1329 = vmatprep.subr.mxu0 0.0
      %1330 = vmatpush1.msra.mxu0 %v747
      %1331 = vmatprep.subr.mxu0 0.0
      %1332 = vmatpush1.msra.mxu0 %v750
      %1333 = vmatprep.subr.mxu0 0.0
      %1334 = vmatpush1.msra.mxu0 %v753
      %1335 = vmatprep.subr.mxu0 0.0
      %1336 = vmatpush1.msra.mxu0 %v756
      %1337 = vmatprep.subr.mxu0 0.0
      %1338 = vmatpush1.msra.mxu0 %v759
      %1339 = vmatprep.subr.mxu0 0.0
      %1340 = vmatpush1.msra.mxu0 %v762
      %1341 = vmatprep.subr.mxu0 0.0
      %1342 = vmatpush1.msra.mxu0 %v765
      %1343 = vmatprep.subr.mxu0 0.0
      %1344 = vmatpush1.msra.mxu0 %v768
      %1345 = vmatprep.subr.mxu0 0.0
      %1346 = vmatpush1.msra.mxu0 %v771
      %1347 = vmatprep.subr.mxu0 0.0
      %1348 = vmatpush1.msra.mxu0 %v774
      %1349 = vmatprep.subr.mxu0 0.0
      %1350 = vmatpush1.msra.mxu0 0.0
      %1351 = vmatprep.subr.mxu0 0.0
      %1352 = vmatpush1.msra.mxu0 0.0
      %1353 = vmatprep.subr.mxu0 0.0
      %1354 = vmatpush1.msra.mxu0 0.0
      %1355 = vmatprep.subr.mxu0 0.0
      %1356 = vmatpush1.msra.mxu0 0.0
      %1357 = vmatprep.subr.mxu0 0.0
      %1358 = vmatpush1.msra.mxu0 0.0
      %1359 = vmatprep.subr.mxu0 0.0
      %1360 = vmatpush1.msra.mxu0 0.0
      %1361 = vmatprep.subr.mxu0 0.0
      %1362 = vmatpush1.msra.mxu0 0.0
      %1363 = vmatprep.subr.mxu0 0.0
      %1364 = vmatpush1.msra.mxu0 0.0
      %1365 = vmatprep.subr.mxu0 0.0
      %1366 = vmatpush1.msra.mxu0 0.0
      %1367 = vmatprep.subr.mxu0 0.0
      %1368 = vmatpush1.msra.mxu0 0.0
      %1369 = vmatprep.subr.mxu0 0.0
      %1370 = vmatpush1.msra.mxu0 0.0
      %1371 = vmatprep.subr.mxu0 0.0
      %1372 = vmatpush1.msra.mxu0 0.0
      %1373 = vmatprep.subr.mxu0 0.0
      %1374 = vmatpush1.msra.mxu0 0.0
      %1375 = vmatprep.subr.mxu0 0.0
      %1376 = vmatpush1.msra.mxu0 0.0
      %1377 = vmatprep.subr.mxu0 0.0
      %1378 = vmatpush1.msra.mxu0 0.0
      %1379 = vmatprep.subr.mxu0 0.0
      %1380 = vmatpush1.msra.mxu0 0.0
      %1381 = vmatprep.mubr.f32.mxu0 0.0
      %1382 = vmatmul.mubr.f32.gmra.mrb[0].mxu0 %v1073
      %v1383 = vpop.f32.mrb[0].mxu0
      %v1384 = vadd.f32 0.0, %v1383
      %v1385 = vpop.f32.mrb[0].mxu0
      %1386 = vdwg.mxu0
      %v1387 = vadd.f32 %v1243, %v1313
      %v1388 = vadd.f32 %v1244, %v1315
      %v1389 = vxor.u32 %v1387, 2147483648
      %v1390 = vxor.u32 %v1388, 2147483648
      %v1391 = vmul.f32 %v1389, 1.442695
      %v1392 = vpow.pop %v1391
      %v1393 = vmul.f32 %v1390, 1.442695
      %v1394 = vpow.pop %v1393
      %v1395 = vadd.f32 %v1392, 1.0
      %v1396 = vadd.f32 %v1394, 1.0
      %v1397 = vrcp.pop %v1395
      %v1398 = vmul.f32 1.0, %v1397
      %v1399 = vrcp.pop %v1396
      %v1400 = vmul.f32 1.0, %v1399
      %v1401 = vadd.f32 %v1384, %v699
      %v1402 = vmul.f32 %v1398, %v1401
      %v1403 = vadd.f32 %v1245, %v1402
      %v1404 = vtanh.pop %v1403
      %v1405 = vsub.f32 1.0, %v1400
      %v1406 = vmul.f32 %v1405, %v1404
      %v1407 = vmul.f32 %v1400, %v1073
      %v1408 = vadd.f32 %v1406, %v1407
      %1409 = vmatprep.subr.mxu0 %v776
      %1410 = vmatpush1.msra.mxu0 %v775
      %1411 = vmatprep.subr.mxu0 %v780
      %1412 = vmatpush1.msra.mxu0 %v779
      %1413 = vmatprep.subr.mxu0 %v784
      %1414 = vmatpush1.msra.mxu0 %v783
      %1415 = vmatprep.subr.mxu0 %v788
      %1416 = vmatpush1.msra.mxu0 %v787
      %1417 = vmatprep.subr.mxu0 %v792
      %1418 = vmatpush1.msra.mxu0 %v791
      %1419 = vmatprep.subr.mxu0 %v796
      %1420 = vmatpush1.msra.mxu0 %v795
      %1421 = vmatprep.subr.mxu0 %v800
      %1422 = vmatpush1.msra.mxu0 %v799
      %1423 = vmatprep.subr.mxu0 %v804
      %1424 = vmatpush1.msra.mxu0 %v803
      %1425 = vmatprep.subr.mxu0 %v808
      %1426 = vmatpush1.msra.mxu0 %v807
      %1427 = vmatprep.subr.mxu0 %v812
      %1428 = vmatpush1.msra.mxu0 %v811
      %1429 = vmatprep.subr.mxu0 %v816
      %1430 = vmatpush1.msra.mxu0 %v815
      %1431 = vmatprep.subr.mxu0 %v820
      %1432 = vmatpush1.msra.mxu0 %v819
      %1433 = vmatprep.subr.mxu0 %v824
      %1434 = vmatpush1.msra.mxu0 %v823
      %1435 = vmatprep.subr.mxu0 %v828
      %1436 = vmatpush1.msra.mxu0 %v827
      %1437 = vmatprep.subr.mxu0 %v832
      %1438 = vmatpush1.msra.mxu0 %v831
      %1439 = vmatprep.subr.mxu0 %v836
      %1440 = vmatpush1.msra.mxu0 %v835
      %1441 = vmatprep.subr.mxu0 %v840
      %1442 = vmatpush1.msra.mxu0 %v839
      %1443 = vmatprep.subr.mxu0 %v844
      %1444 = vmatpush1.msra.mxu0 %v843
      %1445 = vmatprep.subr.mxu0 %v848
      %1446 = vmatpush1.msra.mxu0 %v847
      %1447 = vmatprep.subr.mxu0 %v852
      %1448 = vmatpush1.msra.mxu0 %v851
      %1449 = vmatprep.subr.mxu0 %v856
      %1450 = vmatpush1.msra.mxu0 %v855
      %1451 = vmatprep.subr.mxu0 %v860
      %1452 = vmatpush1.msra.mxu0 %v859
      %1453 = vmatprep.subr.mxu0 %v864
      %1454 = vmatpush1.msra.mxu0 %v863
      %1455 = vmatprep.subr.mxu0 %v868
      %1456 = vmatpush1.msra.mxu0 %v867
      %1457 = vmatprep.subr.mxu0 %v872
      %1458 = vmatpush1.msra.mxu0 %v871
      %1459 = vmatprep.subr.mxu0 %v876
      %1460 = vmatpush1.msra.mxu0 %v875
      %1461 = vmatprep.subr.mxu0 %v880
      %1462 = vmatpush1.msra.mxu0 %v879
      %1463 = vmatprep.subr.mxu0 %v884
      %1464 = vmatpush1.msra.mxu0 %v883
      %1465 = vmatprep.subr.mxu0 %v888
      %1466 = vmatpush1.msra.mxu0 %v887
      %1467 = vmatprep.subr.mxu0 %v892
      %1468 = vmatpush1.msra.mxu0 %v891
      %1469 = vmatprep.subr.mxu0 %v896
      %1470 = vmatpush1.msra.mxu0 %v895
      %1471 = vmatprep.subr.mxu0 %v900
      %1472 = vmatpush1.msra.mxu0 %v899
      %1473 = vmatprep.mubr.f32.mxu0 %v1238
      %1474 = vmatmul.mubr.f32.gmra.mrb[0].mxu0 %v1408
      %v1475 = vpop.f32.mrb[0].mxu0
      %v1476 = vadd.f32 0.0, %v1475
      %v1477 = vpop.f32.mrb[0].mxu0
      %v1478 = vadd.f32 0.0, %v1477
      %1479 = vdwg.mxu0
      %1480 = vmatprep.subr.mxu0 %v778
      %1481 = vmatpush1.msra.mxu0 %v777
      %1482 = vmatprep.subr.mxu0 %v782
      %1483 = vmatpush1.msra.mxu0 %v781
      %1484 = vmatprep.subr.mxu0 %v786
      %1485 = vmatpush1.msra.mxu0 %v785
      %1486 = vmatprep.subr.mxu0 %v790
      %1487 = vmatpush1.msra.mxu0 %v789
      %1488 = vmatprep.subr.mxu0 %v794
      %1489 = vmatpush1.msra.mxu0 %v793
      %1490 = vmatprep.subr.mxu0 %v798
      %1491 = vmatpush1.msra.mxu0 %v797
      %1492 = vmatprep.subr.mxu0 %v802
      %1493 = vmatpush1.msra.mxu0 %v801
      %1494 = vmatprep.subr.mxu0 %v806
      %1495 = vmatpush1.msra.mxu0 %v805
      %1496 = vmatprep.subr.mxu0 %v810
      %1497 = vmatpush1.msra.mxu0 %v809
      %1498 = vmatprep.subr.mxu0 %v814
      %1499 = vmatpush1.msra.mxu0 %v813
      %1500 = vmatprep.subr.mxu0 %v818
      %1501 = vmatpush1.msra.mxu0 %v817
      %1502 = vmatprep.subr.mxu0 %v822
      %1503 = vmatpush1.msra.mxu0 %v821
      %1504 = vmatprep.subr.mxu0 %v826
      %1505 = vmatpush1.msra.mxu0 %v825
      %1506 = vmatprep.subr.mxu0 %v830
      %1507 = vmatpush1.msra.mxu0 %v829
      %1508 = vmatprep.subr.mxu0 %v834
      %1509 = vmatpush1.msra.mxu0 %v833
      %1510 = vmatprep.subr.mxu0 %v838
      %1511 = vmatpush1.msra.mxu0 %v837
      %1512 = vmatprep.subr.mxu0 %v842
      %1513 = vmatpush1.msra.mxu0 %v841
      %1514 = vmatprep.subr.mxu0 %v846
      %1515 = vmatpush1.msra.mxu0 %v845
      %1516 = vmatprep.subr.mxu0 %v850
      %1517 = vmatpush1.msra.mxu0 %v849
      %1518 = vmatprep.subr.mxu0 %v854
      %1519 = vmatpush1.msra.mxu0 %v853
      %1520 = vmatprep.subr.mxu0 %v858
      %1521 = vmatpush1.msra.mxu0 %v857
      %1522 = vmatprep.subr.mxu0 %v862
      %1523 = vmatpush1.msra.mxu0 %v861
      %1524 = vmatprep.subr.mxu0 %v866
      %1525 = vmatpush1.msra.mxu0 %v865
      %1526 = vmatprep.subr.mxu0 %v870
      %1527 = vmatpush1.msra.mxu0 %v869
      %1528 = vmatprep.subr.mxu0 %v874
      %1529 = vmatpush1.msra.mxu0 %v873
      %1530 = vmatprep.subr.mxu0 %v878
      %1531 = vmatpush1.msra.mxu0 %v877
      %1532 = vmatprep.subr.mxu0 %v882
      %1533 = vmatpush1.msra.mxu0 %v881
      %1534 = vmatprep.subr.mxu0 %v886
      %1535 = vmatpush1.msra.mxu0 %v885
      %1536 = vmatprep.subr.mxu0 %v890
      %1537 = vmatpush1.msra.mxu0 %v889
      %1538 = vmatprep.subr.mxu0 %v894
      %1539 = vmatpush1.msra.mxu0 %v893
      %1540 = vmatprep.subr.mxu0 %v898
      %1541 = vmatpush1.msra.mxu0 %v897
      %1542 = vmatprep.subr.mxu0 %v902
      %1543 = vmatpush1.msra.mxu0 %v901
      %1544 = vmatprep.mubr.f32.mxu0 %v1238
      %1545 = vmatmul.mubr.f32.gmra.mrb[0].mxu0 %v1408
      %v1546 = vpop.f32.mrb[0].mxu0
      %v1547 = vadd.f32 0.0, %v1546
      %v1548 = vpop.f32.mrb[0].mxu0
      %v1549 = vadd.f32 0.0, %v1548
      %1550 = vdwg.mxu0
      %v1551 = vadd.f32 %v1476, %v706
      %v1552 = vadd.f32 %v1478, %v710
      %v1553 = vxor.u32 %v1551, 2147483648
      %v1554 = vxor.u32 %v1552, 2147483648
      %v1555 = vmul.f32 %v1553, 1.442695
      %v1556 = vpow.pop %v1555
      %v1557 = vmul.f32 %v1554, 1.442695
      %v1558 = vpow.pop %v1557
      %v1559 = vadd.f32 %v1556, 1.0
      %v1560 = vadd.f32 %v1558, 1.0
      %v1561 = vrcp.pop %v1559
      %v1562 = vmul.f32 1.0, %v1561
      %v1563 = vrcp.pop %v1560
      %v1564 = vmul.f32 1.0, %v1563
      %v1565 = vadd.f32 %v1547, %v718
      %v1566 = vadd.f32 %v1549, %v725
      %v1567 = vmul.f32 %v1562, %v1566
      %v1568 = vadd.f32 %v1565, %v1567
      %v1569 = vtanh.pop %v1568
      %v1570 = vsub.f32 1.0, %v1564
      %v1571 = vmul.f32 %v1570, %v1569
      %v1572 = vmul.f32 %v1564, %v1238
      %v1573 = vadd.f32 %v1571, %v1572
      %s1574 = scalar_lea.vmem [#allocation5], 8
      %1575 = vst [vmem:[%s1574] sm:$0xff] %v1573
      %s1576 = smul.u32 2, 3
      %s1577 = smul.addr %s1576, 8
      %s1578 = scalar_lea.vmem [#allocation4], %s1577
      %v1579 = vld [vmem:[%s1578] sm:$0xff]
      %v1580 = vld [vmem:[%s1578 + $0x8] sm:$0xff]
      %v1581 = vld [vmem:[%s1578 + $0x10] sm:$0xff]
      %1582 = vmatprep.subr.mxu0 %v728
      %1583 = vmatpush1.msra.mxu0 %v727
      %1584 = vmatprep.subr.mxu0 %v731
      %1585 = vmatpush1.msra.mxu0 %v730
      %1586 = vmatprep.subr.mxu0 %v734
      %1587 = vmatpush1.msra.mxu0 %v733
      %1588 = vmatprep.subr.mxu0 %v737
      %1589 = vmatpush1.msra.mxu0 %v736
      %1590 = vmatprep.subr.mxu0 %v740
      %1591 = vmatpush1.msra.mxu0 %v739
      %1592 = vmatprep.subr.mxu0 %v743
      %1593 = vmatpush1.msra.mxu0 %v742
      %1594 = vmatprep.subr.mxu0 %v746
      %1595 = vmatpush1.msra.mxu0 %v745
      %1596 = vmatprep.subr.mxu0 %v749
      %1597 = vmatpush1.msra.mxu0 %v748
      %1598 = vmatprep.subr.mxu0 %v752
      %1599 = vmatpush1.msra.mxu0 %v751
      %1600 = vmatprep.subr.mxu0 %v755
      %1601 = vmatpush1.msra.mxu0 %v754
      %1602 = vmatprep.subr.mxu0 %v758
      %1603 = vmatpush1.msra.mxu0 %v757
      %1604 = vmatprep.subr.mxu0 %v761
      %1605 = vmatpush1.msra.mxu0 %v760
      %1606 = vmatprep.subr.mxu0 %v764
      %1607 = vmatpush1.msra.mxu0 %v763
      %1608 = vmatprep.subr.mxu0 %v767
      %1609 = vmatpush1.msra.mxu0 %v766
      %1610 = vmatprep.subr.mxu0 %v770
      %1611 = vmatpush1.msra.mxu0 %v769
      %1612 = vmatprep.subr.mxu0 %v773
      %1613 = vmatpush1.msra.mxu0 %v772
      %1614 = vmatprep.subr.mxu0 0.0
      %1615 = vmatpush1.msra.mxu0 0.0
      %1616 = vmatprep.subr.mxu0 0.0
      %1617 = vmatpush1.msra.mxu0 0.0
      %1618 = vmatprep.subr.mxu0 0.0
      %1619 = vmatpush1.msra.mxu0 0.0
      %1620 = vmatprep.subr.mxu0 0.0
      %1621 = vmatpush1.msra.mxu0 0.0
      %1622 = vmatprep.subr.mxu0 0.0
      %1623 = vmatpush1.msra.mxu0 0.0
      %1624 = vmatprep.subr.mxu0 0.0
      %1625 = vmatpush1.msra.mxu0 0.0
      %1626 = vmatprep.subr.mxu0 0.0
      %1627 = vmatpush1.msra.mxu0 0.0
      %1628 = vmatprep.subr.mxu0 0.0
      %1629 = vmatpush1.msra.mxu0 0.0
      %1630 = vmatprep.subr.mxu0 0.0
      %1631 = vmatpush1.msra.mxu0 0.0
      %1632 = vmatprep.subr.mxu0 0.0
      %1633 = vmatpush1.msra.mxu0 0.0
      %1634 = vmatprep.subr.mxu0 0.0
      %1635 = vmatpush1.msra.mxu0 0.0
      %1636 = vmatprep.subr.mxu0 0.0
      %1637 = vmatpush1.msra.mxu0 0.0
      %1638 = vmatprep.subr.mxu0 0.0
      %1639 = vmatpush1.msra.mxu0 0.0
      %1640 = vmatprep.subr.mxu0 0.0
      %1641 = vmatpush1.msra.mxu0 0.0
      %1642 = vmatprep.subr.mxu0 0.0
      %1643 = vmatpush1.msra.mxu0 0.0
      %1644 = vmatprep.subr.mxu0 0.0
      %1645 = vmatpush1.msra.mxu0 0.0
      %1646 = vmatprep.mubr.f32.mxu0 0.0
      %1647 = vmatmul.mubr.f32.gmra.mrb[0].mxu0 %v1408
      %v1648 = vpop.f32.mrb[0].mxu0
      %v1649 = vadd.f32 0.0, %v1648
      %v1650 = vpop.f32.mrb[0].mxu0
      %v1651 = vadd.f32 0.0, %v1650
      %1652 = vdwg.mxu0
      %1653 = vmatprep.subr.mxu0 0.0
      %1654 = vmatpush1.msra.mxu0 %v729
      %1655 = vmatprep.subr.mxu0 0.0
      %1656 = vmatpush1.msra.mxu0 %v732
      %1657 = vmatprep.subr.mxu0 0.0
      %1658 = vmatpush1.msra.mxu0 %v735
      %1659 = vmatprep.subr.mxu0 0.0
      %1660 = vmatpush1.msra.mxu0 %v738
      %1661 = vmatprep.subr.mxu0 0.0
      %1662 = vmatpush1.msra.mxu0 %v741
      %1663 = vmatprep.subr.mxu0 0.0
      %1664 = vmatpush1.msra.mxu0 %v744
      %1665 = vmatprep.subr.mxu0 0.0
      %1666 = vmatpush1.msra.mxu0 %v747
      %1667 = vmatprep.subr.mxu0 0.0
      %1668 = vmatpush1.msra.mxu0 %v750
      %1669 = vmatprep.subr.mxu0 0.0
      %1670 = vmatpush1.msra.mxu0 %v753
      %1671 = vmatprep.subr.mxu0 0.0
      %1672 = vmatpush1.msra.mxu0 %v756
      %1673 = vmatprep.subr.mxu0 0.0
      %1674 = vmatpush1.msra.mxu0 %v759
      %1675 = vmatprep.subr.mxu0 0.0
      %1676 = vmatpush1.msra.mxu0 %v762
      %1677 = vmatprep.subr.mxu0 0.0
      %1678 = vmatpush1.msra.mxu0 %v765
      %1679 = vmatprep.subr.mxu0 0.0
      %1680 = vmatpush1.msra.mxu0 %v768
      %1681 = vmatprep.subr.mxu0 0.0
      %1682 = vmatpush1.msra.mxu0 %v771
      %1683 = vmatprep.subr.mxu0 0.0
      %1684 = vmatpush1.msra.mxu0 %v774
      %1685 = vmatprep.subr.mxu0 0.0
      %1686 = vmatpush1.msra.mxu0 0.0
      %1687 = vmatprep.subr.mxu0 0.0
      %1688 = vmatpush1.msra.mxu0 0.0
      %1689 = vmatprep.subr.mxu0 0.0
      %1690 = vmatpush1.msra.mxu0 0.0
      %1691 = vmatprep.subr.mxu0 0.0
      %1692 = vmatpush1.msra.mxu0 0.0
      %1693 = vmatprep.subr.mxu0 0.0
      %1694 = vmatpush1.msra.mxu0 0.0
      %1695 = vmatprep.subr.mxu0 0.0
      %1696 = vmatpush1.msra.mxu0 0.0
      %1697 = vmatprep.subr.mxu0 0.0
      %1698 = vmatpush1.msra.mxu0 0.0
      %1699 = vmatprep.subr.mxu0 0.0
      %1700 = vmatpush1.msra.mxu0 0.0
      %1701 = vmatprep.subr.mxu0 0.0
      %1702 = vmatpush1.msra.mxu0 0.0
      %1703 = vmatprep.subr.mxu0 0.0
      %1704 = vmatpush1.msra.mxu0 0.0
      %1705 = vmatprep.subr.mxu0 0.0
      %1706 = vmatpush1.msra.mxu0 0.0
      %1707 = vmatprep.subr.mxu0 0.0
      %1708 = vmatpush1.msra.mxu0 0.0
      %1709 = vmatprep.subr.mxu0 0.0
      %1710 = vmatpush1.msra.mxu0 0.0
      %1711 = vmatprep.subr.mxu0 0.0
      %1712 = vmatpush1.msra.mxu0 0.0
      %1713 = vmatprep.subr.mxu0 0.0
      %1714 = vmatpush1.msra.mxu0 0.0
      %1715 = vmatprep.subr.mxu0 0.0
      %1716 = vmatpush1.msra.mxu0 0.0
      %1717 = vmatprep.mubr.f32.mxu0 0.0
      %1718 = vmatmul.mubr.f32.gmra.mrb[0].mxu0 %v1408
      %v1719 = vpop.f32.mrb[0].mxu0
      %v1720 = vadd.f32 0.0, %v1719
      %v1721 = vpop.f32.mrb[0].mxu0
      %1722 = vdwg.mxu0
      %v1723 = vadd.f32 %v1579, %v1649
      %v1724 = vadd.f32 %v1580, %v1651
      %v1725 = vxor.u32 %v1723, 2147483648
      %v1726 = vxor.u32 %v1724, 2147483648
      %v1727 = vmul.f32 %v1725, 1.442695
      %v1728 = vpow.pop %v1727
      %v1729 = vmul.f32 %v1726, 1.442695
      %v1730 = vpow.pop %v1729
      %v1731 = vadd.f32 %v1728, 1.0
      %v1732 = vadd.f32 %v1730, 1.0
      %v1733 = vrcp.pop %v1731
      %v1734 = vmul.f32 1.0, %v1733
      %v1735 = vrcp.pop %v1732
      %v1736 = vmul.f32 1.0, %v1735
      %v1737 = vadd.f32 %v1720, %v699
      %v1738 = vmul.f32 %v1734, %v1737
      %v1739 = vadd.f32 %v1581, %v1738
      %v1740 = vtanh.pop %v1739
      %v1741 = vsub.f32 1.0, %v1736
      %v1742 = vmul.f32 %v1741, %v1740
      %v1743 = vmul.f32 %v1736, %v1408
      %v1744 = vadd.f32 %v1742, %v1743
      %1745 = vmatprep.subr.mxu0 %v776
      %1746 = vmatpush1.msra.mxu0 %v775
      %1747 = vmatprep.subr.mxu0 %v780
      %1748 = vmatpush1.msra.mxu0 %v779
      %1749 = vmatprep.subr.mxu0 %v784
      %1750 = vmatpush1.msra.mxu0 %v783
      %1751 = vmatprep.subr.mxu0 %v788
      %1752 = vmatpush1.msra.mxu0 %v787
      %1753 = vmatprep.subr.mxu0 %v792
      %1754 = vmatpush1.msra.mxu0 %v791
      %1755 = vmatprep.subr.mxu0 %v796
      %1756 = vmatpush1.msra.mxu0 %v795
      %1757 = vmatprep.subr.mxu0 %v800
      %1758 = vmatpush1.msra.mxu0 %v799
      %1759 = vmatprep.subr.mxu0 %v804
      %1760 = vmatpush1.msra.mxu0 %v803
      %1761 = vmatprep.subr.mxu0 %v808
      %1762 = vmatpush1.msra.mxu0 %v807
      %1763 = vmatprep.subr.mxu0 %v812
      %1764 = vmatpush1.msra.mxu0 %v811
      %1765 = vmatprep.subr.mxu0 %v816
      %1766 = vmatpush1.msra.mxu0 %v815
      %1767 = vmatprep.subr.mxu0 %v820
      %1768 = vmatpush1.msra.mxu0 %v819
      %1769 = vmatprep.subr.mxu0 %v824
      %1770 = vmatpush1.msra.mxu0 %v823
      %1771 = vmatprep.subr.mxu0 %v828
      %1772 = vmatpush1.msra.mxu0 %v827
      %1773 = vmatprep.subr.mxu0 %v832
      %1774 = vmatpush1.msra.mxu0 %v831
      %1775 = vmatprep.subr.mxu0 %v836
      %1776 = vmatpush1.msra.mxu0 %v835
      %1777 = vmatprep.subr.mxu0 %v840
      %1778 = vmatpush1.msra.mxu0 %v839
      %1779 = vmatprep.subr.mxu0 %v844
      %1780 = vmatpush1.msra.mxu0 %v843
      %1781 = vmatprep.subr.mxu0 %v848
      %1782 = vmatpush1.msra.mxu0 %v847
      %1783 = vmatprep.subr.mxu0 %v852
      %1784 = vmatpush1.msra.mxu0 %v851
      %1785 = vmatprep.subr.mxu0 %v856
      %1786 = vmatpush1.msra.mxu0 %v855
      %1787 = vmatprep.subr.mxu0 %v860
      %1788 = vmatpush1.msra.mxu0 %v859
      %1789 = vmatprep.subr.mxu0 %v864
      %1790 = vmatpush1.msra.mxu0 %v863
      %1791 = vmatprep.subr.mxu0 %v868
      %1792 = vmatpush1.msra.mxu0 %v867
      %1793 = vmatprep.subr.mxu0 %v872
      %1794 = vmatpush1.msra.mxu0 %v871
      %1795 = vmatprep.subr.mxu0 %v876
      %1796 = vmatpush1.msra.mxu0 %v875
      %1797 = vmatprep.subr.mxu0 %v880
      %1798 = vmatpush1.msra.mxu0 %v879
      %1799 = vmatprep.subr.mxu0 %v884
      %1800 = vmatpush1.msra.mxu0 %v883
      %1801 = vmatprep.subr.mxu0 %v888
      %1802 = vmatpush1.msra.mxu0 %v887
      %1803 = vmatprep.subr.mxu0 %v892
      %1804 = vmatpush1.msra.mxu0 %v891
      %1805 = vmatprep.subr.mxu0 %v896
      %1806 = vmatpush1.msra.mxu0 %v895
      %1807 = vmatprep.subr.mxu0 %v900
      %1808 = vmatpush1.msra.mxu0 %v899
      %1809 = vmatprep.mubr.f32.mxu0 %v1573
      %1810 = vmatmul.mubr.f32.gmra.mrb[0].mxu0 %v1744
      %v1811 = vpop.f32.mrb[0].mxu0
      %v1812 = vadd.f32 0.0, %v1811
      %v1813 = vpop.f32.mrb[0].mxu0
      %v1814 = vadd.f32 0.0, %v1813
      %1815 = vdwg.mxu0
      %1816 = vmatprep.subr.mxu0 %v778
      %1817 = vmatpush1.msra.mxu0 %v777
      %1818 = vmatprep.subr.mxu0 %v782
      %1819 = vmatpush1.msra.mxu0 %v781
      %1820 = vmatprep.subr.mxu0 %v786
      %1821 = vmatpush1.msra.mxu0 %v785
      %1822 = vmatprep.subr.mxu0 %v790
      %1823 = vmatpush1.msra.mxu0 %v789
      %1824 = vmatprep.subr.mxu0 %v794
      %1825 = vmatpush1.msra.mxu0 %v793
      %1826 = vmatprep.subr.mxu0 %v798
      %1827 = vmatpush1.msra.mxu0 %v797
      %1828 = vmatprep.subr.mxu0 %v802
      %1829 = vmatpush1.msra.mxu0 %v801
      %1830 = vmatprep.subr.mxu0 %v806
      %1831 = vmatpush1.msra.mxu0 %v805
      %1832 = vmatprep.subr.mxu0 %v810
      %1833 = vmatpush1.msra.mxu0 %v809
      %1834 = vmatprep.subr.mxu0 %v814
      %1835 = vmatpush1.msra.mxu0 %v813
      %1836 = vmatprep.subr.mxu0 %v818
      %1837 = vmatpush1.msra.mxu0 %v817
      %1838 = vmatprep.subr.mxu0 %v822
      %1839 = vmatpush1.msra.mxu0 %v821
      %1840 = vmatprep.subr.mxu0 %v826
      %1841 = vmatpush1.msra.mxu0 %v825
      %1842 = vmatprep.subr.mxu0 %v830
      %1843 = vmatpush1.msra.mxu0 %v829
      %1844 = vmatprep.subr.mxu0 %v834
      %1845 = vmatpush1.msra.mxu0 %v833
      %1846 = vmatprep.subr.mxu0 %v838
      %1847 = vmatpush1.msra.mxu0 %v837
      %1848 = vmatprep.subr.mxu0 %v842
      %1849 = vmatpush1.msra.mxu0 %v841
      %1850 = vmatprep.subr.mxu0 %v846
      %1851 = vmatpush1.msra.mxu0 %v845
      %1852 = vmatprep.subr.mxu0 %v850
      %1853 = vmatpush1.msra.mxu0 %v849
      %1854 = vmatprep.subr.mxu0 %v854
      %1855 = vmatpush1.msra.mxu0 %v853
      %1856 = vmatprep.subr.mxu0 %v858
      %1857 = vmatpush1.msra.mxu0 %v857
      %1858 = vmatprep.subr.mxu0 %v862
      %1859 = vmatpush1.msra.mxu0 %v861
      %1860 = vmatprep.subr.mxu0 %v866
      %1861 = vmatpush1.msra.mxu0 %v865
      %1862 = vmatprep.subr.mxu0 %v870
      %1863 = vmatpush1.msra.mxu0 %v869
      %1864 = vmatprep.subr.mxu0 %v874
      %1865 = vmatpush1.msra.mxu0 %v873
      %1866 = vmatprep.subr.mxu0 %v878
      %1867 = vmatpush1.msra.mxu0 %v877
      %1868 = vmatprep.subr.mxu0 %v882
      %1869 = vmatpush1.msra.mxu0 %v881
      %1870 = vmatprep.subr.mxu0 %v886
      %1871 = vmatpush1.msra.mxu0 %v885
      %1872 = vmatprep.subr.mxu0 %v890
      %1873 = vmatpush1.msra.mxu0 %v889
      %1874 = vmatprep.subr.mxu0 %v894
      %1875 = vmatpush1.msra.mxu0 %v893
      %1876 = vmatprep.subr.mxu0 %v898
      %1877 = vmatpush1.msra.mxu0 %v897
      %1878 = vmatprep.subr.mxu0 %v902
      %1879 = vmatpush1.msra.mxu0 %v901
      %1880 = vmatprep.mubr.f32.mxu0 %v1573
      %1881 = vmatmul.mubr.f32.gmra.mrb[0].mxu0 %v1744
      %v1882 = vpop.f32.mrb[0].mxu0
      %v1883 = vadd.f32 0.0, %v1882
      %v1884 = vpop.f32.mrb[0].mxu0
      %v1885 = vadd.f32 0.0, %v1884
      %1886 = vdwg.mxu0
      %v1887 = vadd.f32 %v1812, %v706
      %v1888 = vadd.f32 %v1814, %v710
      %v1889 = vxor.u32 %v1887, 2147483648
      %v1890 = vxor.u32 %v1888, 2147483648
      %v1891 = vmul.f32 %v1889, 1.442695
      %v1892 = vpow.pop %v1891
      %v1893 = vmul.f32 %v1890, 1.442695
      %v1894 = vpow.pop %v1893
      %v1895 = vadd.f32 %v1892, 1.0
      %v1896 = vadd.f32 %v1894, 1.0
      %v1897 = vrcp.pop %v1895
      %v1898 = vmul.f32 1.0, %v1897
      %v1899 = vrcp.pop %v1896
      %v1900 = vmul.f32 1.0, %v1899
      %v1901 = vadd.f32 %v1883, %v718
      %v1902 = vadd.f32 %v1885, %v725
      %v1903 = vmul.f32 %v1898, %v1902
      %v1904 = vadd.f32 %v1901, %v1903
      %v1905 = vtanh.pop %v1904
      %v1906 = vsub.f32 1.0, %v1900
      %v1907 = vmul.f32 %v1906, %v1905
      %v1908 = vmul.f32 %v1900, %v1573
      %v1909 = vadd.f32 %v1907, %v1908
      %s1910 = scalar_lea.vmem [#allocation5], 16
      %1911 = vst [vmem:[%s1910] sm:$0xff] %v1909
      %s1912 = smul.u32 3, 3
      %s1913 = smul.addr %s1912, 8
      %s1914 = scalar_lea.vmem [#allocation4], %s1913
      %v1915 = vld [vmem:[%s1914] sm:$0xff]
      %v1916 = vld [vmem:[%s1914 + $0x8] sm:$0xff]
      %v1917 = vld [vmem:[%s1914 + $0x10] sm:$0xff]
      %1918 = vmatprep.subr.mxu0 %v728
      %1919 = vmatpush1.msra.mxu0 %v727
      %1920 = vmatprep.subr.mxu0 %v731
      %1921 = vmatpush1.msra.mxu0 %v730
      %1922 = vmatprep.subr.mxu0 %v734
      %1923 = vmatpush1.msra.mxu0 %v733
      %1924 = vmatprep.subr.mxu0 %v737
      %1925 = vmatpush1.msra.mxu0 %v736
      %1926 = vmatprep.subr.mxu0 %v740
      %1927 = vmatpush1.msra.mxu0 %v739
      %1928 = vmatprep.subr.mxu0 %v743
      %1929 = vmatpush1.msra.mxu0 %v742
      %1930 = vmatprep.subr.mxu0 %v746
      %1931 = vmatpush1.msra.mxu0 %v745
      %1932 = vmatprep.subr.mxu0 %v749
      %1933 = vmatpush1.msra.mxu0 %v748
      %1934 = vmatprep.subr.mxu0 %v752
      %1935 = vmatpush1.msra.mxu0 %v751
      %1936 = vmatprep.subr.mxu0 %v755
      %1937 = vmatpush1.msra.mxu0 %v754
      %1938 = vmatprep.subr.mxu0 %v758
      %1939 = vmatpush1.msra.mxu0 %v757
      %1940 = vmatprep.subr.mxu0 %v761
      %1941 = vmatpush1.msra.mxu0 %v760
      %1942 = vmatprep.subr.mxu0 %v764
      %1943 = vmatpush1.msra.mxu0 %v763
      %1944 = vmatprep.subr.mxu0 %v767
      %1945 = vmatpush1.msra.mxu0 %v766
      %1946 = vmatprep.subr.mxu0 %v770
      %1947 = vmatpush1.msra.mxu0 %v769
      %1948 = vmatprep.subr.mxu0 %v773
      %1949 = vmatpush1.msra.mxu0 %v772
      %1950 = vmatprep.subr.mxu0 0.0
      %1951 = vmatpush1.msra.mxu0 0.0
      %1952 = vmatprep.subr.mxu0 0.0
      %1953 = vmatpush1.msra.mxu0 0.0
      %1954 = vmatprep.subr.mxu0 0.0
      %1955 = vmatpush1.msra.mxu0 0.0
      %1956 = vmatprep.subr.mxu0 0.0
      %1957 = vmatpush1.msra.mxu0 0.0
      %1958 = vmatprep.subr.mxu0 0.0
      %1959 = vmatpush1.msra.mxu0 0.0
      %1960 = vmatprep.subr.mxu0 0.0
      %1961 = vmatpush1.msra.mxu0 0.0
      %1962 = vmatprep.subr.mxu0 0.0
      %1963 = vmatpush1.msra.mxu0 0.0
      %1964 = vmatprep.subr.mxu0 0.0
      %1965 = vmatpush1.msra.mxu0 0.0
      %1966 = vmatprep.subr.mxu0 0.0
      %1967 = vmatpush1.msra.mxu0 0.0
      %1968 = vmatprep.subr.mxu0 0.0
      %1969 = vmatpush1.msra.mxu0 0.0
      %1970 = vmatprep.subr.mxu0 0.0
      %1971 = vmatpush1.msra.mxu0 0.0
      %1972 = vmatprep.subr.mxu0 0.0
      %1973 = vmatpush1.msra.mxu0 0.0
      %1974 = vmatprep.subr.mxu0 0.0
      %1975 = vmatpush1.msra.mxu0 0.0
      %1976 = vmatprep.subr.mxu0 0.0
      %1977 = vmatpush1.msra.mxu0 0.0
      %1978 = vmatprep.subr.mxu0 0.0
      %1979 = vmatpush1.msra.mxu0 0.0
      %1980 = vmatprep.subr.mxu0 0.0
      %1981 = vmatpush1.msra.mxu0 0.0
      %1982 = vmatprep.mubr.f32.mxu0 0.0
      %1983 = vmatmul.mubr.f32.gmra.mrb[0].mxu0 %v1744
      %v1984 = vpop.f32.mrb[0].mxu0
      %v1985 = vadd.f32 0.0, %v1984
      %v1986 = vpop.f32.mrb[0].mxu0
      %v1987 = vadd.f32 0.0, %v1986
      %1988 = vdwg.mxu0
      %1989 = vmatprep.subr.mxu0 0.0
      %1990 = vmatpush1.msra.mxu0 %v729
      %1991 = vmatprep.subr.mxu0 0.0
      %1992 = vmatpush1.msra.mxu0 %v732
      %1993 = vmatprep.subr.mxu0 0.0
      %1994 = vmatpush1.msra.mxu0 %v735
      %1995 = vmatprep.subr.mxu0 0.0
      %1996 = vmatpush1.msra.mxu0 %v738
      %1997 = vmatprep.subr.mxu0 0.0
      %1998 = vmatpush1.msra.mxu0 %v741
      %1999 = vmatprep.subr.mxu0 0.0
      %2000 = vmatpush1.msra.mxu0 %v744
      %2001 = vmatprep.subr.mxu0 0.0
      %2002 = vmatpush1.msra.mxu0 %v747
      %2003 = vmatprep.subr.mxu0 0.0
      %2004 = vmatpush1.msra.mxu0 %v750
      %2005 = vmatprep.subr.mxu0 0.0
      %2006 = vmatpush1.msra.mxu0 %v753
      %2007 = vmatprep.subr.mxu0 0.0
      %2008 = vmatpush1.msra.mxu0 %v756
      %2009 = vmatprep.subr.mxu0 0.0
      %2010 = vmatpush1.msra.mxu0 %v759
      %2011 = vmatprep.subr.mxu0 0.0
      %2012 = vmatpush1.msra.mxu0 %v762
      %2013 = vmatprep.subr.mxu0 0.0
      %2014 = vmatpush1.msra.mxu0 %v765
      %2015 = vmatprep.subr.mxu0 0.0
      %2016 = vmatpush1.msra.mxu0 %v768
      %2017 = vmatprep.subr.mxu0 0.0
      %2018 = vmatpush1.msra.mxu0 %v771
      %2019 = vmatprep.subr.mxu0 0.0
      %2020 = vmatpush1.msra.mxu0 %v774
      %2021 = vmatprep.subr.mxu0 0.0
      %2022 = vmatpush1.msra.mxu0 0.0
      %2023 = vmatprep.subr.mxu0 0.0
      %2024 = vmatpush1.msra.mxu0 0.0
      %2025 = vmatprep.subr.mxu0 0.0
      %2026 = vmatpush1.msra.mxu0 0.0
      %2027 = vmatprep.subr.mxu0 0.0
      %2028 = vmatpush1.msra.mxu0 0.0
      %2029 = vmatprep.subr.mxu0 0.0
      %2030 = vmatpush1.msra.mxu0 0.0
      %2031 = vmatprep.subr.mxu0 0.0
      %2032 = vmatpush1.msra.mxu0 0.0
      %2033 = vmatprep.subr.mxu0 0.0
      %2034 = vmatpush1.msra.mxu0 0.0
      %2035 = vmatprep.subr.mxu0 0.0
      %2036 = vmatpush1.msra.mxu0 0.0
      %2037 = vmatprep.subr.mxu0 0.0
      %2038 = vmatpush1.msra.mxu0 0.0
      %2039 = vmatprep.subr.mxu0 0.0
      %2040 = vmatpush1.msra.mxu0 0.0
      %2041 = vmatprep.subr.mxu0 0.0
      %2042 = vmatpush1.msra.mxu0 0.0
      %2043 = vmatprep.subr.mxu0 0.0
      %2044 = vmatpush1.msra.mxu0 0.0
      %2045 = vmatprep.subr.mxu0 0.0
      %2046 = vmatpush1.msra.mxu0 0.0
      %2047 = vmatprep.subr.mxu0 0.0
      %2048 = vmatpush1.msra.mxu0 0.0
      %2049 = vmatprep.subr.mxu0 0.0
      %2050 = vmatpush1.msra.mxu0 0.0
      %2051 = vmatprep.subr.mxu0 0.0
      %2052 = vmatpush1.msra.mxu0 0.0
      %2053 = vmatprep.mubr.f32.mxu0 0.0
      %2054 = vmatmul.mubr.f32.gmra.mrb[0].mxu0 %v1744
      %v2055 = vpop.f32.mrb[0].mxu0
      %v2056 = vadd.f32 0.0, %v2055
      %v2057 = vpop.f32.mrb[0].mxu0
      %2058 = vdwg.mxu0
      %v2059 = vadd.f32 %v1915, %v1985
      %v2060 = vadd.f32 %v1916, %v1987
      %v2061 = vxor.u32 %v2059, 2147483648
      %v2062 = vxor.u32 %v2060, 2147483648
      %v2063 = vmul.f32 %v2061, 1.442695
      %v2064 = vpow.pop %v2063
      %v2065 = vmul.f32 %v2062, 1.442695
      %v2066 = vpow.pop %v2065
      %v2067 = vadd.f32 %v2064, 1.0
      %v2068 = vadd.f32 %v2066, 1.0
      %v2069 = vrcp.pop %v2067
      %v2070 = vmul.f32 1.0, %v2069
      %v2071 = vrcp.pop %v2068
      %v2072 = vmul.f32 1.0, %v2071
      %v2073 = vadd.f32 %v2056, %v699
      %v2074 = vmul.f32 %v2070, %v2073
      %v2075 = vadd.f32 %v1917, %v2074
      %v2076 = vtanh.pop %v2075
      %v2077 = vsub.f32 1.0, %v2072
      %v2078 = vmul.f32 %v2077, %v2076
      %v2079 = vmul.f32 %v2072, %v1744
      %v2080 = vadd.f32 %v2078, %v2079
      %2081 = vmatprep.subr.mxu0 %v776
      %2082 = vmatpush1.msra.mxu0 %v775
      %2083 = vmatprep.subr.mxu0 %v780
      %2084 = vmatpush1.msra.mxu0 %v779
      %2085 = vmatprep.subr.mxu0 %v784
      %2086 = vmatpush1.msra.mxu0 %v783
      %2087 = vmatprep.subr.mxu0 %v788
      %2088 = vmatpush1.msra.mxu0 %v787
      %2089 = vmatprep.subr.mxu0 %v792
      %2090 = vmatpush1.msra.mxu0 %v791
      %2091 = vmatprep.subr.mxu0 %v796
      %2092 = vmatpush1.msra.mxu0 %v795
      %2093 = vmatprep.subr.mxu0 %v800
      %2094 = vmatpush1.msra.mxu0 %v799
      %2095 = vmatprep.subr.mxu0 %v804
      %2096 = vmatpush1.msra.mxu0 %v803
      %2097 = vmatprep.subr.mxu0 %v808
      %2098 = vmatpush1.msra.mxu0 %v807
      %2099 = vmatprep.subr.mxu0 %v812
      %2100 = vmatpush1.msra.mxu0 %v811
      %2101 = vmatprep.subr.mxu0 %v816
      %2102 = vmatpush1.msra.mxu0 %v815
      %2103 = vmatprep.subr.mxu0 %v820
      %2104 = vmatpush1.msra.mxu0 %v819
      %2105 = vmatprep.subr.mxu0 %v824
      %2106 = vmatpush1.msra.mxu0 %v823
      %2107 = vmatprep.subr.mxu0 %v828
      %2108 = vmatpush1.msra.mxu0 %v827
      %2109 = vmatprep.subr.mxu0 %v832
      %2110 = vmatpush1.msra.mxu0 %v831
      %2111 = vmatprep.subr.mxu0 %v836
      %2112 = vmatpush1.msra.mxu0 %v835
      %2113 = vmatprep.subr.mxu0 %v840
      %2114 = vmatpush1.msra.mxu0 %v839
      %2115 = vmatprep.subr.mxu0 %v844
      %2116 = vmatpush1.msra.mxu0 %v843
      %2117 = vmatprep.subr.mxu0 %v848
      %2118 = vmatpush1.msra.mxu0 %v847
      %2119 = vmatprep.subr.mxu0 %v852
      %2120 = vmatpush1.msra.mxu0 %v851
      %2121 = vmatprep.subr.mxu0 %v856
      %2122 = vmatpush1.msra.mxu0 %v855
      %2123 = vmatprep.subr.mxu0 %v860
      %2124 = vmatpush1.msra.mxu0 %v859
      %2125 = vmatprep.subr.mxu0 %v864
      %2126 = vmatpush1.msra.mxu0 %v863
      %2127 = vmatprep.subr.mxu0 %v868
      %2128 = vmatpush1.msra.mxu0 %v867
      %2129 = vmatprep.subr.mxu0 %v872
      %2130 = vmatpush1.msra.mxu0 %v871
      %2131 = vmatprep.subr.mxu0 %v876
      %2132 = vmatpush1.msra.mxu0 %v875
      %2133 = vmatprep.subr.mxu0 %v880
      %2134 = vmatpush1.msra.mxu0 %v879
      %2135 = vmatprep.subr.mxu0 %v884
      %2136 = vmatpush1.msra.mxu0 %v883
      %2137 = vmatprep.subr.mxu0 %v888
      %2138 = vmatpush1.msra.mxu0 %v887
      %2139 = vmatprep.subr.mxu0 %v892
      %2140 = vmatpush1.msra.mxu0 %v891
      %2141 = vmatprep.subr.mxu0 %v896
      %2142 = vmatpush1.msra.mxu0 %v895
      %2143 = vmatprep.subr.mxu0 %v900
      %2144 = vmatpush1.msra.mxu0 %v899
      %2145 = vmatprep.mubr.f32.mxu0 %v1909
      %2146 = vmatmul.mubr.f32.gmra.mrb[0].mxu0 %v2080
      %v2147 = vpop.f32.mrb[0].mxu0
      %v2148 = vadd.f32 0.0, %v2147
      %v2149 = vpop.f32.mrb[0].mxu0
      %v2150 = vadd.f32 0.0, %v2149
      %2151 = vdwg.mxu0
      %2152 = vmatprep.subr.mxu0 %v778
      %2153 = vmatpush1.msra.mxu0 %v777
      %2154 = vmatprep.subr.mxu0 %v782
      %2155 = vmatpush1.msra.mxu0 %v781
      %2156 = vmatprep.subr.mxu0 %v786
      %2157 = vmatpush1.msra.mxu0 %v785
      %2158 = vmatprep.subr.mxu0 %v790
      %2159 = vmatpush1.msra.mxu0 %v789
      %2160 = vmatprep.subr.mxu0 %v794
      %2161 = vmatpush1.msra.mxu0 %v793
      %2162 = vmatprep.subr.mxu0 %v798
      %2163 = vmatpush1.msra.mxu0 %v797
      %2164 = vmatprep.subr.mxu0 %v802
      %2165 = vmatpush1.msra.mxu0 %v801
      %2166 = vmatprep.subr.mxu0 %v806
      %2167 = vmatpush1.msra.mxu0 %v805
      %2168 = vmatprep.subr.mxu0 %v810
      %2169 = vmatpush1.msra.mxu0 %v809
      %2170 = vmatprep.subr.mxu0 %v814
      %2171 = vmatpush1.msra.mxu0 %v813
      %2172 = vmatprep.subr.mxu0 %v818
      %2173 = vmatpush1.msra.mxu0 %v817
      %2174 = vmatprep.subr.mxu0 %v822
      %2175 = vmatpush1.msra.mxu0 %v821
      %2176 = vmatprep.subr.mxu0 %v826
      %2177 = vmatpush1.msra.mxu0 %v825
      %2178 = vmatprep.subr.mxu0 %v830
      %2179 = vmatpush1.msra.mxu0 %v829
      %2180 = vmatprep.subr.mxu0 %v834
      %2181 = vmatpush1.msra.mxu0 %v833
      %2182 = vmatprep.subr.mxu0 %v838
      %2183 = vmatpush1.msra.mxu0 %v837
      %2184 = vmatprep.subr.mxu0 %v842
      %2185 = vmatpush1.msra.mxu0 %v841
      %2186 = vmatprep.subr.mxu0 %v846
      %2187 = vmatpush1.msra.mxu0 %v845
      %2188 = vmatprep.subr.mxu0 %v850
      %2189 = vmatpush1.msra.mxu0 %v849
      %2190 = vmatprep.subr.mxu0 %v854
      %2191 = vmatpush1.msra.mxu0 %v853
      %2192 = vmatprep.subr.mxu0 %v858
      %2193 = vmatpush1.msra.mxu0 %v857
      %2194 = vmatprep.subr.mxu0 %v862
      %2195 = vmatpush1.msra.mxu0 %v861
      %2196 = vmatprep.subr.mxu0 %v866
      %2197 = vmatpush1.msra.mxu0 %v865
      %2198 = vmatprep.subr.mxu0 %v870
      %2199 = vmatpush1.msra.mxu0 %v869
      %2200 = vmatprep.subr.mxu0 %v874
      %2201 = vmatpush1.msra.mxu0 %v873
      %2202 = vmatprep.subr.mxu0 %v878
      %2203 = vmatpush1.msra.mxu0 %v877
      %2204 = vmatprep.subr.mxu0 %v882
      %2205 = vmatpush1.msra.mxu0 %v881
      %2206 = vmatprep.subr.mxu0 %v886
      %2207 = vmatpush1.msra.mxu0 %v885
      %2208 = vmatprep.subr.mxu0 %v890
      %2209 = vmatpush1.msra.mxu0 %v889
      %2210 = vmatprep.subr.mxu0 %v894
      %2211 = vmatpush1.msra.mxu0 %v893
      %2212 = vmatprep.subr.mxu0 %v898
      %2213 = vmatpush1.msra.mxu0 %v897
      %2214 = vmatprep.subr.mxu0 %v902
      %2215 = vmatpush1.msra.mxu0 %v901
      %2216 = vmatprep.mubr.f32.mxu0 %v1909
      %2217 = vmatmul.mubr.f32.gmra.mrb[0].mxu0 %v2080
      %v2218 = vpop.f32.mrb[0].mxu0
      %v2219 = vadd.f32 0.0, %v2218
      %v2220 = vpop.f32.mrb[0].mxu0
      %v2221 = vadd.f32 0.0, %v2220
      %2222 = vdwg.mxu0
      %v2223 = vadd.f32 %v2148, %v706
      %v2224 = vadd.f32 %v2150, %v710
      %v2225 = vxor.u32 %v2223, 2147483648
      %v2226 = vxor.u32 %v2224, 2147483648
      %v2227 = vmul.f32 %v2225, 1.442695
      %v2228 = vpow.pop %v2227
      %v2229 = vmul.f32 %v2226, 1.442695
      %v2230 = vpow.pop %v2229
      %v2231 = vadd.f32 %v2228, 1.0
      %v2232 = vadd.f32 %v2230, 1.0
      %v2233 = vrcp.pop %v2231
      %v2234 = vmul.f32 1.0, %v2233
      %v2235 = vrcp.pop %v2232
      %v2236 = vmul.f32 1.0, %v2235
      %v2237 = vadd.f32 %v2219, %v718
      %v2238 = vadd.f32 %v2221, %v725
      %v2239 = vmul.f32 %v2234, %v2238
      %v2240 = vadd.f32 %v2237, %v2239
      %v2241 = vtanh.pop %v2240
      %v2242 = vsub.f32 1.0, %v2236
      %v2243 = vmul.f32 %v2242, %v2241
      %v2244 = vmul.f32 %v2236, %v1909
      %v2245 = vadd.f32 %v2243, %v2244
      %s2246 = scalar_lea.vmem [#allocation5], 24
      %2247 = vst [vmem:[%s2246] sm:$0xff] %v2245
      %2248 = vst [vmem:[#allocation2] sm:$0xff] %v2080
      %2249 = vst [vmem:[#allocation3] sm:$0xff] %v2245
      %v2250 = vld [vmem:[#allocation5] sm:$0xff]
      %v2251 = vld [vmem:[#allocation5 + $0x8] sm:$0xff]
      %v2252 = vld [vmem:[#allocation5 + $0x10] sm:$0xff]
      %v2253 = vld [vmem:[#allocation5 + $0x18] sm:$0xff]
      %v2254 = vld [vmem:[%s9] sm:$0xff]
      %v2255 = vld [vmem:[%s9 + $0x8] sm:$0xff]
      %v2256 = vld [vmem:[%s9 + $0x10] sm:$0xff]
      %v2257 = vld [vmem:[%s9 + $0x18] sm:$0xff]
      %v2258 = vld [vmem:[%s9 + $0x20] sm:$0xff]
      %v2259 = vld [vmem:[%s9 + $0x28] sm:$0xff]
      %v2260 = vld [vmem:[%s9 + $0x30] sm:$0xff]
      %v2261 = vld [vmem:[%s9 + $0x38] sm:$0xff]
      %v2262 = vld [vmem:[%s9 + $0x40] sm:$0xff]
      %v2263 = vld [vmem:[%s9 + $0x48] sm:$0xff]
      %v2264 = vld [vmem:[%s9 + $0x50] sm:$0xff]
      %v2265 = vld [vmem:[%s9 + $0x58] sm:$0xff]
      %v2266 = vld [vmem:[%s9 + $0x60] sm:$0xff]
      %v2267 = vld [vmem:[%s9 + $0x68] sm:$0xff]
      %v2268 = vld [vmem:[%s9 + $0x70] sm:$0xff]
      %v2269 = vld [vmem:[%s9 + $0x78] sm:$0xff]
      %v2270 = vld [vmem:[%s10] sm:$0x1]
      %v2272 = vlaneseq
      %v2273 = vshrl.u32 %v2272, 7
      %v2274 = vsub.s32 0, %v2273
      %v2275 = vrot.slane %v2270, %v2274
      %2277 = vmatprep.subr.mxu0 0.0
      %2278 = vmatpush1.msra.mxu0 %v2254
      %2279 = vmatprep.subr.mxu0 0.0
      %2280 = vmatpush1.msra.mxu0 %v2255
      %2281 = vmatprep.subr.mxu0 0.0
      %2282 = vmatpush1.msra.mxu0 %v2256
      %2283 = vmatprep.subr.mxu0 0.0
      %2284 = vmatpush1.msra.mxu0 %v2257
      %2285 = vmatprep.subr.mxu0 0.0
      %2286 = vmatpush1.msra.mxu0 %v2258
      %2287 = vmatprep.subr.mxu0 0.0
      %2288 = vmatpush1.msra.mxu0 %v2259
      %2289 = vmatprep.subr.mxu0 0.0
      %2290 = vmatpush1.msra.mxu0 %v2260
      %2291 = vmatprep.subr.mxu0 0.0
      %2292 = vmatpush1.msra.mxu0 %v2261
      %2293 = vmatprep.subr.mxu0 0.0
      %2294 = vmatpush1.msra.mxu0 %v2262
      %2295 = vmatprep.subr.mxu0 0.0
      %2296 = vmatpush1.msra.mxu0 %v2263
      %2297 = vmatprep.subr.mxu0 0.0
      %2298 = vmatpush1.msra.mxu0 %v2264
      %2299 = vmatprep.subr.mxu0 0.0
      %2300 = vmatpush1.msra.mxu0 %v2265
      %2301 = vmatprep.subr.mxu0 0.0
      %2302 = vmatpush1.msra.mxu0 %v2266
      %2303 = vmatprep.subr.mxu0 0.0
      %2304 = vmatpush1.msra.mxu0 %v2267
      %2305 = vmatprep.subr.mxu0 0.0
      %2306 = vmatpush1.msra.mxu0 %v2268
      %2307 = vmatprep.subr.mxu0 0.0
      %2308 = vmatpush1.msra.mxu0 %v2269
      %2309 = vmatprep.subr.mxu0 0.0
      %2310 = vmatpush1.msra.mxu0 0.0
      %2311 = vmatprep.subr.mxu0 0.0
      %2312 = vmatpush1.msra.mxu0 0.0
      %2313 = vmatprep.subr.mxu0 0.0
      %2314 = vmatpush1.msra.mxu0 0.0
      %2315 = vmatprep.subr.mxu0 0.0
      %2316 = vmatpush1.msra.mxu0 0.0
      %2317 = vmatprep.subr.mxu0 0.0
      %2318 = vmatpush1.msra.mxu0 0.0
      %2319 = vmatprep.subr.mxu0 0.0
      %2320 = vmatpush1.msra.mxu0 0.0
      %2321 = vmatprep.subr.mxu0 0.0
      %2322 = vmatpush1.msra.mxu0 0.0
      %2323 = vmatprep.subr.mxu0 0.0
      %2324 = vmatpush1.msra.mxu0 0.0
      %2325 = vmatprep.subr.mxu0 0.0
      %2326 = vmatpush1.msra.mxu0 0.0
      %2327 = vmatprep.subr.mxu0 0.0
      %2328 = vmatpush1.msra.mxu0 0.0
      %2329 = vmatprep.subr.mxu0 0.0
      %2330 = vmatpush1.msra.mxu0 0.0
      %2331 = vmatprep.subr.mxu0 0.0
      %2332 = vmatpush1.msra.mxu0 0.0
      %2333 = vmatprep.subr.mxu0 0.0
      %2334 = vmatpush1.msra.mxu0 0.0
      %2335 = vmatprep.subr.mxu0 0.0
      %2336 = vmatpush1.msra.mxu0 0.0
      %2337 = vmatprep.subr.mxu0 0.0
      %2338 = vmatpush1.msra.mxu0 0.0
      %2339 = vmatprep.subr.mxu0 0.0
      %2340 = vmatpush1.msra.mxu0 0.0
      %2341 = vmatprep.mubr.f32.mxu0 0.0
      %2342 = vmatmul.mubr.f32.gmra.mrb[0].mxu0 %v2250
      %v2343 = vpop.f32.mrb[0].mxu0
      %v2344 = vadd.f32 %v2275, %v2343
      %v2345 = vpop.f32.mrb[0].mxu0
      %2346 = vmatprep.mubr.f32.mxu0 0.0
      %2347 = vmatmul.mubr.f32.gmra.mrb[0].mxu0 %v2251
      %v2348 = vpop.f32.mrb[0].mxu0
      %v2349 = vadd.f32 %v2275, %v2348
      %v2350 = vpop.f32.mrb[0].mxu0
      %2351 = vmatprep.mubr.f32.mxu0 0.0
      %2352 = vmatmul.mubr.f32.gmra.mrb[0].mxu0 %v2252
      %v2353 = vpop.f32.mrb[0].mxu0
      %v2354 = vadd.f32 %v2275, %v2353
      %v2355 = vpop.f32.mrb[0].mxu0
      %2356 = vmatprep.mubr.f32.mxu0 0.0
      %2357 = vmatmul.mubr.f32.gmra.mrb[0].mxu0 %v2253
      %v2358 = vpop.f32.mrb[0].mxu0
      %v2359 = vadd.f32 %v2275, %v2358
      %v2360 = vpop.f32.mrb[0].mxu0
      %2361 = vdwg.mxu0
      %v2362 = vmax.f32 %v2344, 0.0
      %v2363 = vmax.f32 %v2349, 0.0
      %v2364 = vmax.f32 %v2354, 0.0
      %v2365 = vmax.f32 %v2359, 0.0
      %v2366 = vld [vmem:[%s11] sm:$0xff]
      %v2367 = vld [vmem:[%s11 + $0x8] sm:$0xff]
      %v2368 = vld [vmem:[%s11 + $0x10] sm:$0xff]
      %v2369 = vld [vmem:[%s11 + $0x18] sm:$0xff]
      %v2370 = vld [vmem:[%s11 + $0x20] sm:$0xff]
      %v2371 = vld [vmem:[%s11 + $0x28] sm:$0xff]
      %v2372 = vld [vmem:[%s11 + $0x30] sm:$0xff]
      %v2373 = vld [vmem:[%s11 + $0x38] sm:$0xff]
      %v2374 = vld [vmem:[%s11 + $0x40] sm:$0xff]
      %v2375 = vld [vmem:[%s11 + $0x48] sm:$0xff]
      %v2376 = vld [vmem:[%s11 + $0x50] sm:$0xff]
      %v2377 = vld [vmem:[%s11 + $0x58] sm:$0xff]
      %v2378 = vld [vmem:[%s11 + $0x60] sm:$0xff]
      %v2379 = vld [vmem:[%s11 + $0x68] sm:$0xff]
      %v2380 = vld [vmem:[%s11 + $0x70] sm:$0xff]
      %v2381 = vld [vmem:[%s11 + $0x78] sm:$0xff]
      %v2382 = vld [vmem:[%s11 + $0x80] sm:$0xff]
      %v2383 = vld [vmem:[%s11 + $0x88] sm:$0xff]
      %v2384 = vld [vmem:[%s11 + $0x90] sm:$0xff]
      %v2385 = vld [vmem:[%s11 + $0x98] sm:$0xff]
      %v2386 = vld [vmem:[%s11 + $0xa0] sm:$0xff]
      %v2387 = vld [vmem:[%s11 + $0xa8] sm:$0xff]
      %v2388 = vld [vmem:[%s11 + $0xb0] sm:$0xff]
      %v2389 = vld [vmem:[%s11 + $0xb8] sm:$0xff]
      %v2390 = vld [vmem:[%s11 + $0xc0] sm:$0xff]
      %v2391 = vld [vmem:[%s11 + $0xc8] sm:$0xff]
      %v2392 = vld [vmem:[%s11 + $0xd0] sm:$0xff]
      %v2393 = vld [vmem:[%s11 + $0xd8] sm:$0xff]
      %v2394 = vld [vmem:[%s11 + $0xe0] sm:$0xff]
      %v2395 = vld [vmem:[%s11 + $0xe8] sm:$0xff]
      %v2396 = vld [vmem:[%s11 + $0xf0] sm:$0xff]
      %v2397 = vld [vmem:[%s11 + $0xf8] sm:$0xff]
      %v2398 = vld [vmem:[%s12] sm:$0x3]
      %v2400 = vlaneseq
      %v2401 = vshrl.u32 %v2400, 7
      %v2402 = vsub.s32 0, %v2401
      %v2403 = vrot.slane %v2398, %v2402
      %v2404 = vlaneseq
      %v2405 = vshrl.u32 %v2404, 7
      %v2406 = vsub.s32 1, %v2405
      %v2407 = vrot.slane %v2398, %v2406
      %2410 = vmatprep.subr.mxu0 %v2367
      %2411 = vmatpush1.msra.mxu0 %v2366
      %2412 = vmatprep.subr.mxu0 %v2369
      %2413 = vmatpush1.msra.mxu0 %v2368
      %2414 = vmatprep.subr.mxu0 %v2371
      %2415 = vmatpush1.msra.mxu0 %v2370
      %2416 = vmatprep.subr.mxu0 %v2373
      %2417 = vmatpush1.msra.mxu0 %v2372
      %2418 = vmatprep.subr.mxu0 %v2375
      %2419 = vmatpush1.msra.mxu0 %v2374
      %2420 = vmatprep.subr.mxu0 %v2377
      %2421 = vmatpush1.msra.mxu0 %v2376
      %2422 = vmatprep.subr.mxu0 %v2379
      %2423 = vmatpush1.msra.mxu0 %v2378
      %2424 = vmatprep.subr.mxu0 %v2381
      %2425 = vmatpush1.msra.mxu0 %v2380
      %2426 = vmatprep.subr.mxu0 %v2383
      %2427 = vmatpush1.msra.mxu0 %v2382
      %2428 = vmatprep.subr.mxu0 %v2385
      %2429 = vmatpush1.msra.mxu0 %v2384
      %2430 = vmatprep.subr.mxu0 %v2387
      %2431 = vmatpush1.msra.mxu0 %v2386
      %2432 = vmatprep.subr.mxu0 %v2389
      %2433 = vmatpush1.msra.mxu0 %v2388
      %2434 = vmatprep.subr.mxu0 %v2391
      %2435 = vmatpush1.msra.mxu0 %v2390
      %2436 = vmatprep.subr.mxu0 %v2393
      %2437 = vmatpush1.msra.mxu0 %v2392
      %2438 = vmatprep.subr.mxu0 %v2395
      %2439 = vmatpush1.msra.mxu0 %v2394
      %2440 = vmatprep.subr.mxu0 %v2397
      %2441 = vmatpush1.msra.mxu0 %v2396
      %2442 = vmatprep.subr.mxu0 0.0
      %2443 = vmatpush1.msra.mxu0 0.0
      %2444 = vmatprep.subr.mxu0 0.0
      %2445 = vmatpush1.msra.mxu0 0.0
      %2446 = vmatprep.subr.mxu0 0.0
      %2447 = vmatpush1.msra.mxu0 0.0
      %2448 = vmatprep.subr.mxu0 0.0
      %2449 = vmatpush1.msra.mxu0 0.0
      %2450 = vmatprep.subr.mxu0 0.0
      %2451 = vmatpush1.msra.mxu0 0.0
      %2452 = vmatprep.subr.mxu0 0.0
      %2453 = vmatpush1.msra.mxu0 0.0
      %2454 = vmatprep.subr.mxu0 0.0
      %2455 = vmatpush1.msra.mxu0 0.0
      %2456 = vmatprep.subr.mxu0 0.0
      %2457 = vmatpush1.msra.mxu0 0.0
      %2458 = vmatprep.subr.mxu0 0.0
      %2459 = vmatpush1.msra.mxu0 0.0
      %2460 = vmatprep.subr.mxu0 0.0
      %2461 = vmatpush1.msra.mxu0 0.0
      %2462 = vmatprep.subr.mxu0 0.0
      %2463 = vmatpush1.msra.mxu0 0.0
      %2464 = vmatprep.subr.mxu0 0.0
      %2465 = vmatpush1.msra.mxu0 0.0
      %2466 = vmatprep.subr.mxu0 0.0
      %2467 = vmatpush1.msra.mxu0 0.0
      %2468 = vmatprep.subr.mxu0 0.0
      %2469 = vmatpush1.msra.mxu0 0.0
      %2470 = vmatprep.subr.mxu0 0.0
      %2471 = vmatpush1.msra.mxu0 0.0
      %2472 = vmatprep.subr.mxu0 0.0
      %2473 = vmatpush1.msra.mxu0 0.0
      %2474 = vmatprep.mubr.f32.mxu0 0.0
      %2475 = vmatmul.mubr.f32.gmra.mrb[0].mxu0 %v2362
      %v2476 = vpop.f32.mrb[0].mxu0
      %v2477 = vadd.f32 %v2403, %v2476
      %v2478 = vpop.f32.mrb[0].mxu0
      %v2479 = vadd.f32 %v2407, %v2478
      %2480 = vmatprep.mubr.f32.mxu0 0.0
      %2481 = vmatmul.mubr.f32.gmra.mrb[0].mxu0 %v2363
      %v2482 = vpop.f32.mrb[0].mxu0
      %v2483 = vadd.f32 %v2403, %v2482
      %v2484 = vpop.f32.mrb[0].mxu0
      %v2485 = vadd.f32 %v2407, %v2484
      %2486 = vmatprep.mubr.f32.mxu0 0.0
      %2487 = vmatmul.mubr.f32.gmra.mrb[0].mxu0 %v2364
      %v2488 = vpop.f32.mrb[0].mxu0
      %v2489 = vadd.f32 %v2403, %v2488
      %v2490 = vpop.f32.mrb[0].mxu0
      %v2491 = vadd.f32 %v2407, %v2490
      %2492 = vmatprep.mubr.f32.mxu0 0.0
      %2493 = vmatmul.mubr.f32.gmra.mrb[0].mxu0 %v2365
      %v2494 = vpop.f32.mrb[0].mxu0
      %v2495 = vadd.f32 %v2403, %v2494
      %v2496 = vpop.f32.mrb[0].mxu0
      %v2497 = vadd.f32 %v2407, %v2496
      %2498 = vdwg.mxu0
      %2499 = vst [vmem:[%s444] sm:$0xff] %v2477
      %2500 = vst [vmem:[%s444 + $0x8] sm:$0xff] %v2479
      %2501 = vst [vmem:[%s444 + $0x10] sm:$0xff] %v2483
      %2502 = vst [vmem:[%s444 + $0x18] sm:$0xff] %v2485
      %2503 = vst [vmem:[%s444 + $0x20] sm:$0xff] %v2489
      %2504 = vst [vmem:[%s444 + $0x28] sm:$0xff] %v2491
      %2505 = vst [vmem:[%s444 + $0x30] sm:$0xff] %v2495
      %2506 = vst [vmem:[%s444 + $0x38] sm:$0xff] %v2497
      %s2507 = smul.u32 4, %s24
      %p2508 = scmp.lt.s32.totalorder %s2507, 7
      %s2509 = scalar_select %p2508, %s2507, 7
      %s2510 = smul.addr %s2509, 2
      %s2511 = smul.addr %s2510, 8
      %s2512 = scalar_lea.vmem %s13, %s2511
      // Predicated region
      $region77: #{speech_to_text_forward.1} parent=71 // pred_check
        %p2513 = pneg %p320
      $region78: #{speech_to_text_forward.1} parent=71 // pred_check_branch
        %2515 = sbr.rel (%p2513) target = $region80
      $region79: #{speech_to_text_forward.1} parent=71 // pred_region
        %s2516 = smul.u32 4, %s24
      $region80: #{speech_to_text_forward.1} parent=71 // pred_fallthru
        _
    $region72: #{speech_to_text_forward.1} parent=5 // pred_fallthru
      _
    %p2517 = scmp.le.s32.totalorder 2, %s19
    // Predicated region
    $region81: #{speech_to_text_forward.1} parent=5 // pred_check
      %p2518 = pneg %p2517
    $region82: #{speech_to_text_forward.1} parent=5 // pred_check_branch
      %2520 = sbr.rel (%p2518) target = $region84
    $region83: #{speech_to_text_forward.1} parent=5 // pred_region
      %s2521 = ssub.s32 %s19, 2
      // Predicated region
      $region85: #{speech_to_text_forward.1} parent=83 // pred_check
        %p2522 = pneg %p326
      $region86: #{speech_to_text_forward.1} parent=83 // pred_check_branch
        %2524 = sbr.rel (%p2522) target = $region88
      $region87: #{speech_to_text_forward.1} parent=83 // pred_region
        %s2525 = smul.u32 4, %s25
        %p2526 = scmp.lt.s32.totalorder %s2525, 7
        %s2527 = scalar_select %p2526, %s2525, 7
        %s2528 = smul.addr %s2527, 2
        %s2529 = smul.addr %s2528, 8
        %s2530 = scalar_lea.vmem %s13, %s2529
      $region88: #{speech_to_text_forward.1} parent=83 // pred_fallthru
        _
    $region84: #{speech_to_text_forward.1} parent=5 // pred_fallthru
      _
  $region6: #{speech_to_text_forward.1} parent=0 // loop_footer
    %s23 = sadd.s32 1, %s19
  $region7: #{speech_to_text_forward.1} parent=0 // loop_footer_branch
    %18 = sbr.rel target = $region3
  $region8: #{speech_to_text_forward.1} parent=0 // loop_exit
    _

</llo_original>
